<compile_context>
chip_gen: v7x
topology: tpu7x:2x2x1
jax: 0.10.0
libtpu: 0.0.40
codegen_flags: <defaults>
</compile_context>

<pallas_src>
import jax
import jax.numpy as jnp
import numpy as np
from jax.experimental import pallas as pl
from jax.experimental.pallas import tpu as pltpu

# ------------------- hyper-parameters (scaled-down module defaults) ----------
L = 16          # encoder kernel size, stride = L // 2
N = 32          # encoder channels
Bc = 16         # bottleneck / proj channels (B)
Sc = 16         # skip channels
Hc = 32         # conv_channels inside Conv1DBlock (H)
P = 3           # depthwise kernel size
X = 3           # blocks per repeat -> dilations 1, 2, 4
R = 1
SLICE = 2
NUM_SPKS = 2
ALPHA = 0.25                           # nn.PReLU() default init (all PReLUs in the net)
W_LIST = (0.5 + 0.001, 0.5 - 0.001)
W_SUM = float(W_LIST[0] + W_LIST[1])   # slices share weights + input -> hoist SLICE loop
EPS = 1e-5

assert P == 3, "depthwise tap unrolling below hard-codes kernel_size == 3"

# ------------------- static slab layouts (shared by packer and kernel) -------
VC = NUM_SPKS * N                      # tallest per-channel vector (mask bias, 64)


def _vec_layout():
    names = ['enc_b', 'ln_g', 'ln_b', 'proj_b']
    for j in range(X):
        names += [f'b1_{j}', f'g1_{j}', f'be1_{j}',
                  f'wd0_{j}', f'wd1_{j}', f'wd2_{j}', f'bd_{j}',
                  f'g2_{j}', f'be2_{j}', f'bs_{j}', f'bk_{j}']
    names.append('mask_b')
    return names, {n: i for i, n in enumerate(names)}


VEC_NAMES, VEC_OFF = _vec_layout()
NV = len(VEC_NAMES)


def _mat_layout():
    # (name, rows, cols); every row count is a multiple of 16 so bf16 row-slices of the
    # packed slab stay (16, 128)-tile aligned -- no relayout copies when reading them.
    entries = [('enc', N, L), ('proj', Bc, N)]
    entries += [(f'w1_{j}', Hc, Bc) for j in range(X)]
    entries += [(f'ws_{j}', Bc, Hc) for j in range(X)]
    entries += [(f'wk_{j}', Sc, Hc) for j in range(X)]
    entries += [('mask', NUM_SPKS * N, Sc), ('dec', NUM_SPKS * L, NUM_SPKS * N)]
    layout, off = {}, 0
    for name, r, c in entries:
        layout[name] = (off, r, c)
        off += r
    return [e[0] for e in entries], layout, off


MAT_NAMES, MAT_OFF, MAT_ROWS = _mat_layout()
MAT_COLS = NUM_SPKS * N                # widest matrix (block-diag decoder, 64)


# ----------------------------- in-kernel helpers ------------------------------
def _mat(mat_ref, name):
    r0, r, c = MAT_OFF[name]
    return mat_ref[r0:r0 + r, 0:c]                    # bf16 (r, c), 16-row aligned slice


def _vec(vec_ref, name, c):
    k = VEC_OFF[name]
    return vec_ref[0:c, k:k + 1]                      # f32 (c, 1), broadcasts over lanes (T)


def _gln_stats(h, inv_count):
    """gLN statistics with a single fused lane reduction over [h ; h*h]."""
    C = h.shape[0]
    hh = jnp.concatenate([h, h * h], axis=0)          # (2C, T)
    rows = jnp.sum(hh, axis=1, keepdims=True)         # (2C, 1): one lane reduction
    s1 = jnp.sum(rows[:C, :], keepdims=True)          # (1, 1)
    s2 = jnp.sum(rows[C:, :], keepdims=True)          # (1, 1)
    mu = s1 * inv_count
    var = jnp.maximum(s2 * inv_count - mu * mu, 0.0)  # one-pass stats, clamped >= 0
    return mu, var


# ----------------------------- fused Pallas kernel ----------------------------
def _fused_kernel(frames_ref, mat_ref, vec_ref, out_ref):
    bf16 = jnp.bfloat16
    T = frames_ref.shape[-1]

    def dot(w_bf16, x_f32):                            # bf16 MXU inputs, f32 accumulation
        return jnp.dot(w_bf16, x_f32.astype(bf16), preferred_element_type=jnp.float32)

    # ---- encoder: ReLU(W_enc @ frames + b) -> (N, T), channel-major -------------
    w = jnp.dot(_mat(mat_ref, 'enc'), frames_ref[...],
                preferred_element_type=jnp.float32)
    w = jnp.maximum(w + _vec(vec_ref, 'enc_b', N), 0.0)

    # ---- cLN over channels (sublane axis) + 1x1 proj -> (Bc, T) -----------------
    mu = jnp.mean(w, axis=0, keepdims=True)
    var = jnp.maximum(jnp.mean(w * w, axis=0, keepdims=True) - mu * mu, 0.0)
    xn = (w - mu) * jax.lax.rsqrt(var + EPS) * _vec(vec_ref, 'ln_g', N) \
        + _vec(vec_ref, 'ln_b', N)
    y = dot(_mat(mat_ref, 'proj'), xn) + _vec(vec_ref, 'proj_b', Bc)

    # lane-index iota shared by every depthwise-conv edge mask
    t_idx = jax.lax.broadcasted_iota(jnp.int32, (Hc, T), 1)
    inv_cnt = 1.0 / float(Hc * T)

    # ---- TCN: X Conv1DBlocks, dilation 2**j (statically unrolled) ----------------
    skip_sum = jnp.zeros((Sc, T), jnp.float32)
    for j in range(X):
        d = 2 ** j
        # 1x1 conv -> PReLU
        h = dot(_mat(mat_ref, f'w1_{j}'), y) + _vec(vec_ref, f'b1_{j}', Hc)
        h = jnp.where(h >= 0, h, ALPHA * h)
        # gLN #1 (global over this batch element's (Hc, T))
        mu1, var1 = _gln_stats(h, inv_cnt)
        h = _vec(vec_ref, f'g1_{j}', Hc) * (h - mu1) * jax.lax.rsqrt(var1 + EPS) \
            + _vec(vec_ref, f'be1_{j}', Hc)
        # depthwise dilated conv (k=3, 'same'): lane rolls on the XLU + iota edge masks
        h_m = jnp.where(t_idx >= d, pltpu.roll(h, d, axis=1), 0.0)           # h[t-d]
        h_p = jnp.where(t_idx < T - d, pltpu.roll(h, T - d, axis=1), 0.0)    # h[t+d]
        h = (h_m * _vec(vec_ref, f'wd0_{j}', Hc) + h * _vec(vec_ref, f'wd1_{j}', Hc)
             + h_p * _vec(vec_ref, f'wd2_{j}', Hc) + _vec(vec_ref, f'bd_{j}', Hc))
        # PReLU -> gLN #2
        h = jnp.where(h >= 0, h, ALPHA * h)
        mu2, var2 = _gln_stats(h, inv_cnt)
        h = _vec(vec_ref, f'g2_{j}', Hc) * (h - mu2) * jax.lax.rsqrt(var2 + EPS) \
            + _vec(vec_ref, f'be2_{j}', Hc)
        # skip / residual 1x1 convs
        h_bf = h.astype(bf16)
        skip_sum = skip_sum + jnp.dot(_mat(mat_ref, f'wk_{j}'), h_bf,
                                      preferred_element_type=jnp.float32) \
            + _vec(vec_ref, f'bk_{j}', Sc)
        y = y + jnp.dot(_mat(mat_ref, f'ws_{j}'), h_bf,
                        preferred_element_type=jnp.float32) \
            + _vec(vec_ref, f'bs_{j}', Bc)

    # Both MS_SL2 slices load the same checkpoint and see the same input, so the block
    # stack is evaluated once and scaled by (w0 + w1).
    # TODO(synk): if slices ever get distinct checkpoints, re-run the stack per slice.
    total = skip_sum * W_SUM

    # ---- mask head + block-diagonal decoder --------------------------------------
    tp = jnp.where(total >= 0, total, ALPHA * total)                 # PReLU
    m = jax.nn.sigmoid(dot(_mat(mat_ref, 'mask'), tp)
                       + _vec(vec_ref, 'mask_b', NUM_SPKS * N))      # (2N, T) = [spk0; spk1]
    w2 = jnp.concatenate([w, w], axis=0)                             # (2N, T)
    s_all = (w2 * m).astype(bf16)                                    # masked encodings
    # block-diagonal decoder -> both speakers' frames in one matmul, lane-dense store
    out_ref[...] = jnp.dot(_mat(mat_ref, 'dec'), s_all,
                           preferred_element_type=jnp.float32)       # (2L, T)


# ----------------------------- host-side packing ------------------------------
def pack_params(p):
    """Pack all small parameters into one bf16 matrix slab + one f32 vector slab."""
    f32 = jnp.float32

    cols = {}

    def put(name, v):
        v = jnp.asarray(v, f32).reshape(-1)
        cols[name] = jnp.pad(v, (0, VC - v.shape[0]))

    put('enc_b', p['enc_b']); put('ln_g', p['ln_g']); put('ln_b', p['ln_b'])
    put('proj_b', p['proj_b'])
    for j in range(X):
        bp = p['blocks'][j]
        put(f'b1_{j}', bp['b1']); put(f'g1_{j}', bp['g1']); put(f'be1_{j}', bp['be1'])
        for k in range(P):
            put(f'wd{k}_{j}', bp['wd'][:, k])
        put(f'bd_{j}', bp['bd']); put(f'g2_{j}', bp['g2']); put(f'be2_{j}', bp['be2'])
        put(f'bs_{j}', bp['bs']); put(f'bk_{j}', bp['bk'])
    put('mask_b', p['mask_b'])
    vec_slab = jnp.stack([cols[n] for n in VEC_NAMES], axis=1)        # (VC, NV) f32

    dec_t = jnp.asarray(p['dec_w'], f32).T                            # (L, N)
    zero = jnp.zeros((L, N), f32)
    dec_blk = jnp.block([[dec_t, zero], [zero, dec_t]])               # (2L, 2N) block-diag
    mats = {'enc': p['enc_w'], 'proj': p['proj_w'], 'mask': p['mask_w'], 'dec': dec_blk}
    for j in range(X):
        bp = p['blocks'][j]
        mats[f'w1_{j}'] = bp['w1']; mats[f'ws_{j}'] = bp['ws']; mats[f'wk_{j}'] = bp['wk']
    rows = []
    for name in MAT_NAMES:
        _, r, c = MAT_OFF[name]
        mm = jnp.asarray(mats[name], f32)
        rows.append(jnp.pad(mm, ((0, 0), (0, MAT_COLS - c))))
    mat_slab = jnp.concatenate(rows, axis=0).astype(jnp.bfloat16)     # (MAT_ROWS, MAT_COLS)
    return mat_slab, vec_slab


def fused_separator_pallas(frames, mat_slab, vec_slab):
    """frames: (batch, L, T) bf16 channel-major -> (batch, 2L, T) f32 decoder frames."""
    batch, _, T = frames.shape

    # cost estimate so XLA schedules the framing / overlap-add glue around the call
    macs_per_t = (N * L + Bc * N + X * (Hc * Bc + Bc * Hc + Sc * Hc + P * Hc)
                  + NUM_SPKS * N * Sc + (NUM_SPKS * L) * (NUM_SPKS * N))
    cost = pl.CostEstimate(
        flops=2 * batch * T * macs_per_t,
        transcendentals=batch * T * (NUM_SPKS * N + 1 + 2 * X),
        bytes_accessed=(frames.size * 2 + mat_slab.size * 2 + vec_slab.size * 4
                        + batch * NUM_SPKS * L * T * 4))

    # explicit VMEM budget (v7x only has 64 MiB physical / 32 MiB scoped default)
    blk_bytes = 2 * (L * T * 2 + NUM_SPKS * L * T * 4)           # double-buffered in/out blocks
    slab_bytes = 2 * (MAT_ROWS * 128 * 2 + VC * 128 * 4)         # lane-padded constant slabs
    act_bytes = 16 * VC * T * 4                                  # ~16 live (C<=64, T) f32 tiles
    vmem_limit = int(min(max(blk_bytes + slab_bytes + act_bytes + (4 << 20), 8 << 20), 64 << 20))
    # TODO(synk): for production-length audio on v7x add an "arbitrary" T-tiling grid axis
    # with running gLN statistics instead of one resident (C, T) activation slab.

    return pl.pallas_call(
        _fused_kernel,
        grid=(batch,),
        out_shape=jax.ShapeDtypeStruct((batch, NUM_SPKS * L, T), jnp.float32),
        in_specs=[
            pl.BlockSpec((None, L, T), lambda b: (b, 0, 0)),         # frames, one batch element
            pl.BlockSpec((MAT_ROWS, MAT_COLS), lambda b: (0, 0)),    # grid-constant weight slab
            pl.BlockSpec((VC, NV), lambda b: (0, 0)),                # grid-constant bias slab
        ],
        out_specs=pl.BlockSpec((None, NUM_SPKS * L, T), lambda b: (b, 0, 0)),
        compiler_params=pltpu.CompilerParams(
            dimension_semantics=("parallel",),   # batch across v7x's 2 TCs; serial on v5e/v6e
            vmem_limit_bytes=vmem_limit),
        cost_estimate=cost,
    )(frames, mat_slab, vec_slab)


# ----------------------------- full forward (Pallas + thin glue) --------------
def pallas_forward(x, p):
    batch, samples = x.shape
    S = L // 2
    T = (samples - L) // S + 1
    # frame the waveform directly in channel-major (L, T); encoder conv -> matmul
    idx = jnp.arange(L)[:, None] + jnp.arange(T)[None, :] * S
    frames = x[:, idx].astype(jnp.bfloat16)                          # (batch, L, T)

    mat_slab, vec_slab = pack_params(p)
    fr_all = fused_separator_pallas(frames, mat_slab, vec_slab)      # (batch, 2L, T)
    fr_all = jnp.transpose(fr_all, (0, 2, 1))                        # (batch, T, 2L) for OLA

    # vectorised overlap-add (stride S = L/2): head-halves + shifted tail-halves
    Lout = (T - 1) * S + L                                           # == (T + 1) * S
    outs = []
    for n in range(NUM_SPKS):
        fr = fr_all[:, :, n * L:(n + 1) * L]                         # (batch, T, L)
        head = jnp.pad(fr[:, :, :S], ((0, 0), (0, 1), (0, 0)))       # (batch, T+1, S)
        tail = jnp.pad(fr[:, :, S:], ((0, 0), (1, 0), (0, 0)))       # (batch, T+1, S)
        outs.append((head + tail).reshape(batch, Lout) + p['dec_b'][0])
    return outs


# ----------------------------- pure-JAX reference (torch semantics) -----------
def reference_forward(x, p):
    HI = jax.lax.Precision.HIGHEST
    S = L // 2
    batch = x.shape[0]
    w = jax.lax.conv_general_dilated(
        x[:, None, :], p['enc_w'][:, None, :], window_strides=(S,), padding='VALID',
        dimension_numbers=('NCH', 'OIH', 'NCH'), precision=HI)
    w = jnp.maximum(w + p['enc_b'][None, :, None], 0.0)              # (batch, N, T)

    xt = jnp.transpose(w, (0, 2, 1))
    mu = jnp.mean(xt, axis=-1, keepdims=True)
    var = jnp.mean((xt - mu) ** 2, axis=-1, keepdims=True)
    xn = (xt - mu) / jnp.sqrt(var + EPS) * p['ln_g'] + p['ln_b']
    xn = jnp.transpose(xn, (0, 2, 1))
    y = jnp.einsum('bnt,cn->bct', xn, p['proj_w'], precision=HI) + p['proj_b'][None, :, None]

    slice_input = y
    T = y.shape[-1]
    total = jnp.zeros((batch, Sc, T), jnp.float32)
    for si in range(SLICE):
        yy = slice_input
        skip_sum = jnp.zeros_like(total)
        for _ in range(R):
            for j in range(X):
                bp = p['blocks'][j]
                d = 2 ** j
                h = jnp.einsum('bct,hc->bht', yy, bp['w1'], precision=HI) + bp['b1'][None, :, None]
                h = jnp.where(h >= 0, h, ALPHA * h)
                m = jnp.mean(h, axis=(1, 2), keepdims=True)
                v = jnp.mean((h - m) ** 2, axis=(1, 2), keepdims=True)
                h = bp['g1'][None, :, None] * (h - m) / jnp.sqrt(v + EPS) + bp['be1'][None, :, None]
                h = jax.lax.conv_general_dilated(
                    h, bp['wd'][:, None, :], window_strides=(1,), padding=[(d, d)],
                    rhs_dilation=(d,), dimension_numbers=('NCH', 'OIH', 'NCH'),
                    feature_group_count=Hc, precision=HI) + bp['bd'][None, :, None]
                h = jnp.where(h >= 0, h, ALPHA * h)
                m = jnp.mean(h, axis=(1, 2), keepdims=True)
                v = jnp.mean((h - m) ** 2, axis=(1, 2), keepdims=True)
                h = bp['g2'][None, :, None] * (h - m) / jnp.sqrt(v + EPS) + bp['be2'][None, :, None]
                skip = jnp.einsum('bht,sh->bst', h, bp['wk'], precision=HI) + bp['bk'][None, :, None]
                out = jnp.einsum('bht,ch->bct', h, bp['ws'], precision=HI) + bp['bs'][None, :, None]
                yy = yy + out
                skip_sum = skip_sum + skip
        total = total + skip_sum * W_LIST[si]

    yt = jnp.where(total >= 0, total, ALPHA * total)
    e = jnp.einsum('bst,ks->bkt', yt, p['mask_w'], precision=HI) + p['mask_b'][None, :, None]
    m = jax.nn.sigmoid(e)
    outs = []
    Lout = (T - 1) * S + L
    for n in range(NUM_SPKS):
        s_n = w * m[:, n * N:(n + 1) * N, :]
        fr = jnp.einsum('bnt,nl->btl', s_n, p['dec_w'], precision=HI)
        o = jnp.zeros((batch, Lout), jnp.float32)
        for t in range(T):
            o = o.at[:, t * S:t * S + L].add(fr[:, t, :])
        outs.append(o + p['dec_b'][0])
    return outs


# ----------------------------------- main -------------------------------------
if __name__ == "__main__":
    key = jax.random.PRNGKey(0)
    keys = iter(jax.random.split(key, 64))

    def nrm(shape, scale=0.1):
        return (scale * jax.random.normal(next(keys), shape)).astype(jnp.float32)

    def make_block_params():
        return dict(
            w1=nrm((Hc, Bc)), b1=nrm((Hc,), 0.05),
            g1=1.0 + nrm((Hc,), 0.05), be1=nrm((Hc,), 0.05),
            wd=nrm((Hc, P)), bd=nrm((Hc,), 0.05),
            g2=1.0 + nrm((Hc,), 0.05), be2=nrm((Hc,), 0.05),
            ws=nrm((Bc, Hc)), bs=nrm((Bc,), 0.05),
            wk=nrm((Sc, Hc)), bk=nrm((Sc,), 0.05),
        )

    # TODO(synk): get_slice() in the original loads the same pretrained checkpoint for
    # every slice; here both slices share one deterministic in-script init instead.
    blocks = [make_block_params() for _ in range(X)]

    params = dict(
        enc_w=nrm((N, L)), enc_b=nrm((N,), 0.05),
        ln_g=1.0 + nrm((N,), 0.05), ln_b=nrm((N,), 0.05),
        proj_w=nrm((Bc, N)), proj_b=nrm((Bc,), 0.05),
        blocks=blocks,
        mask_w=nrm((NUM_SPKS * N, Sc)), mask_b=nrm((NUM_SPKS * N,), 0.05),
        dec_w=nrm((N, L)), dec_b=nrm((1,), 0.05),
    )

    batch = 2
    T_frames = 128                                    # lane-dense time axis in the kernel
    samples = (T_frames - 1) * (L // 2) + L           # 1032 samples -> T = 128 frames
    x = jax.random.normal(next(keys), (batch, samples), jnp.float32)

    fwd = jax.jit(pallas_forward)
    outs = fwd(x, params)
    outs = [jax.block_until_ready(o) for o in outs]

    refs = reference_forward(x, params)
    # bf16 MXU inputs (f32 accumulation) vs. the f32 HIGHEST-precision reference:
    # percent-level tolerance, with ~10x margin over the observed error at these scales.
    for o, r in zip(outs, refs):
        np.testing.assert_allclose(np.asarray(o), np.asarray(r), rtol=2e-2, atol=2e-2)

    print("KERNEL_OK")
</pallas_src>

<mosaic_0001>
module attributes {stable_mosaic.version = 11 : i64} {
  func.func @_fused_kernel(%arg0: i32, %arg1: memref<1x16x128xbf16, #tpu.memory_space<vmem>>, %arg2: memref<336x64xbf16, #tpu.memory_space<vmem>>, %arg3: memref<64x38xf32, #tpu.memory_space<vmem>>, %arg4: memref<1x32x128xf32, #tpu.memory_space<vmem>>) attributes {dimension_semantics = [#tpu.dimension_semantics<parallel>], iteration_bounds = array<i64: 2>, scalar_prefetch = 0 : i64, scratch_operands = 0 : i64, tpu.core_type = #tpu.core_type<tc>, window_params = [{transform_indices = @transform_0, window_bounds = array<i64: 1, 16, 128>}, {pipeline_mode = #tpu.pipeline_mode<synchronous>, transform_indices = @transform_1, window_bounds = array<i64: 336, 64>}, {pipeline_mode = #tpu.pipeline_mode<synchronous>, transform_indices = @transform_2, window_bounds = array<i64: 64, 38>}, {transform_indices = @transform_3, window_bounds = array<i64: 1, 32, 128>}]} {
    %c0 = arith.constant 0 : index
    %c0_0 = arith.constant 0 : index
    %0 = vector.load %arg2[%c0, %c0_0] : memref<336x64xbf16, #tpu.memory_space<vmem>>, vector<32x16xbf16>
    %c0_1 = arith.constant 0 : index
    %c0_2 = arith.constant 0 : index
    %c0_3 = arith.constant 0 : index
    %1 = vector.load %arg1[%c0_1, %c0_2, %c0_3] : memref<1x16x128xbf16, #tpu.memory_space<vmem>>, vector<1x16x128xbf16>
    %2 = vector.shape_cast %1 : vector<1x16x128xbf16> to vector<16x128xbf16>
    %cst = arith.constant dense<0.000000e+00> : vector<32x128xf32>
    %3 = tpu.matmul %0, %2, %cst {dimension_numbers = #tpu.dot_dimension_numbers<[1], [0], [0], [1], [0, 0, 1, 1], [], []>} : vector<32x16xbf16>, vector<16x128xbf16>, vector<32x128xf32> -> vector<32x128xf32>
    %c0_4 = arith.constant 0 : index
    %c0_5 = arith.constant 0 : index
    %4 = vector.load %arg3[%c0_4, %c0_5] : memref<64x38xf32, #tpu.memory_space<vmem>>, vector<32x1xf32>
    %5 = vector.broadcast %4 : vector<32x1xf32> to vector<32x128xf32>
    %6 = arith.addf %3, %5 : vector<32x128xf32>
    %cst_6 = arith.constant 0.000000e+00 : f32
    %7 = vector.broadcast %cst_6 : f32 to vector<32x128xf32>
    %8 = arith.maximumf %6, %7 : vector<32x128xf32>
    %cst_7 = arith.constant dense<0.000000e+00> : vector<128xf32>
    %9 = vector.multi_reduction <add>, %8, %cst_7 [0] : vector<32x128xf32> to vector<128xf32>
    %10 = vector.shape_cast %9 : vector<128xf32> to vector<1x128xf32>
    %cst_8 = arith.constant 3.200000e+01 : f32
    %11 = vector.broadcast %cst_8 : f32 to vector<1x128xf32>
    %12 = arith.divf %10, %11 : vector<1x128xf32>
    %13 = arith.mulf %8, %8 : vector<32x128xf32>
    %cst_9 = arith.constant dense<0.000000e+00> : vector<128xf32>
    %14 = vector.multi_reduction <add>, %13, %cst_9 [0] : vector<32x128xf32> to vector<128xf32>
    %15 = vector.shape_cast %14 : vector<128xf32> to vector<1x128xf32>
    %cst_10 = arith.constant 3.200000e+01 : f32
    %16 = vector.broadcast %cst_10 : f32 to vector<1x128xf32>
    %17 = arith.divf %15, %16 : vector<1x128xf32>
    %18 = arith.mulf %12, %12 : vector<1x128xf32>
    %19 = arith.subf %17, %18 : vector<1x128xf32>
    %cst_11 = arith.constant 0.000000e+00 : f32
    %20 = vector.broadcast %cst_11 : f32 to vector<1x128xf32>
    %21 = arith.maximumf %19, %20 : vector<1x128xf32>
    %22 = vector.broadcast %12 : vector<1x128xf32> to vector<32x128xf32>
    %23 = arith.subf %8, %22 : vector<32x128xf32>
    %cst_12 = arith.constant 9.99999974E-6 : f32
    %24 = vector.broadcast %cst_12 : f32 to vector<1x128xf32>
    %25 = arith.addf %21, %24 : vector<1x128xf32>
    %26 = math.rsqrt %25 : vector<1x128xf32>
    %27 = vector.broadcast %26 : vector<1x128xf32> to vector<32x128xf32>
    %28 = arith.mulf %23, %27 : vector<32x128xf32>
    %c0_13 = arith.constant 0 : index
    %c1 = arith.constant 1 : index
    %29 = vector.load %arg3[%c0_13, %c1] : memref<64x38xf32, #tpu.memory_space<vmem>>, vector<32x1xf32>
    %30 = vector.broadcast %29 : vector<32x1xf32> to vector<32x128xf32>
    %31 = arith.mulf %28, %30 : vector<32x128xf32>
    %c0_14 = arith.constant 0 : index
    %c2 = arith.constant 2 : index
    %32 = vector.load %arg3[%c0_14, %c2] : memref<64x38xf32, #tpu.memory_space<vmem>>, vector<32x1xf32>
    %33 = vector.broadcast %32 : vector<32x1xf32> to vector<32x128xf32>
    %34 = arith.addf %31, %33 : vector<32x128xf32>
    %c32 = arith.constant 32 : index
    %c0_15 = arith.constant 0 : index
    %35 = vector.load %arg2[%c32, %c0_15] : memref<336x64xbf16, #tpu.memory_space<vmem>>, vector<16x32xbf16>
    %36 = arith.truncf %34 : vector<32x128xf32> to vector<32x128xbf16>
    %cst_16 = arith.constant dense<0.000000e+00> : vector<16x128xf32>
    %37 = tpu.matmul %35, %36, %cst_16 {dimension_numbers = #tpu.dot_dimension_numbers<[1], [0], [0], [1], [0, 0, 1, 1], [], []>} : vector<16x32xbf16>, vector<32x128xbf16>, vector<16x128xf32> -> vector<16x128xf32>
    %c0_17 = arith.constant 0 : index
    %c3 = arith.constant 3 : index
    %38 = vector.load %arg3[%c0_17, %c3] : memref<64x38xf32, #tpu.memory_space<vmem>>, vector<16x1xf32>
    %39 = vector.broadcast %38 : vector<16x1xf32> to vector<16x128xf32>
    %40 = arith.addf %37, %39 : vector<16x128xf32>
    %41 = tpu.iota {dimensions = array<i32: 1>} : vector<32x128xi32>
    %cst_18 = arith.constant 0.000000e+00 : f32
    %42 = vector.broadcast %cst_18 : f32 to vector<16x128xf32>
    %c48 = arith.constant 48 : index
    %c0_19 = arith.constant 0 : index
    %43 = vector.load %arg2[%c48, %c0_19] : memref<336x64xbf16, #tpu.memory_space<vmem>>, vector<32x16xbf16>
    %44 = arith.truncf %40 : vector<16x128xf32> to vector<16x128xbf16>
    %cst_20 = arith.constant dense<0.000000e+00> : vector<32x128xf32>
    %45 = tpu.matmul %43, %44, %cst_20 {dimension_numbers = #tpu.dot_dimension_numbers<[1], [0], [0], [1], [0, 0, 1, 1], [], []>} : vector<32x16xbf16>, vector<16x128xbf16>, vector<32x128xf32> -> vector<32x128xf32>
    %c0_21 = arith.constant 0 : index
    %c4 = arith.constant 4 : index
    %46 = vector.load %arg3[%c0_21, %c4] : memref<64x38xf32, #tpu.memory_space<vmem>>, vector<32x1xf32>
    %47 = vector.broadcast %46 : vector<32x1xf32> to vector<32x128xf32>
    %48 = arith.addf %45, %47 : vector<32x128xf32>
    %cst_22 = arith.constant 0.000000e+00 : f32
    %49 = vector.broadcast %cst_22 : f32 to vector<32x128xf32>
    %50 = arith.cmpf oge, %48, %49 : vector<32x128xf32>
    %cst_23 = arith.constant 2.500000e-01 : f32
    %51 = vector.broadcast %cst_23 : f32 to vector<32x128xf32>
    %52 = arith.mulf %51, %48 : vector<32x128xf32>
    %53 = arith.select %50, %48, %52 : vector<32x128xi1>, vector<32x128xf32>
    %54 = arith.mulf %53, %53 : vector<32x128xf32>
    %55 = tpu.concatenate %53, %54 in 0 : vector<32x128xf32>, vector<32x128xf32> -> vector<64x128xf32>
    %cst_24 = arith.constant dense<0.000000e+00> : vector<64xf32>
    %56 = vector.multi_reduction <add>, %55, %cst_24 [1] : vector<64x128xf32> to vector<64xf32>
    %57 = vector.shape_cast %56 : vector<64xf32> to vector<64x1xf32>
    %58 = vector.extract_strided_slice %57 {offsets = [0, 0], sizes = [32, 1], strides = [1, 1]} : vector<64x1xf32> to vector<32x1xf32>
    %59 = vector.shape_cast %58 : vector<32x1xf32> to vector<1x32x1xf32>
    %cst_25 = arith.constant dense<0.000000e+00> : vector<1xf32>
    %60 = vector.multi_reduction <add>, %59, %cst_25 [1, 2] : vector<1x32x1xf32> to vector<1xf32>
    %61 = vector.shape_cast %60 : vector<1xf32> to vector<1x1x1xf32>
    %62 = vector.extract %61[0, 0, 0] : f32 from vector<1x1x1xf32>
    %63 = vector.broadcast %62 : f32 to vector<1x1xf32>
    %64 = vector.extract_strided_slice %57 {offsets = [32, 0], sizes = [32, 1], strides = [1, 1]} : vector<64x1xf32> to vector<32x1xf32>
    %65 = vector.shape_cast %64 : vector<32x1xf32> to vector<1x32x1xf32>
    %cst_26 = arith.constant dense<0.000000e+00> : vector<1xf32>
    %66 = vector.multi_reduction <add>, %65, %cst_26 [1, 2] : vector<1x32x1xf32> to vector<1xf32>
    %67 = vector.shape_cast %66 : vector<1xf32> to vector<1x1x1xf32>
    %68 = vector.extract %67[0, 0, 0] : f32 from vector<1x1x1xf32>
    %69 = vector.broadcast %68 : f32 to vector<1x1xf32>
    %cst_27 = arith.constant 2.44140625E-4 : f32
    %70 = vector.broadcast %cst_27 : f32 to vector<1x1xf32>
    %71 = arith.mulf %63, %70 : vector<1x1xf32>
    %cst_28 = arith.constant 2.44140625E-4 : f32
    %72 = vector.broadcast %cst_28 : f32 to vector<1x1xf32>
    %73 = arith.mulf %69, %72 : vector<1x1xf32>
    %74 = arith.mulf %71, %71 : vector<1x1xf32>
    %75 = arith.subf %73, %74 : vector<1x1xf32>
    %cst_29 = arith.constant 0.000000e+00 : f32
    %76 = vector.broadcast %cst_29 : f32 to vector<1x1xf32>
    %77 = arith.maximumf %75, %76 : vector<1x1xf32>
    %c0_30 = arith.constant 0 : index
    %c5 = arith.constant 5 : index
    %78 = vector.load %arg3[%c0_30, %c5] : memref<64x38xf32, #tpu.memory_space<vmem>>, vector<32x1xf32>
    %79 = vector.broadcast %71 : vector<1x1xf32> to vector<32x128xf32>
    %80 = arith.subf %53, %79 : vector<32x128xf32>
    %81 = vector.broadcast %78 : vector<32x1xf32> to vector<32x128xf32>
    %82 = arith.mulf %81, %80 : vector<32x128xf32>
    %cst_31 = arith.constant 9.99999974E-6 : f32
    %83 = vector.broadcast %cst_31 : f32 to vector<1x1xf32>
    %84 = arith.addf %77, %83 : vector<1x1xf32>
    %85 = math.rsqrt %84 : vector<1x1xf32>
    %86 = vector.broadcast %85 : vector<1x1xf32> to vector<32x128xf32>
    %87 = arith.mulf %82, %86 : vector<32x128xf32>
    %c0_32 = arith.constant 0 : index
    %c6 = arith.constant 6 : index
    %88 = vector.load %arg3[%c0_32, %c6] : memref<64x38xf32, #tpu.memory_space<vmem>>, vector<32x1xf32>
    %89 = vector.broadcast %88 : vector<32x1xf32> to vector<32x128xf32>
    %90 = arith.addf %87, %89 : vector<32x128xf32>
    %c1_i32 = arith.constant 1 : i32
    %91 = vector.broadcast %c1_i32 : i32 to vector<32x128xi32>
    %92 = arith.cmpi sge, %41, %91 : vector<32x128xi32>
    %c1_i32_33 = arith.constant 1 : i32
    %93 = tpu.dynamic_rotate %90 by %c1_i32_33 dim 1 : vector<32x128xf32>, i32 -> vector<32x128xf32>
    %cst_34 = arith.constant 0.000000e+00 : f32
    %94 = vector.broadcast %cst_34 : f32 to vector<32x128xf32>
    %95 = arith.select %92, %93, %94 : vector<32x128xi1>, vector<32x128xf32>
    %c127_i32 = arith.constant 127 : i32
    %96 = vector.broadcast %c127_i32 : i32 to vector<32x128xi32>
    %97 = arith.cmpi slt, %41, %96 : vector<32x128xi32>
    %c127_i32_35 = arith.constant 127 : i32
    %98 = tpu.dynamic_rotate %90 by %c127_i32_35 dim 1 : vector<32x128xf32>, i32 -> vector<32x128xf32>
    %cst_36 = arith.constant 0.000000e+00 : f32
    %99 = vector.broadcast %cst_36 : f32 to vector<32x128xf32>
    %100 = arith.select %97, %98, %99 : vector<32x128xi1>, vector<32x128xf32>
    %c0_37 = arith.constant 0 : index
    %c7 = arith.constant 7 : index
    %101 = vector.load %arg3[%c0_37, %c7] : memref<64x38xf32, #tpu.memory_space<vmem>>, vector<32x1xf32>
    %102 = vector.broadcast %101 : vector<32x1xf32> to vector<32x128xf32>
    %103 = arith.mulf %95, %102 : vector<32x128xf32>
    %c0_38 = arith.constant 0 : index
    %c8 = arith.constant 8 : index
    %104 = vector.load %arg3[%c0_38, %c8] : memref<64x38xf32, #tpu.memory_space<vmem>>, vector<32x1xf32>
    %105 = vector.broadcast %104 : vector<32x1xf32> to vector<32x128xf32>
    %106 = arith.mulf %90, %105 : vector<32x128xf32>
    %107 = arith.addf %103, %106 : vector<32x128xf32>
    %c0_39 = arith.constant 0 : index
    %c9 = arith.constant 9 : index
    %108 = vector.load %arg3[%c0_39, %c9] : memref<64x38xf32, #tpu.memory_space<vmem>>, vector<32x1xf32>
    %109 = vector.broadcast %108 : vector<32x1xf32> to vector<32x128xf32>
    %110 = arith.mulf %100, %109 : vector<32x128xf32>
    %111 = arith.addf %107, %110 : vector<32x128xf32>
    %c0_40 = arith.constant 0 : index
    %c10 = arith.constant 10 : index
    %112 = vector.load %arg3[%c0_40, %c10] : memref<64x38xf32, #tpu.memory_space<vmem>>, vector<32x1xf32>
    %113 = vector.broadcast %112 : vector<32x1xf32> to vector<32x128xf32>
    %114 = arith.addf %111, %113 : vector<32x128xf32>
    %cst_41 = arith.constant 0.000000e+00 : f32
    %115 = vector.broadcast %cst_41 : f32 to vector<32x128xf32>
    %116 = arith.cmpf oge, %114, %115 : vector<32x128xf32>
    %cst_42 = arith.constant 2.500000e-01 : f32
    %117 = vector.broadcast %cst_42 : f32 to vector<32x128xf32>
    %118 = arith.mulf %117, %114 : vector<32x128xf32>
    %119 = arith.select %116, %114, %118 : vector<32x128xi1>, vector<32x128xf32>
    %120 = arith.mulf %119, %119 : vector<32x128xf32>
    %121 = tpu.concatenate %119, %120 in 0 : vector<32x128xf32>, vector<32x128xf32> -> vector<64x128xf32>
    %cst_43 = arith.constant dense<0.000000e+00> : vector<64xf32>
    %122 = vector.multi_reduction <add>, %121, %cst_43 [1] : vector<64x128xf32> to vector<64xf32>
    %123 = vector.shape_cast %122 : vector<64xf32> to vector<64x1xf32>
    %124 = vector.extract_strided_slice %123 {offsets = [0, 0], sizes = [32, 1], strides = [1, 1]} : vector<64x1xf32> to vector<32x1xf32>
    %125 = vector.shape_cast %124 : vector<32x1xf32> to vector<1x32x1xf32>
    %cst_44 = arith.constant dense<0.000000e+00> : vector<1xf32>
    %126 = vector.multi_reduction <add>, %125, %cst_44 [1, 2] : vector<1x32x1xf32> to vector<1xf32>
    %127 = vector.shape_cast %126 : vector<1xf32> to vector<1x1x1xf32>
    %128 = vector.extract %127[0, 0, 0] : f32 from vector<1x1x1xf32>
    %129 = vector.broadcast %128 : f32 to vector<1x1xf32>
    %130 = vector.extract_strided_slice %123 {offsets = [32, 0], sizes = [32, 1], strides = [1, 1]} : vector<64x1xf32> to vector<32x1xf32>
    %131 = vector.shape_cast %130 : vector<32x1xf32> to vector<1x32x1xf32>
    %cst_45 = arith.constant dense<0.000000e+00> : vector<1xf32>
    %132 = vector.multi_reduction <add>, %131, %cst_45 [1, 2] : vector<1x32x1xf32> to vector<1xf32>
    %133 = vector.shape_cast %132 : vector<1xf32> to vector<1x1x1xf32>
    %134 = vector.extract %133[0, 0, 0] : f32 from vector<1x1x1xf32>
    %135 = vector.broadcast %134 : f32 to vector<1x1xf32>
    %cst_46 = arith.constant 2.44140625E-4 : f32
    %136 = vector.broadcast %cst_46 : f32 to vector<1x1xf32>
    %137 = arith.mulf %129, %136 : vector<1x1xf32>
    %cst_47 = arith.constant 2.44140625E-4 : f32
    %138 = vector.broadcast %cst_47 : f32 to vector<1x1xf32>
    %139 = arith.mulf %135, %138 : vector<1x1xf32>
    %140 = arith.mulf %137, %137 : vector<1x1xf32>
    %141 = arith.subf %139, %140 : vector<1x1xf32>
    %cst_48 = arith.constant 0.000000e+00 : f32
    %142 = vector.broadcast %cst_48 : f32 to vector<1x1xf32>
    %143 = arith.maximumf %141, %142 : vector<1x1xf32>
    %c0_49 = arith.constant 0 : index
    %c11 = arith.constant 11 : index
    %144 = vector.load %arg3[%c0_49, %c11] : memref<64x38xf32, #tpu.memory_space<vmem>>, vector<32x1xf32>
    %145 = vector.broadcast %137 : vector<1x1xf32> to vector<32x128xf32>
    %146 = arith.subf %119, %145 : vector<32x128xf32>
    %147 = vector.broadcast %144 : vector<32x1xf32> to vector<32x128xf32>
    %148 = arith.mulf %147, %146 : vector<32x128xf32>
    %cst_50 = arith.constant 9.99999974E-6 : f32
    %149 = vector.broadcast %cst_50 : f32 to vector<1x1xf32>
    %150 = arith.addf %143, %149 : vector<1x1xf32>
    %151 = math.rsqrt %150 : vector<1x1xf32>
    %152 = vector.broadcast %151 : vector<1x1xf32> to vector<32x128xf32>
    %153 = arith.mulf %148, %152 : vector<32x128xf32>
    %c0_51 = arith.constant 0 : index
    %c12 = arith.constant 12 : index
    %154 = vector.load %arg3[%c0_51, %c12] : memref<64x38xf32, #tpu.memory_space<vmem>>, vector<32x1xf32>
    %155 = vector.broadcast %154 : vector<32x1xf32> to vector<32x128xf32>
    %156 = arith.addf %153, %155 : vector<32x128xf32>
    %157 = arith.truncf %156 : vector<32x128xf32> to vector<32x128xbf16>
    %c192 = arith.constant 192 : index
    %c0_52 = arith.constant 0 : index
    %158 = vector.load %arg2[%c192, %c0_52] : memref<336x64xbf16, #tpu.memory_space<vmem>>, vector<16x32xbf16>
    %cst_53 = arith.constant dense<0.000000e+00> : vector<16x128xf32>
    %159 = tpu.matmul %158, %157, %cst_53 {dimension_numbers = #tpu.dot_dimension_numbers<[1], [0], [0], [1], [0, 0, 1, 1], [], []>} : vector<16x32xbf16>, vector<32x128xbf16>, vector<16x128xf32> -> vector<16x128xf32>
    %160 = arith.addf %42, %159 : vector<16x128xf32>
    %c0_54 = arith.constant 0 : index
    %c14 = arith.constant 14 : index
    %161 = vector.load %arg3[%c0_54, %c14] : memref<64x38xf32, #tpu.memory_space<vmem>>, vector<16x1xf32>
    %162 = vector.broadcast %161 : vector<16x1xf32> to vector<16x128xf32>
    %163 = arith.addf %160, %162 : vector<16x128xf32>
    %c144 = arith.constant 144 : index
    %c0_55 = arith.constant 0 : index
    %164 = vector.load %arg2[%c144, %c0_55] : memref<336x64xbf16, #tpu.memory_space<vmem>>, vector<16x32xbf16>
    %cst_56 = arith.constant dense<0.000000e+00> : vector<16x128xf32>
    %165 = tpu.matmul %164, %157, %cst_56 {dimension_numbers = #tpu.dot_dimension_numbers<[1], [0], [0], [1], [0, 0, 1, 1], [], []>} : vector<16x32xbf16>, vector<32x128xbf16>, vector<16x128xf32> -> vector<16x128xf32>
    %166 = arith.addf %40, %165 : vector<16x128xf32>
    %c0_57 = arith.constant 0 : index
    %c13 = arith.constant 13 : index
    %167 = vector.load %arg3[%c0_57, %c13] : memref<64x38xf32, #tpu.memory_space<vmem>>, vector<16x1xf32>
    %168 = vector.broadcast %167 : vector<16x1xf32> to vector<16x128xf32>
    %169 = arith.addf %166, %168 : vector<16x128xf32>
    %c80 = arith.constant 80 : index
    %c0_58 = arith.constant 0 : index
    %170 = vector.load %arg2[%c80, %c0_58] : memref<336x64xbf16, #tpu.memory_space<vmem>>, vector<32x16xbf16>
    %171 = arith.truncf %169 : vector<16x128xf32> to vector<16x128xbf16>
    %cst_59 = arith.constant dense<0.000000e+00> : vector<32x128xf32>
    %172 = tpu.matmul %170, %171, %cst_59 {dimension_numbers = #tpu.dot_dimension_numbers<[1], [0], [0], [1], [0, 0, 1, 1], [], []>} : vector<32x16xbf16>, vector<16x128xbf16>, vector<32x128xf32> -> vector<32x128xf32>
    %c0_60 = arith.constant 0 : index
    %c15 = arith.constant 15 : index
    %173 = vector.load %arg3[%c0_60, %c15] : memref<64x38xf32, #tpu.memory_space<vmem>>, vector<32x1xf32>
    %174 = vector.broadcast %173 : vector<32x1xf32> to vector<32x128xf32>
    %175 = arith.addf %172, %174 : vector<32x128xf32>
    %cst_61 = arith.constant 0.000000e+00 : f32
    %176 = vector.broadcast %cst_61 : f32 to vector<32x128xf32>
    %177 = arith.cmpf oge, %175, %176 : vector<32x128xf32>
    %cst_62 = arith.constant 2.500000e-01 : f32
    %178 = vector.broadcast %cst_62 : f32 to vector<32x128xf32>
    %179 = arith.mulf %178, %175 : vector<32x128xf32>
    %180 = arith.select %177, %175, %179 : vector<32x128xi1>, vector<32x128xf32>
    %181 = arith.mulf %180, %180 : vector<32x128xf32>
    %182 = tpu.concatenate %180, %181 in 0 : vector<32x128xf32>, vector<32x128xf32> -> vector<64x128xf32>
    %cst_63 = arith.constant dense<0.000000e+00> : vector<64xf32>
    %183 = vector.multi_reduction <add>, %182, %cst_63 [1] : vector<64x128xf32> to vector<64xf32>
    %184 = vector.shape_cast %183 : vector<64xf32> to vector<64x1xf32>
    %185 = vector.extract_strided_slice %184 {offsets = [0, 0], sizes = [32, 1], strides = [1, 1]} : vector<64x1xf32> to vector<32x1xf32>
    %186 = vector.shape_cast %185 : vector<32x1xf32> to vector<1x32x1xf32>
    %cst_64 = arith.constant dense<0.000000e+00> : vector<1xf32>
    %187 = vector.multi_reduction <add>, %186, %cst_64 [1, 2] : vector<1x32x1xf32> to vector<1xf32>
    %188 = vector.shape_cast %187 : vector<1xf32> to vector<1x1x1xf32>
    %189 = vector.extract %188[0, 0, 0] : f32 from vector<1x1x1xf32>
    %190 = vector.broadcast %189 : f32 to vector<1x1xf32>
    %191 = vector.extract_strided_slice %184 {offsets = [32, 0], sizes = [32, 1], strides = [1, 1]} : vector<64x1xf32> to vector<32x1xf32>
    %192 = vector.shape_cast %191 : vector<32x1xf32> to vector<1x32x1xf32>
    %cst_65 = arith.constant dense<0.000000e+00> : vector<1xf32>
    %193 = vector.multi_reduction <add>, %192, %cst_65 [1, 2] : vector<1x32x1xf32> to vector<1xf32>
    %194 = vector.shape_cast %193 : vector<1xf32> to vector<1x1x1xf32>
    %195 = vector.extract %194[0, 0, 0] : f32 from vector<1x1x1xf32>
    %196 = vector.broadcast %195 : f32 to vector<1x1xf32>
    %cst_66 = arith.constant 2.44140625E-4 : f32
    %197 = vector.broadcast %cst_66 : f32 to vector<1x1xf32>
    %198 = arith.mulf %190, %197 : vector<1x1xf32>
    %cst_67 = arith.constant 2.44140625E-4 : f32
    %199 = vector.broadcast %cst_67 : f32 to vector<1x1xf32>
    %200 = arith.mulf %196, %199 : vector<1x1xf32>
    %201 = arith.mulf %198, %198 : vector<1x1xf32>
    %202 = arith.subf %200, %201 : vector<1x1xf32>
    %cst_68 = arith.constant 0.000000e+00 : f32
    %203 = vector.broadcast %cst_68 : f32 to vector<1x1xf32>
    %204 = arith.maximumf %202, %203 : vector<1x1xf32>
    %c0_69 = arith.constant 0 : index
    %c16 = arith.constant 16 : index
    %205 = vector.load %arg3[%c0_69, %c16] : memref<64x38xf32, #tpu.memory_space<vmem>>, vector<32x1xf32>
    %206 = vector.broadcast %198 : vector<1x1xf32> to vector<32x128xf32>
    %207 = arith.subf %180, %206 : vector<32x128xf32>
    %208 = vector.broadcast %205 : vector<32x1xf32> to vector<32x128xf32>
    %209 = arith.mulf %208, %207 : vector<32x128xf32>
    %cst_70 = arith.constant 9.99999974E-6 : f32
    %210 = vector.broadcast %cst_70 : f32 to vector<1x1xf32>
    %211 = arith.addf %204, %210 : vector<1x1xf32>
    %212 = math.rsqrt %211 : vector<1x1xf32>
    %213 = vector.broadcast %212 : vector<1x1xf32> to vector<32x128xf32>
    %214 = arith.mulf %209, %213 : vector<32x128xf32>
    %c0_71 = arith.constant 0 : index
    %c17 = arith.constant 17 : index
    %215 = vector.load %arg3[%c0_71, %c17] : memref<64x38xf32, #tpu.memory_space<vmem>>, vector<32x1xf32>
    %216 = vector.broadcast %215 : vector<32x1xf32> to vector<32x128xf32>
    %217 = arith.addf %214, %216 : vector<32x128xf32>
    %c2_i32 = arith.constant 2 : i32
    %218 = vector.broadcast %c2_i32 : i32 to vector<32x128xi32>
    %219 = arith.cmpi sge, %41, %218 : vector<32x128xi32>
    %c2_i32_72 = arith.constant 2 : i32
    %220 = tpu.dynamic_rotate %217 by %c2_i32_72 dim 1 : vector<32x128xf32>, i32 -> vector<32x128xf32>
    %cst_73 = arith.constant 0.000000e+00 : f32
    %221 = vector.broadcast %cst_73 : f32 to vector<32x128xf32>
    %222 = arith.select %219, %220, %221 : vector<32x128xi1>, vector<32x128xf32>
    %c126_i32 = arith.constant 126 : i32
    %223 = vector.broadcast %c126_i32 : i32 to vector<32x128xi32>
    %224 = arith.cmpi slt, %41, %223 : vector<32x128xi32>
    %c126_i32_74 = arith.constant 126 : i32
    %225 = tpu.dynamic_rotate %217 by %c126_i32_74 dim 1 : vector<32x128xf32>, i32 -> vector<32x128xf32>
    %cst_75 = arith.constant 0.000000e+00 : f32
    %226 = vector.broadcast %cst_75 : f32 to vector<32x128xf32>
    %227 = arith.select %224, %225, %226 : vector<32x128xi1>, vector<32x128xf32>
    %c0_76 = arith.constant 0 : index
    %c18 = arith.constant 18 : index
    %228 = vector.load %arg3[%c0_76, %c18] : memref<64x38xf32, #tpu.memory_space<vmem>>, vector<32x1xf32>
    %229 = vector.broadcast %228 : vector<32x1xf32> to vector<32x128xf32>
    %230 = arith.mulf %222, %229 : vector<32x128xf32>
    %c0_77 = arith.constant 0 : index
    %c19 = arith.constant 19 : index
    %231 = vector.load %arg3[%c0_77, %c19] : memref<64x38xf32, #tpu.memory_space<vmem>>, vector<32x1xf32>
    %232 = vector.broadcast %231 : vector<32x1xf32> to vector<32x128xf32>
    %233 = arith.mulf %217, %232 : vector<32x128xf32>
    %234 = arith.addf %230, %233 : vector<32x128xf32>
    %c0_78 = arith.constant 0 : index
    %c20 = arith.constant 20 : index
    %235 = vector.load %arg3[%c0_78, %c20] : memref<64x38xf32, #tpu.memory_space<vmem>>, vector<32x1xf32>
    %236 = vector.broadcast %235 : vector<32x1xf32> to vector<32x128xf32>
    %237 = arith.mulf %227, %236 : vector<32x128xf32>
    %238 = arith.addf %234, %237 : vector<32x128xf32>
    %c0_79 = arith.constant 0 : index
    %c21 = arith.constant 21 : index
    %239 = vector.load %arg3[%c0_79, %c21] : memref<64x38xf32, #tpu.memory_space<vmem>>, vector<32x1xf32>
    %240 = vector.broadcast %239 : vector<32x1xf32> to vector<32x128xf32>
    %241 = arith.addf %238, %240 : vector<32x128xf32>
    %cst_80 = arith.constant 0.000000e+00 : f32
    %242 = vector.broadcast %cst_80 : f32 to vector<32x128xf32>
    %243 = arith.cmpf oge, %241, %242 : vector<32x128xf32>
    %cst_81 = arith.constant 2.500000e-01 : f32
    %244 = vector.broadcast %cst_81 : f32 to vector<32x128xf32>
    %245 = arith.mulf %244, %241 : vector<32x128xf32>
    %246 = arith.select %243, %241, %245 : vector<32x128xi1>, vector<32x128xf32>
    %247 = arith.mulf %246, %246 : vector<32x128xf32>
    %248 = tpu.concatenate %246, %247 in 0 : vector<32x128xf32>, vector<32x128xf32> -> vector<64x128xf32>
    %cst_82 = arith.constant dense<0.000000e+00> : vector<64xf32>
    %249 = vector.multi_reduction <add>, %248, %cst_82 [1] : vector<64x128xf32> to vector<64xf32>
    %250 = vector.shape_cast %249 : vector<64xf32> to vector<64x1xf32>
    %251 = vector.extract_strided_slice %250 {offsets = [0, 0], sizes = [32, 1], strides = [1, 1]} : vector<64x1xf32> to vector<32x1xf32>
    %252 = vector.shape_cast %251 : vector<32x1xf32> to vector<1x32x1xf32>
    %cst_83 = arith.constant dense<0.000000e+00> : vector<1xf32>
    %253 = vector.multi_reduction <add>, %252, %cst_83 [1, 2] : vector<1x32x1xf32> to vector<1xf32>
    %254 = vector.shape_cast %253 : vector<1xf32> to vector<1x1x1xf32>
    %255 = vector.extract %254[0, 0, 0] : f32 from vector<1x1x1xf32>
    %256 = vector.broadcast %255 : f32 to vector<1x1xf32>
    %257 = vector.extract_strided_slice %250 {offsets = [32, 0], sizes = [32, 1], strides = [1, 1]} : vector<64x1xf32> to vector<32x1xf32>
    %258 = vector.shape_cast %257 : vector<32x1xf32> to vector<1x32x1xf32>
    %cst_84 = arith.constant dense<0.000000e+00> : vector<1xf32>
    %259 = vector.multi_reduction <add>, %258, %cst_84 [1, 2] : vector<1x32x1xf32> to vector<1xf32>
    %260 = vector.shape_cast %259 : vector<1xf32> to vector<1x1x1xf32>
    %261 = vector.extract %260[0, 0, 0] : f32 from vector<1x1x1xf32>
    %262 = vector.broadcast %261 : f32 to vector<1x1xf32>
    %cst_85 = arith.constant 2.44140625E-4 : f32
    %263 = vector.broadcast %cst_85 : f32 to vector<1x1xf32>
    %264 = arith.mulf %256, %263 : vector<1x1xf32>
    %cst_86 = arith.constant 2.44140625E-4 : f32
    %265 = vector.broadcast %cst_86 : f32 to vector<1x1xf32>
    %266 = arith.mulf %262, %265 : vector<1x1xf32>
    %267 = arith.mulf %264, %264 : vector<1x1xf32>
    %268 = arith.subf %266, %267 : vector<1x1xf32>
    %cst_87 = arith.constant 0.000000e+00 : f32
    %269 = vector.broadcast %cst_87 : f32 to vector<1x1xf32>
    %270 = arith.maximumf %268, %269 : vector<1x1xf32>
    %c0_88 = arith.constant 0 : index
    %c22 = arith.constant 22 : index
    %271 = vector.load %arg3[%c0_88, %c22] : memref<64x38xf32, #tpu.memory_space<vmem>>, vector<32x1xf32>
    %272 = vector.broadcast %264 : vector<1x1xf32> to vector<32x128xf32>
    %273 = arith.subf %246, %272 : vector<32x128xf32>
    %274 = vector.broadcast %271 : vector<32x1xf32> to vector<32x128xf32>
    %275 = arith.mulf %274, %273 : vector<32x128xf32>
    %cst_89 = arith.constant 9.99999974E-6 : f32
    %276 = vector.broadcast %cst_89 : f32 to vector<1x1xf32>
    %277 = arith.addf %270, %276 : vector<1x1xf32>
    %278 = math.rsqrt %277 : vector<1x1xf32>
    %279 = vector.broadcast %278 : vector<1x1xf32> to vector<32x128xf32>
    %280 = arith.mulf %275, %279 : vector<32x128xf32>
    %c0_90 = arith.constant 0 : index
    %c23 = arith.constant 23 : index
    %281 = vector.load %arg3[%c0_90, %c23] : memref<64x38xf32, #tpu.memory_space<vmem>>, vector<32x1xf32>
    %282 = vector.broadcast %281 : vector<32x1xf32> to vector<32x128xf32>
    %283 = arith.addf %280, %282 : vector<32x128xf32>
    %284 = arith.truncf %283 : vector<32x128xf32> to vector<32x128xbf16>
    %c208 = arith.constant 208 : index
    %c0_91 = arith.constant 0 : index
    %285 = vector.load %arg2[%c208, %c0_91] : memref<336x64xbf16, #tpu.memory_space<vmem>>, vector<16x32xbf16>
    %cst_92 = arith.constant dense<0.000000e+00> : vector<16x128xf32>
    %286 = tpu.matmul %285, %284, %cst_92 {dimension_numbers = #tpu.dot_dimension_numbers<[1], [0], [0], [1], [0, 0, 1, 1], [], []>} : vector<16x32xbf16>, vector<32x128xbf16>, vector<16x128xf32> -> vector<16x128xf32>
    %287 = arith.addf %163, %286 : vector<16x128xf32>
    %c0_93 = arith.constant 0 : index
    %c25 = arith.constant 25 : index
    %288 = vector.load %arg3[%c0_93, %c25] : memref<64x38xf32, #tpu.memory_space<vmem>>, vector<16x1xf32>
    %289 = vector.broadcast %288 : vector<16x1xf32> to vector<16x128xf32>
    %290 = arith.addf %287, %289 : vector<16x128xf32>
    %c160 = arith.constant 160 : index
    %c0_94 = arith.constant 0 : index
    %291 = vector.load %arg2[%c160, %c0_94] : memref<336x64xbf16, #tpu.memory_space<vmem>>, vector<16x32xbf16>
    %cst_95 = arith.constant dense<0.000000e+00> : vector<16x128xf32>
    %292 = tpu.matmul %291, %284, %cst_95 {dimension_numbers = #tpu.dot_dimension_numbers<[1], [0], [0], [1], [0, 0, 1, 1], [], []>} : vector<16x32xbf16>, vector<32x128xbf16>, vector<16x128xf32> -> vector<16x128xf32>
    %293 = arith.addf %169, %292 : vector<16x128xf32>
    %c0_96 = arith.constant 0 : index
    %c24 = arith.constant 24 : index
    %294 = vector.load %arg3[%c0_96, %c24] : memref<64x38xf32, #tpu.memory_space<vmem>>, vector<16x1xf32>
    %295 = vector.broadcast %294 : vector<16x1xf32> to vector<16x128xf32>
    %296 = arith.addf %293, %295 : vector<16x128xf32>
    %c112 = arith.constant 112 : index
    %c0_97 = arith.constant 0 : index
    %297 = vector.load %arg2[%c112, %c0_97] : memref<336x64xbf16, #tpu.memory_space<vmem>>, vector<32x16xbf16>
    %298 = arith.truncf %296 : vector<16x128xf32> to vector<16x128xbf16>
    %cst_98 = arith.constant dense<0.000000e+00> : vector<32x128xf32>
    %299 = tpu.matmul %297, %298, %cst_98 {dimension_numbers = #tpu.dot_dimension_numbers<[1], [0], [0], [1], [0, 0, 1, 1], [], []>} : vector<32x16xbf16>, vector<16x128xbf16>, vector<32x128xf32> -> vector<32x128xf32>
    %c0_99 = arith.constant 0 : index
    %c26 = arith.constant 26 : index
    %300 = vector.load %arg3[%c0_99, %c26] : memref<64x38xf32, #tpu.memory_space<vmem>>, vector<32x1xf32>
    %301 = vector.broadcast %300 : vector<32x1xf32> to vector<32x128xf32>
    %302 = arith.addf %299, %301 : vector<32x128xf32>
    %cst_100 = arith.constant 0.000000e+00 : f32
    %303 = vector.broadcast %cst_100 : f32 to vector<32x128xf32>
    %304 = arith.cmpf oge, %302, %303 : vector<32x128xf32>
    %cst_101 = arith.constant 2.500000e-01 : f32
    %305 = vector.broadcast %cst_101 : f32 to vector<32x128xf32>
    %306 = arith.mulf %305, %302 : vector<32x128xf32>
    %307 = arith.select %304, %302, %306 : vector<32x128xi1>, vector<32x128xf32>
    %308 = arith.mulf %307, %307 : vector<32x128xf32>
    %309 = tpu.concatenate %307, %308 in 0 : vector<32x128xf32>, vector<32x128xf32> -> vector<64x128xf32>
    %cst_102 = arith.constant dense<0.000000e+00> : vector<64xf32>
    %310 = vector.multi_reduction <add>, %309, %cst_102 [1] : vector<64x128xf32> to vector<64xf32>
    %311 = vector.shape_cast %310 : vector<64xf32> to vector<64x1xf32>
    %312 = vector.extract_strided_slice %311 {offsets = [0, 0], sizes = [32, 1], strides = [1, 1]} : vector<64x1xf32> to vector<32x1xf32>
    %313 = vector.shape_cast %312 : vector<32x1xf32> to vector<1x32x1xf32>
    %cst_103 = arith.constant dense<0.000000e+00> : vector<1xf32>
    %314 = vector.multi_reduction <add>, %313, %cst_103 [1, 2] : vector<1x32x1xf32> to vector<1xf32>
    %315 = vector.shape_cast %314 : vector<1xf32> to vector<1x1x1xf32>
    %316 = vector.extract %315[0, 0, 0] : f32 from vector<1x1x1xf32>
    %317 = vector.broadcast %316 : f32 to vector<1x1xf32>
    %318 = vector.extract_strided_slice %311 {offsets = [32, 0], sizes = [32, 1], strides = [1, 1]} : vector<64x1xf32> to vector<32x1xf32>
    %319 = vector.shape_cast %318 : vector<32x1xf32> to vector<1x32x1xf32>
    %cst_104 = arith.constant dense<0.000000e+00> : vector<1xf32>
    %320 = vector.multi_reduction <add>, %319, %cst_104 [1, 2] : vector<1x32x1xf32> to vector<1xf32>
    %321 = vector.shape_cast %320 : vector<1xf32> to vector<1x1x1xf32>
    %322 = vector.extract %321[0, 0, 0] : f32 from vector<1x1x1xf32>
    %323 = vector.broadcast %322 : f32 to vector<1x1xf32>
    %cst_105 = arith.constant 2.44140625E-4 : f32
    %324 = vector.broadcast %cst_105 : f32 to vector<1x1xf32>
    %325 = arith.mulf %317, %324 : vector<1x1xf32>
    %cst_106 = arith.constant 2.44140625E-4 : f32
    %326 = vector.broadcast %cst_106 : f32 to vector<1x1xf32>
    %327 = arith.mulf %323, %326 : vector<1x1xf32>
    %328 = arith.mulf %325, %325 : vector<1x1xf32>
    %329 = arith.subf %327, %328 : vector<1x1xf32>
    %cst_107 = arith.constant 0.000000e+00 : f32
    %330 = vector.broadcast %cst_107 : f32 to vector<1x1xf32>
    %331 = arith.maximumf %329, %330 : vector<1x1xf32>
    %c0_108 = arith.constant 0 : index
    %c27 = arith.constant 27 : index
    %332 = vector.load %arg3[%c0_108, %c27] : memref<64x38xf32, #tpu.memory_space<vmem>>, vector<32x1xf32>
    %333 = vector.broadcast %325 : vector<1x1xf32> to vector<32x128xf32>
    %334 = arith.subf %307, %333 : vector<32x128xf32>
    %335 = vector.broadcast %332 : vector<32x1xf32> to vector<32x128xf32>
    %336 = arith.mulf %335, %334 : vector<32x128xf32>
    %cst_109 = arith.constant 9.99999974E-6 : f32
    %337 = vector.broadcast %cst_109 : f32 to vector<1x1xf32>
    %338 = arith.addf %331, %337 : vector<1x1xf32>
    %339 = math.rsqrt %338 : vector<1x1xf32>
    %340 = vector.broadcast %339 : vector<1x1xf32> to vector<32x128xf32>
    %341 = arith.mulf %336, %340 : vector<32x128xf32>
    %c0_110 = arith.constant 0 : index
    %c28 = arith.constant 28 : index
    %342 = vector.load %arg3[%c0_110, %c28] : memref<64x38xf32, #tpu.memory_space<vmem>>, vector<32x1xf32>
    %343 = vector.broadcast %342 : vector<32x1xf32> to vector<32x128xf32>
    %344 = arith.addf %341, %343 : vector<32x128xf32>
    %c4_i32 = arith.constant 4 : i32
    %345 = vector.broadcast %c4_i32 : i32 to vector<32x128xi32>
    %346 = arith.cmpi sge, %41, %345 : vector<32x128xi32>
    %c4_i32_111 = arith.constant 4 : i32
    %347 = tpu.dynamic_rotate %344 by %c4_i32_111 dim 1 : vector<32x128xf32>, i32 -> vector<32x128xf32>
    %cst_112 = arith.constant 0.000000e+00 : f32
    %348 = vector.broadcast %cst_112 : f32 to vector<32x128xf32>
    %349 = arith.select %346, %347, %348 : vector<32x128xi1>, vector<32x128xf32>
    %c124_i32 = arith.constant 124 : i32
    %350 = vector.broadcast %c124_i32 : i32 to vector<32x128xi32>
    %351 = arith.cmpi slt, %41, %350 : vector<32x128xi32>
    %c124_i32_113 = arith.constant 124 : i32
    %352 = tpu.dynamic_rotate %344 by %c124_i32_113 dim 1 : vector<32x128xf32>, i32 -> vector<32x128xf32>
    %cst_114 = arith.constant 0.000000e+00 : f32
    %353 = vector.broadcast %cst_114 : f32 to vector<32x128xf32>
    %354 = arith.select %351, %352, %353 : vector<32x128xi1>, vector<32x128xf32>
    %c0_115 = arith.constant 0 : index
    %c29 = arith.constant 29 : index
    %355 = vector.load %arg3[%c0_115, %c29] : memref<64x38xf32, #tpu.memory_space<vmem>>, vector<32x1xf32>
    %356 = vector.broadcast %355 : vector<32x1xf32> to vector<32x128xf32>
    %357 = arith.mulf %349, %356 : vector<32x128xf32>
    %c0_116 = arith.constant 0 : index
    %c30 = arith.constant 30 : index
    %358 = vector.load %arg3[%c0_116, %c30] : memref<64x38xf32, #tpu.memory_space<vmem>>, vector<32x1xf32>
    %359 = vector.broadcast %358 : vector<32x1xf32> to vector<32x128xf32>
    %360 = arith.mulf %344, %359 : vector<32x128xf32>
    %361 = arith.addf %357, %360 : vector<32x128xf32>
    %c0_117 = arith.constant 0 : index
    %c31 = arith.constant 31 : index
    %362 = vector.load %arg3[%c0_117, %c31] : memref<64x38xf32, #tpu.memory_space<vmem>>, vector<32x1xf32>
    %363 = vector.broadcast %362 : vector<32x1xf32> to vector<32x128xf32>
    %364 = arith.mulf %354, %363 : vector<32x128xf32>
    %365 = arith.addf %361, %364 : vector<32x128xf32>
    %c0_118 = arith.constant 0 : index
    %c32_119 = arith.constant 32 : index
    %366 = vector.load %arg3[%c0_118, %c32_119] : memref<64x38xf32, #tpu.memory_space<vmem>>, vector<32x1xf32>
    %367 = vector.broadcast %366 : vector<32x1xf32> to vector<32x128xf32>
    %368 = arith.addf %365, %367 : vector<32x128xf32>
    %cst_120 = arith.constant 0.000000e+00 : f32
    %369 = vector.broadcast %cst_120 : f32 to vector<32x128xf32>
    %370 = arith.cmpf oge, %368, %369 : vector<32x128xf32>
    %cst_121 = arith.constant 2.500000e-01 : f32
    %371 = vector.broadcast %cst_121 : f32 to vector<32x128xf32>
    %372 = arith.mulf %371, %368 : vector<32x128xf32>
    %373 = arith.select %370, %368, %372 : vector<32x128xi1>, vector<32x128xf32>
    %374 = arith.mulf %373, %373 : vector<32x128xf32>
    %375 = tpu.concatenate %373, %374 in 0 : vector<32x128xf32>, vector<32x128xf32> -> vector<64x128xf32>
    %cst_122 = arith.constant dense<0.000000e+00> : vector<64xf32>
    %376 = vector.multi_reduction <add>, %375, %cst_122 [1] : vector<64x128xf32> to vector<64xf32>
    %377 = vector.shape_cast %376 : vector<64xf32> to vector<64x1xf32>
    %378 = vector.extract_strided_slice %377 {offsets = [0, 0], sizes = [32, 1], strides = [1, 1]} : vector<64x1xf32> to vector<32x1xf32>
    %379 = vector.shape_cast %378 : vector<32x1xf32> to vector<1x32x1xf32>
    %cst_123 = arith.constant dense<0.000000e+00> : vector<1xf32>
    %380 = vector.multi_reduction <add>, %379, %cst_123 [1, 2] : vector<1x32x1xf32> to vector<1xf32>
    %381 = vector.shape_cast %380 : vector<1xf32> to vector<1x1x1xf32>
    %382 = vector.extract %381[0, 0, 0] : f32 from vector<1x1x1xf32>
    %383 = vector.broadcast %382 : f32 to vector<1x1xf32>
    %384 = vector.extract_strided_slice %377 {offsets = [32, 0], sizes = [32, 1], strides = [1, 1]} : vector<64x1xf32> to vector<32x1xf32>
    %385 = vector.shape_cast %384 : vector<32x1xf32> to vector<1x32x1xf32>
    %cst_124 = arith.constant dense<0.000000e+00> : vector<1xf32>
    %386 = vector.multi_reduction <add>, %385, %cst_124 [1, 2] : vector<1x32x1xf32> to vector<1xf32>
    %387 = vector.shape_cast %386 : vector<1xf32> to vector<1x1x1xf32>
    %388 = vector.extract %387[0, 0, 0] : f32 from vector<1x1x1xf32>
    %389 = vector.broadcast %388 : f32 to vector<1x1xf32>
    %cst_125 = arith.constant 2.44140625E-4 : f32
    %390 = vector.broadcast %cst_125 : f32 to vector<1x1xf32>
    %391 = arith.mulf %383, %390 : vector<1x1xf32>
    %cst_126 = arith.constant 2.44140625E-4 : f32
    %392 = vector.broadcast %cst_126 : f32 to vector<1x1xf32>
    %393 = arith.mulf %389, %392 : vector<1x1xf32>
    %394 = arith.mulf %391, %391 : vector<1x1xf32>
    %395 = arith.subf %393, %394 : vector<1x1xf32>
    %cst_127 = arith.constant 0.000000e+00 : f32
    %396 = vector.broadcast %cst_127 : f32 to vector<1x1xf32>
    %397 = arith.maximumf %395, %396 : vector<1x1xf32>
    %c0_128 = arith.constant 0 : index
    %c33 = arith.constant 33 : index
    %398 = vector.load %arg3[%c0_128, %c33] : memref<64x38xf32, #tpu.memory_space<vmem>>, vector<32x1xf32>
    %399 = vector.broadcast %391 : vector<1x1xf32> to vector<32x128xf32>
    %400 = arith.subf %373, %399 : vector<32x128xf32>
    %401 = vector.broadcast %398 : vector<32x1xf32> to vector<32x128xf32>
    %402 = arith.mulf %401, %400 : vector<32x128xf32>
    %cst_129 = arith.constant 9.99999974E-6 : f32
    %403 = vector.broadcast %cst_129 : f32 to vector<1x1xf32>
    %404 = arith.addf %397, %403 : vector<1x1xf32>
    %405 = math.rsqrt %404 : vector<1x1xf32>
    %406 = vector.broadcast %405 : vector<1x1xf32> to vector<32x128xf32>
    %407 = arith.mulf %402, %406 : vector<32x128xf32>
    %c0_130 = arith.constant 0 : index
    %c34 = arith.constant 34 : index
    %408 = vector.load %arg3[%c0_130, %c34] : memref<64x38xf32, #tpu.memory_space<vmem>>, vector<32x1xf32>
    %409 = vector.broadcast %408 : vector<32x1xf32> to vector<32x128xf32>
    %410 = arith.addf %407, %409 : vector<32x128xf32>
    %411 = arith.truncf %410 : vector<32x128xf32> to vector<32x128xbf16>
    %c224 = arith.constant 224 : index
    %c0_131 = arith.constant 0 : index
    %412 = vector.load %arg2[%c224, %c0_131] : memref<336x64xbf16, #tpu.memory_space<vmem>>, vector<16x32xbf16>
    %cst_132 = arith.constant dense<0.000000e+00> : vector<16x128xf32>
    %413 = tpu.matmul %412, %411, %cst_132 {dimension_numbers = #tpu.dot_dimension_numbers<[1], [0], [0], [1], [0, 0, 1, 1], [], []>} : vector<16x32xbf16>, vector<32x128xbf16>, vector<16x128xf32> -> vector<16x128xf32>
    %414 = arith.addf %290, %413 : vector<16x128xf32>
    %c0_133 = arith.constant 0 : index
    %c36 = arith.constant 36 : index
    %415 = vector.load %arg3[%c0_133, %c36] : memref<64x38xf32, #tpu.memory_space<vmem>>, vector<16x1xf32>
    %416 = vector.broadcast %415 : vector<16x1xf32> to vector<16x128xf32>
    %417 = arith.addf %414, %416 : vector<16x128xf32>
    %cst_134 = arith.constant 1.000000e+00 : f32
    %418 = vector.broadcast %cst_134 : f32 to vector<16x128xf32>
    %419 = arith.mulf %417, %418 : vector<16x128xf32>
    %cst_135 = arith.constant 0.000000e+00 : f32
    %420 = vector.broadcast %cst_135 : f32 to vector<16x128xf32>
    %421 = arith.cmpf oge, %419, %420 : vector<16x128xf32>
    %cst_136 = arith.constant 2.500000e-01 : f32
    %422 = vector.broadcast %cst_136 : f32 to vector<16x128xf32>
    %423 = arith.mulf %422, %419 : vector<16x128xf32>
    %424 = arith.select %421, %419, %423 : vector<16x128xi1>, vector<16x128xf32>
    %c240 = arith.constant 240 : index
    %c0_137 = arith.constant 0 : index
    %425 = vector.load %arg2[%c240, %c0_137] : memref<336x64xbf16, #tpu.memory_space<vmem>>, vector<64x16xbf16>
    %426 = arith.truncf %424 : vector<16x128xf32> to vector<16x128xbf16>
    %cst_138 = arith.constant dense<0.000000e+00> : vector<64x128xf32>
    %427 = tpu.matmul %425, %426, %cst_138 {dimension_numbers = #tpu.dot_dimension_numbers<[1], [0], [0], [1], [0, 0, 1, 1], [], []>} : vector<64x16xbf16>, vector<16x128xbf16>, vector<64x128xf32> -> vector<64x128xf32>
    %c0_139 = arith.constant 0 : index
    %c37 = arith.constant 37 : index
    %428 = vector.load %arg3[%c0_139, %c37] : memref<64x38xf32, #tpu.memory_space<vmem>>, vector<64x1xf32>
    %429 = vector.broadcast %428 : vector<64x1xf32> to vector<64x128xf32>
    %430 = arith.addf %427, %429 : vector<64x128xf32>
    %431 = arith.negf %430 : vector<64x128xf32>
    %432 = math.exp %431 : vector<64x128xf32>
    %cst_140 = arith.constant 1.000000e+00 : f32
    %433 = vector.broadcast %cst_140 : f32 to vector<64x128xf32>
    %434 = arith.addf %433, %432 : vector<64x128xf32>
    %435 = arith.divf %433, %434 : vector<64x128xf32>
    %436 = tpu.concatenate %8, %8 in 0 : vector<32x128xf32>, vector<32x128xf32> -> vector<64x128xf32>
    %437 = arith.mulf %436, %435 : vector<64x128xf32>
    %438 = arith.truncf %437 : vector<64x128xf32> to vector<64x128xbf16>
    %c304 = arith.constant 304 : index
    %c0_141 = arith.constant 0 : index
    %439 = vector.load %arg2[%c304, %c0_141] : memref<336x64xbf16, #tpu.memory_space<vmem>>, vector<32x64xbf16>
    %cst_142 = arith.constant dense<0.000000e+00> : vector<32x128xf32>
    %440 = tpu.matmul %439, %438, %cst_142 {dimension_numbers = #tpu.dot_dimension_numbers<[1], [0], [0], [1], [0, 0, 1, 1], [], []>} : vector<32x64xbf16>, vector<64x128xbf16>, vector<32x128xf32> -> vector<32x128xf32>
    %c0_143 = arith.constant 0 : index
    %c0_144 = arith.constant 0 : index
    %c0_145 = arith.constant 0 : index
    %441 = vector.load %arg4[%c0_143, %c0_144, %c0_145] : memref<1x32x128xf32, #tpu.memory_space<vmem>>, vector<1x32x128xf32>
    %442 = vector.shape_cast %441 : vector<1x32x128xf32> to vector<32x128xf32>
    %443 = vector.shape_cast %440 : vector<32x128xf32> to vector<1x32x128xf32>
    tpu.vector_store %arg4[%c0_143, %c0_144, %c0_145], %443 {strides = array<i32>} : memref<1x32x128xf32, #tpu.memory_space<vmem>>, vector<1x32x128xf32>,
    return
  }
  func.func @transform_0(%arg0: i32) -> (i32, i32, i32) {
    %c0_i32 = arith.constant 0 : i32
    %c0_i32_0 = arith.constant 0 : i32
    %c0_i32_1 = arith.constant 0 : i32
    return %arg0, %c0_i32, %c0_i32_0 : i32, i32, i32
  }
  func.func @transform_1(%arg0: i32) -> (i32, i32) {
    %c0_i32 = arith.constant 0 : i32
    %c0_i32_0 = arith.constant 0 : i32
    %c0_i32_1 = arith.constant 0 : i32
    return %c0_i32, %c0_i32_0 : i32, i32
  }
  func.func @transform_2(%arg0: i32) -> (i32, i32) {
    %c0_i32 = arith.constant 0 : i32
    %c0_i32_0 = arith.constant 0 : i32
    %c0_i32_1 = arith.constant 0 : i32
    return %c0_i32, %c0_i32_0 : i32, i32
  }
  func.func @transform_3(%arg0: i32) -> (i32, i32, i32) {
    %c0_i32 = arith.constant 0 : i32
    %c0_i32_0 = arith.constant 0 : i32
    %c0_i32_1 = arith.constant 0 : i32
    return %arg0, %c0_i32, %c0_i32_0 : i32, i32, i32
  }
}

</mosaic_0001>

<llo_original>
// kernel: pallas_forward.1
$region0: #{pallas_forward.1}
  #allocation0 [shape = 'u32[]', space=smem, size = 0x4, offset = 0x4, fixed_abs, tag = 'smem constant byte address 0x4 - core index']
  #allocation1 [shape = 'u32[144,128]{1,0:T(1,128)}', space=vmem, size = 0x12000, scoped, tag = 'internal scratch']
  %s0 = inlined_call_operand.vmem [shape: bf16[2,16,128], index: 0, kind: input, shape index: {}]
  %s1 = inlined_call_operand.vmem [shape: bf16[336,64], index: 1, kind: input, shape index: {}]
  %s2 = inlined_call_operand.vmem [shape: f32[64,38], index: 2, kind: input, shape index: {}]
  %s3 = inlined_call_operand.vmem [shape: f32[2,32,128], index: 3, kind: output, shape index: {}]
  %s4 = sld [smem:[#allocation0]]
  $region45: #{pallas_forward.1} parent=0
    _
  %s6 = ssub.s32 1, %s4
  %s7 = scalar_select 0, %s6, %s4
  loop: start=0, step=1, limit=4
  $region2: #{pallas_forward.1} parent=0 // loop_pre_header
    _
  $region3: #{pallas_forward.1} parent=0 // loop_header
    %s9 = sphi 0, %s13
    %p10 = scmp.ge.s32.totalorder %s9, 4
    %s19 = sphi 0, %s21
    %s22 = sphi 0, %s19
    %s23 = sphi 0, %s22
    %s39 = sphi 0, %s23
    %s43 = sphi 0, %s43
    %s45 = sphi 0, %s43
    %s46 = sphi 0, %s45
    %s60 = sphi 0, %s46
    %s64 = sphi 0, %s64
    %s66 = sphi 0, %s64
    %s67 = sphi 0, %s66
    %s81 = sphi 0, %s67
    %s87 = sphi 0, %s89
    %s90 = sphi 0, %s87
    %s91 = sphi 0, %s90
    %s107 = sphi 0, %s91
  $region4: #{pallas_forward.1} parent=0 // loop_header_branch
    %12 = sbr.rel (%p10) target = $region8
  $region5: #{pallas_forward.1} parent=0 // loop_body
    %s14 = ssub.s32 %s9, 1
    %s15 = ssub.s32 %s9, 2
    %s16 = sadd.s32 %s9, 1
    %s17 = ssub.s32 %s9, %s16
    %p18 = scmp.eq.s32.totalorder %s17, 0
    %s20 = sadd.s32 %s19, 1
    %s21 = scalar_select %p18, %s19, %s20
    %p24 = pneg %p18
    %p25 = scmp.eq.s32.totalorder %s9, 1
    %p26 = por %p24, %p25
    %p27 = scmp.ne.s32.totalorder %s19, %s22
    %p28 = scmp.eq.s32.totalorder %s9, 0
    %p29 = por %p27, %p28
    %p30 = scmp.ne.s32.totalorder %s19, %s22
    %p31 = scmp.eq.s32.totalorder %s14, 1
    %p32 = por %p30, %p31
    %p33 = scmp.ne.s32.totalorder %s22, %s23
    %p34 = scmp.eq.s32.totalorder %s14, 0
    %p35 = por %p33, %p34
    %p36 = scmp.ne.s32.totalorder %s22, %s23
    %p37 = scmp.eq.s32.totalorder %s15, 1
    %p38 = por %p36, %p37
    %p40 = scmp.ne.s32.totalorder %s23, %s39
    %p41 = scmp.eq.s32.totalorder %s15, 0
    %p42 = por %p40, %p41
    %s44 = sadd.s32 %s43, 1
    %p47 = scmp.eq.s32.totalorder %s9, 1
    %p48 = scmp.ne.s32.totalorder %s43, %s45
    %p49 = scmp.eq.s32.totalorder %s9, 0
    %p50 = por %p48, %p49
    %p51 = scmp.ne.s32.totalorder %s43, %s45
    %p52 = scmp.eq.s32.totalorder %s14, 1
    %p53 = por %p51, %p52
    %p54 = scmp.ne.s32.totalorder %s45, %s46
    %p55 = scmp.eq.s32.totalorder %s14, 0
    %p56 = por %p54, %p55
    %p57 = scmp.ne.s32.totalorder %s45, %s46
    %p58 = scmp.eq.s32.totalorder %s15, 1
    %p59 = por %p57, %p58
    %p61 = scmp.ne.s32.totalorder %s46, %s60
    %p62 = scmp.eq.s32.totalorder %s15, 0
    %p63 = por %p61, %p62
    %s65 = sadd.s32 %s64, 1
    %p68 = scmp.eq.s32.totalorder %s9, 1
    %p69 = scmp.ne.s32.totalorder %s64, %s66
    %p70 = scmp.eq.s32.totalorder %s9, 0
    %p71 = por %p69, %p70
    %p72 = scmp.ne.s32.totalorder %s64, %s66
    %p73 = scmp.eq.s32.totalorder %s14, 1
    %p74 = por %p72, %p73
    %p75 = scmp.ne.s32.totalorder %s66, %s67
    %p76 = scmp.eq.s32.totalorder %s14, 0
    %p77 = por %p75, %p76
    %p78 = scmp.ne.s32.totalorder %s66, %s67
    %p79 = scmp.eq.s32.totalorder %s15, 1
    %p80 = por %p78, %p79
    %p82 = scmp.ne.s32.totalorder %s67, %s81
    %p83 = scmp.eq.s32.totalorder %s15, 0
    %p84 = por %p82, %p83
    %s85 = ssub.s32 %s9, %s16
    %p86 = scmp.eq.s32.totalorder %s85, 0
    %s88 = sadd.s32 %s87, 1
    %s89 = scalar_select %p86, %s87, %s88
    %p92 = pneg %p86
    %p93 = scmp.eq.s32.totalorder %s9, 1
    %p94 = por %p92, %p93
    %p95 = scmp.ne.s32.totalorder %s87, %s90
    %p96 = scmp.eq.s32.totalorder %s9, 0
    %p97 = por %p95, %p96
    %p98 = scmp.ne.s32.totalorder %s87, %s90
    %p99 = scmp.eq.s32.totalorder %s14, 1
    %p100 = por %p98, %p99
    %p101 = scmp.ne.s32.totalorder %s90, %s91
    %p102 = scmp.eq.s32.totalorder %s14, 0
    %p103 = por %p101, %p102
    %p104 = scmp.ne.s32.totalorder %s90, %s91
    %p105 = scmp.eq.s32.totalorder %s15, 1
    %p106 = por %p104, %p105
    %p108 = scmp.ne.s32.totalorder %s91, %s107
    %p109 = scmp.eq.s32.totalorder %s15, 0
    %p110 = por %p108, %p109
    %p111 = scmp.le.s32.totalorder 1, %s9
    %p112 = scmp.lt.s32.totalorder %s9, 3
    %p113 = pnand %p111, %p112
    %p114 = pneg %p113
    // Predicated region
    $region9: #{pallas_forward.1} parent=5 // pred_check
      _
    $region10: #{pallas_forward.1} parent=5 // pred_check_branch
      %116 = sbr.rel (%p113) target = $region12
    $region11: #{pallas_forward.1} parent=5 // pred_region
      %s117 = ssub.s32 %s9, 1
      // Predicated region
      $region13: #{pallas_forward.1} parent=11 // pred_check
        %p118 = pneg %p56
      $region14: #{pallas_forward.1} parent=11 // pred_check_branch
        %120 = sbr.rel (%p118) target = $region16
      $region15: #{pallas_forward.1} parent=11 // pred_region
        _
      $region16: #{pallas_forward.1} parent=11 // pred_fallthru
        _
      // Predicated region
      $region17: #{pallas_forward.1} parent=11 // pred_check
        %p121 = pneg %p77
      $region18: #{pallas_forward.1} parent=11 // pred_check_branch
        %123 = sbr.rel (%p121) target = $region20
      $region19: #{pallas_forward.1} parent=11 // pred_region
        _
      $region20: #{pallas_forward.1} parent=11 // pred_fallthru
        _
    $region12: #{pallas_forward.1} parent=5 // pred_fallthru
      _
    %p124 = scmp.lt.s32.totalorder %s9, 2
    // Predicated region
    $region21: #{pallas_forward.1} parent=5 // pred_check
      %p125 = pneg %p124
    $region22: #{pallas_forward.1} parent=5 // pred_check_branch
      %127 = sbr.rel (%p125) target = $region24
    $region23: #{pallas_forward.1} parent=5 // pred_region
      // Predicated region
      $region25: #{pallas_forward.1} parent=23 // pred_check
        %p128 = pneg %p29
      $region26: #{pallas_forward.1} parent=23 // pred_check_branch
        %130 = sbr.rel (%p128) target = $region28
      $region27: #{pallas_forward.1} parent=23 // pred_region
        %p131 = scmp.lt.s32.totalorder %s9, 1
        %s132 = scalar_select %p131, %s9, 1
        %s133 = smul.addr %s132, 2
        %s134 = smul.addr %s133, 4
        %s135 = scalar_lea.vmem %s0, %s134
      $region28: #{pallas_forward.1} parent=23 // pred_fallthru
        _
    $region24: #{pallas_forward.1} parent=5 // pred_fallthru
      _
    %p136 = scmp.le.s32.totalorder 1, %s9
    %p137 = scmp.lt.s32.totalorder %s9, 3
    %p138 = pnand %p136, %p137
    %p139 = pneg %p138
    // Predicated region
    $region29: #{pallas_forward.1} parent=5 // pred_check
      _
    $region30: #{pallas_forward.1} parent=5 // pred_check_branch
      %141 = sbr.rel (%p138) target = $region32
    $region31: #{pallas_forward.1} parent=5 // pred_region
      %s142 = ssub.s32 %s9, 1
      %p143 = scmp.lt.s32.totalorder %s14, 1
      %s144 = scalar_select %p143, %s14, 1
      %s145 = smul.addr %s144, 2
      %s146 = smul.addr %s145, 4
      %s147 = scalar_lea.vmem %s0, %s146
      %p148 = pneg %p35
      %p149 = pneg %p32
      %p150 = pneg %p56
      %p151 = pneg %p53
      %p152 = pneg %p77
      %p153 = pneg %p74
      %p154 = pneg %p103
      %p155 = pneg %p100
      %p156 = scmp.lt.s32.totalorder %s14, 1
      %s157 = scalar_select %p156, %s14, 1
      %s158 = smul.addr %s157, 4
      %s159 = smul.addr %s158, 8
      %s160 = scalar_lea.vmem %s3, %s159
      %p161 = scmp.lt.s32.totalorder %s14, 1
      %s162 = scalar_select %p161, %s14, 1
      %s163 = smul.addr %s162, 2
      %s164 = smul.addr %s163, 4
      %s165 = scalar_lea.vmem %s0, %s164
      %p166 = scmp.lt.s32.totalorder %s14, 1
      %s167 = scalar_select %p166, %s14, 1
      %s168 = smul.addr %s167, 4
      %s169 = smul.addr %s168, 8
      %s170 = scalar_lea.vmem %s3, %s169
      %v172 = vld [vmem:[%s1] sm:$0xf]
      %v173 = vld [vmem:[%s1 + $0x4] sm:$0xf]
      %v174 = vld [vmem:[%s1 + $0x8] sm:$0xf]
      %v175 = vld [vmem:[%s1 + $0xc] sm:$0xf]
      %v176 = vld [vmem:[%s165] sm:$0xf]
      %v177 = vld [vmem:[%s165 + $0x4] sm:$0xf]
      %v178 = vld [vmem:[%s2] sm:$0xff]
      %v179 = vld [vmem:[%s2 + $0x8] sm:$0xff]
      %v180 = vld [vmem:[%s2 + $0x10] sm:$0xff]
      %v181 = vld [vmem:[%s2 + $0x18] sm:$0xff]
      %183 = vset.pattern.permute.xlu0 0
      %184 = vperm.xlu0 %183, %v178
      %v185 = vpop.permute.xlu0 %184
      %188 = vset.pattern.permute.xlu0 0
      %189 = vperm.xlu0 %188, %v179
      %v190 = vpop.permute.xlu0 %189
      %193 = vset.pattern.permute.xlu0 0
      %194 = vperm.xlu0 %193, %v180
      %v195 = vpop.permute.xlu0 %194
      %198 = vset.pattern.permute.xlu0 0
      %199 = vperm.xlu0 %198, %v181
      %v200 = vpop.permute.xlu0 %199
      %v206 = vunpack.c.l.b16 %v172
      %v207 = vunpack.c.l.b16 %v173
      %v208 = vunpack.c.l.b16 %v174
      %v209 = vunpack.c.l.b16 %v175
      %v210 = vpack.c.b16 %v207, %v206
      %v211 = vpack.c.b16 %v209, %v208
      %v214 = vunpack.c.l.b16 %v176
      %v215 = vunpack.c.l.b16 %v177
      %v216 = vpack.c.b16 %v215, %v214
      %vm218 = vcmask 130048
      %v220 = vsel %vm218, %v210, 0
      %v223 = vsel %vm218, %v211, 0
      %225 = vmatprep.subr.bf16.mxu0 0
      %226 = vmatpush1.bf16.msra.mxu0 %v216
      %227 = vmatprep.subr.bf16.mxu0 0
      %228 = vmatpush1.bf16.msra.mxu0 0
      %229 = vmatprep.subr.bf16.mxu0 0
      %230 = vmatpush1.bf16.msra.mxu0 0
      %231 = vmatprep.subr.bf16.mxu0 0
      %232 = vmatpush1.bf16.msra.mxu0 0
      %233 = vmatprep.subr.bf16.mxu0 0
      %234 = vmatpush1.bf16.msra.mxu0 0
      %235 = vmatprep.subr.bf16.mxu0 0
      %236 = vmatpush1.bf16.msra.mxu0 0
      %237 = vmatprep.subr.bf16.mxu0 0
      %238 = vmatpush1.bf16.msra.mxu0 0
      %239 = vmatprep.subr.bf16.mxu0 0
      %240 = vmatpush1.bf16.msra.mxu0 0
      %241 = vmatprep.subr.bf16.mxu0 0
      %242 = vmatpush1.bf16.msra.mxu0 0
      %243 = vmatprep.subr.bf16.mxu0 0
      %244 = vmatpush1.bf16.msra.mxu0 0
      %245 = vmatprep.subr.bf16.mxu0 0
      %246 = vmatpush1.bf16.msra.mxu0 0
      %247 = vmatprep.subr.bf16.mxu0 0
      %248 = vmatpush1.bf16.msra.mxu0 0
      %249 = vmatprep.subr.bf16.mxu0 0
      %250 = vmatpush1.bf16.msra.mxu0 0
      %251 = vmatprep.subr.bf16.mxu0 0
      %252 = vmatpush1.bf16.msra.mxu0 0
      %253 = vmatprep.subr.bf16.mxu0 0
      %254 = vmatpush1.bf16.msra.mxu0 0
      %255 = vmatprep.subr.bf16.mxu0 0
      %256 = vmatpush1.bf16.msra.mxu0 0
      %257 = vmatprep.mubr.bf16.mxu0 0
      %258 = vmatmul.mubr.bf16.gmra.mrb[0].mxu0 %v220
      %v259 = vpop.f32.mrb[0].mxu0
      %v260 = vadd.f32 %v185, %v259
      %v261 = vpop.f32.mrb[0].mxu0
      %v262 = vpop.f32.mrb[0].mxu0
      %v263 = vadd.f32 %v190, %v262
      %v264 = vpop.f32.mrb[0].mxu0
      %265 = vmatprep.mubr.bf16.mxu0 0
      %266 = vmatmul.mubr.bf16.gmra.mrb[0].mxu0 %v223
      %v267 = vpop.f32.mrb[0].mxu0
      %v268 = vadd.f32 %v195, %v267
      %v269 = vpop.f32.mrb[0].mxu0
      %v270 = vpop.f32.mrb[0].mxu0
      %v271 = vadd.f32 %v200, %v270
      %v272 = vpop.f32.mrb[0].mxu0
      %273 = vdwg.mxu0
      %v274 = vmax.f32 %v260, 0.0
      %v275 = vmax.f32 %v263, 0.0
      %v276 = vmax.f32 %v268, 0.0
      %v277 = vmax.f32 %v271, 0.0
      %v278 = vadd.f32 %v274, %v275
      %v279 = vadd.f32 %v278, %v276
      %v280 = vadd.f32 %v279, %v277
      %v281 = vrot.slane %v280, 4
      %v282 = vadd.f32 %v280, %v281
      %v283 = vrot.slane %v282, 2
      %v284 = vadd.f32 %v282, %v283
      %v285 = vrot.slane %v284, 1
      %v286 = vadd.f32 %v284, %v285
      %v287 = vrcp.pop 32.0
      %v288 = vmul.f32 %v286, %v287
      %v289 = vmul.f32 %v274, %v274
      %v290 = vmul.f32 %v275, %v275
      %v291 = vmul.f32 %v276, %v276
      %v292 = vmul.f32 %v277, %v277
      %v293 = vadd.f32 %v289, %v290
      %v294 = vadd.f32 %v293, %v291
      %v295 = vadd.f32 %v294, %v292
      %v296 = vrot.slane %v295, 4
      %v297 = vadd.f32 %v295, %v296
      %v298 = vrot.slane %v297, 2
      %v299 = vadd.f32 %v297, %v298
      %v300 = vrot.slane %v299, 1
      %v301 = vadd.f32 %v299, %v300
      %v302 = vmul.f32 %v301, %v287
      %v303 = vmul.f32 %v288, %v288
      %v304 = vsub.f32 %v302, %v303
      %v305 = vmax.f32 %v304, 0.0
      %v306 = vsub.f32 %v274, %v288
      %v307 = vsub.f32 %v275, %v288
      %v308 = vsub.f32 %v276, %v288
      %v309 = vsub.f32 %v277, %v288
      %v310 = vadd.f32 %v305, 1e-05
      %v311 = vrsqrt.pop %v310
      %v312 = vmul.f32 %v306, %v311
      %v313 = vmul.f32 %v307, %v311
      %v314 = vmul.f32 %v308, %v311
      %v315 = vmul.f32 %v309, %v311
      %316 = vset.pattern.permute.xlu0 1
      %317 = vperm.xlu0 %316, %v178
      %v318 = vpop.permute.xlu0 %317
      %320 = vset.pattern.permute.xlu0 1
      %321 = vperm.xlu0 %320, %v179
      %v322 = vpop.permute.xlu0 %321
      %324 = vset.pattern.permute.xlu0 1
      %325 = vperm.xlu0 %324, %v180
      %v326 = vpop.permute.xlu0 %325
      %328 = vset.pattern.permute.xlu0 1
      %329 = vperm.xlu0 %328, %v181
      %v330 = vpop.permute.xlu0 %329
      %v332 = vmul.f32 %v312, %v318
      %v333 = vmul.f32 %v313, %v322
      %v334 = vmul.f32 %v314, %v326
      %v335 = vmul.f32 %v315, %v330
      %336 = vset.pattern.permute.xlu0 2
      %337 = vperm.xlu0 %336, %v178
      %v338 = vpop.permute.xlu0 %337
      %340 = vset.pattern.permute.xlu0 2
      %341 = vperm.xlu0 %340, %v179
      %v342 = vpop.permute.xlu0 %341
      %344 = vset.pattern.permute.xlu0 2
      %345 = vperm.xlu0 %344, %v180
      %v346 = vpop.permute.xlu0 %345
      %348 = vset.pattern.permute.xlu0 2
      %349 = vperm.xlu0 %348, %v181
      %v350 = vpop.permute.xlu0 %349
      %v352 = vadd.f32 %v332, %v338
      %v353 = vadd.f32 %v333, %v342
      %v354 = vadd.f32 %v334, %v346
      %v355 = vadd.f32 %v335, %v350
      %v356 = vld [vmem:[%s1 + $0x10] sm:$0xf]
      %v357 = vld [vmem:[%s1 + $0x14] sm:$0xf]
      %v358 = vpack.c.bf16 %v353, %v352
      %v359 = vpack.c.bf16 %v355, %v354
      %v360 = vld [vmem:[%s2] sm:$0xff]
      %v361 = vld [vmem:[%s2 + $0x8] sm:$0xff]
      %363 = vset.pattern.permute.xlu0 3
      %364 = vperm.xlu0 %363, %v360
      %v365 = vpop.permute.xlu0 %364
      %368 = vset.pattern.permute.xlu0 3
      %369 = vperm.xlu0 %368, %v361
      %v370 = vpop.permute.xlu0 %369
      %v374 = vunpack.c.l.b16 %v356
      %v375 = vunpack.c.l.b16 %v357
      %v376 = vpack.c.b16 %v375, %v374
      %vm377 = vcmask 261120
      %v379 = vsel %vm377, %v376, 0
      %381 = vmatprep.subr.bf16.mxu0 0
      %382 = vmatpush1.bf16.msra.mxu0 %v358
      %383 = vmatprep.subr.bf16.mxu0 0
      %384 = vmatpush1.bf16.msra.mxu0 %v359
      %385 = vmatprep.subr.bf16.mxu0 0
      %386 = vmatpush1.bf16.msra.mxu0 0
      %387 = vmatprep.subr.bf16.mxu0 0
      %388 = vmatpush1.bf16.msra.mxu0 0
      %389 = vmatprep.subr.bf16.mxu0 0
      %390 = vmatpush1.bf16.msra.mxu0 0
      %391 = vmatprep.subr.bf16.mxu0 0
      %392 = vmatpush1.bf16.msra.mxu0 0
      %393 = vmatprep.subr.bf16.mxu0 0
      %394 = vmatpush1.bf16.msra.mxu0 0
      %395 = vmatprep.subr.bf16.mxu0 0
      %396 = vmatpush1.bf16.msra.mxu0 0
      %397 = vmatprep.subr.bf16.mxu0 0
      %398 = vmatpush1.bf16.msra.mxu0 0
      %399 = vmatprep.subr.bf16.mxu0 0
      %400 = vmatpush1.bf16.msra.mxu0 0
      %401 = vmatprep.subr.bf16.mxu0 0
      %402 = vmatpush1.bf16.msra.mxu0 0
      %403 = vmatprep.subr.bf16.mxu0 0
      %404 = vmatpush1.bf16.msra.mxu0 0
      %405 = vmatprep.subr.bf16.mxu0 0
      %406 = vmatpush1.bf16.msra.mxu0 0
      %407 = vmatprep.subr.bf16.mxu0 0
      %408 = vmatpush1.bf16.msra.mxu0 0
      %409 = vmatprep.subr.bf16.mxu0 0
      %410 = vmatpush1.bf16.msra.mxu0 0
      %411 = vmatprep.subr.bf16.mxu0 0
      %412 = vmatpush1.bf16.msra.mxu0 0
      %413 = vmatprep.mubr.bf16.mxu0 0
      %414 = vmatmul.mubr.bf16.gmra.mrb[0].mxu0 %v379
      %v415 = vpop.f32.mrb[0].mxu0
      %v416 = vadd.f32 %v365, %v415
      %v417 = vpop.f32.mrb[0].mxu0
      %v418 = vpop.f32.mrb[0].mxu0
      %v419 = vadd.f32 %v370, %v418
      %v420 = vpop.f32.mrb[0].mxu0
      %421 = vdwg.mxu0
      %v422 = vlaneseq
      %v423 = vand.u32 %v422, 127
      %v424 = vld [vmem:[%s1 + $0x18] sm:$0xf]
      %v425 = vld [vmem:[%s1 + $0x1c] sm:$0xf]
      %v426 = vld [vmem:[%s1 + $0x20] sm:$0xf]
      %v427 = vld [vmem:[%s1 + $0x24] sm:$0xf]
      %v428 = vpack.c.bf16 %v419, %v416
      %429 = vset.pattern.permute.xlu0 4
      %430 = vperm.xlu0 %429, %v178
      %v431 = vpop.permute.xlu0 %430
      %433 = vset.pattern.permute.xlu0 4
      %434 = vperm.xlu0 %433, %v179
      %v435 = vpop.permute.xlu0 %434
      %437 = vset.pattern.permute.xlu0 4
      %438 = vperm.xlu0 %437, %v180
      %v439 = vpop.permute.xlu0 %438
      %441 = vset.pattern.permute.xlu0 4
      %442 = vperm.xlu0 %441, %v181
      %v443 = vpop.permute.xlu0 %442
      %v449 = vunpack.c.l.b16 %v424
      %v450 = vunpack.c.l.b16 %v425
      %v451 = vunpack.c.l.b16 %v426
      %v452 = vunpack.c.l.b16 %v427
      %v453 = vpack.c.b16 %v450, %v449
      %v454 = vpack.c.b16 %v452, %v451
      %v456 = vsel %vm218, %v453, 0
      %v459 = vsel %vm218, %v454, 0
      %461 = vmatprep.subr.bf16.mxu0 0
      %462 = vmatpush1.bf16.msra.mxu0 %v428
      %463 = vmatprep.subr.bf16.mxu0 0
      %464 = vmatpush1.bf16.msra.mxu0 0
      %465 = vmatprep.subr.bf16.mxu0 0
      %466 = vmatpush1.bf16.msra.mxu0 0
      %467 = vmatprep.subr.bf16.mxu0 0
      %468 = vmatpush1.bf16.msra.mxu0 0
      %469 = vmatprep.subr.bf16.mxu0 0
      %470 = vmatpush1.bf16.msra.mxu0 0
      %471 = vmatprep.subr.bf16.mxu0 0
      %472 = vmatpush1.bf16.msra.mxu0 0
      %473 = vmatprep.subr.bf16.mxu0 0
      %474 = vmatpush1.bf16.msra.mxu0 0
      %475 = vmatprep.subr.bf16.mxu0 0
      %476 = vmatpush1.bf16.msra.mxu0 0
      %477 = vmatprep.subr.bf16.mxu0 0
      %478 = vmatpush1.bf16.msra.mxu0 0
      %479 = vmatprep.subr.bf16.mxu0 0
      %480 = vmatpush1.bf16.msra.mxu0 0
      %481 = vmatprep.subr.bf16.mxu0 0
      %482 = vmatpush1.bf16.msra.mxu0 0
      %483 = vmatprep.subr.bf16.mxu0 0
      %484 = vmatpush1.bf16.msra.mxu0 0
      %485 = vmatprep.subr.bf16.mxu0 0
      %486 = vmatpush1.bf16.msra.mxu0 0
      %487 = vmatprep.subr.bf16.mxu0 0
      %488 = vmatpush1.bf16.msra.mxu0 0
      %489 = vmatprep.subr.bf16.mxu0 0
      %490 = vmatpush1.bf16.msra.mxu0 0
      %491 = vmatprep.subr.bf16.mxu0 0
      %492 = vmatpush1.bf16.msra.mxu0 0
      %493 = vmatprep.mubr.bf16.mxu0 0
      %494 = vmatmul.mubr.bf16.gmra.mrb[0].mxu0 %v456
      %v495 = vpop.f32.mrb[0].mxu0
      %v496 = vadd.f32 %v431, %v495
      %v497 = vpop.f32.mrb[0].mxu0
      %v498 = vpop.f32.mrb[0].mxu0
      %v499 = vadd.f32 %v435, %v498
      %v500 = vpop.f32.mrb[0].mxu0
      %501 = vmatprep.mubr.bf16.mxu0 0
      %502 = vmatmul.mubr.bf16.gmra.mrb[0].mxu0 %v459
      %v503 = vpop.f32.mrb[0].mxu0
      %v504 = vadd.f32 %v439, %v503
      %v505 = vpop.f32.mrb[0].mxu0
      %v506 = vpop.f32.mrb[0].mxu0
      %v507 = vadd.f32 %v443, %v506
      %v508 = vpop.f32.mrb[0].mxu0
      %509 = vdwg.mxu0
      %vm510 = vcmp.ge.f32.partialorder %v496, 0.0
      %vm511 = vcmp.ge.f32.partialorder %v499, 0.0
      %vm512 = vcmp.ge.f32.partialorder %v504, 0.0
      %vm513 = vcmp.ge.f32.partialorder %v507, 0.0
      %v514 = vmul.f32 %v496, 0.25
      %v515 = vmul.f32 %v499, 0.25
      %v516 = vmul.f32 %v504, 0.25
      %v517 = vmul.f32 %v507, 0.25
      %v518 = vsel %vm510, %v496, %v514
      %v519 = vsel %vm511, %v499, %v515
      %v520 = vsel %vm512, %v504, %v516
      %v521 = vsel %vm513, %v507, %v517
      %v522 = vmul.f32 %v518, %v518
      %v523 = vmul.f32 %v519, %v519
      %v524 = vmul.f32 %v520, %v520
      %v525 = vmul.f32 %v521, %v521
      %526 = vadd.xlane.f32.xlu0 %v518
      %v527 = vpop.xlane.xlu0 %526
      %528 = vadd.xlane.f32.xlu0 %v519
      %v529 = vpop.xlane.xlu0 %528
      %530 = vadd.xlane.f32.xlu0 %v520
      %v531 = vpop.xlane.xlu0 %530
      %532 = vadd.xlane.f32.xlu0 %v521
      %v533 = vpop.xlane.xlu0 %532
      %534 = vadd.xlane.f32.xlu0 %v522
      %v535 = vpop.xlane.xlu0 %534
      %536 = vadd.xlane.f32.xlu0 %v523
      %v537 = vpop.xlane.xlu0 %536
      %538 = vadd.xlane.f32.xlu0 %v524
      %v539 = vpop.xlane.xlu0 %538
      %540 = vadd.xlane.f32.xlu0 %v525
      %v541 = vpop.xlane.xlu0 %540
      %vm542 = vcmask 7168
      %v543 = vsel %vm542, %v527, 0.0
      %v544 = vsel %vm542, %v529, 0.0
      %v545 = vadd.f32 %v543, %v544
      %v546 = vsel %vm542, %v531, 0.0
      %v547 = vadd.f32 %v545, %v546
      %v548 = vsel %vm542, %v533, 0.0
      %v549 = vadd.f32 %v547, %v548
      %550 = vadd.xlane.f32.xlu0 %v549
      %v551 = vpop.xlane.xlu0 %550
      %v552 = vrot.slane %v551, 4
      %v553 = vadd.f32 %v551, %v552
      %v554 = vrot.slane %v553, 2
      %v555 = vadd.f32 %v553, %v554
      %v556 = vrot.slane %v555, 1
      %v557 = vadd.f32 %v555, %v556
      %s558 = vtos %v557
      %v559 = vstv %s558
      %v560 = vsel %vm542, %v535, 0.0
      %v561 = vsel %vm542, %v537, 0.0
      %v562 = vadd.f32 %v560, %v561
      %v563 = vsel %vm542, %v539, 0.0
      %v564 = vadd.f32 %v562, %v563
      %v565 = vsel %vm542, %v541, 0.0
      %v566 = vadd.f32 %v564, %v565
      %567 = vadd.xlane.f32.xlu0 %v566
      %v568 = vpop.xlane.xlu0 %567
      %v569 = vrot.slane %v568, 4
      %v570 = vadd.f32 %v568, %v569
      %v571 = vrot.slane %v570, 2
      %v572 = vadd.f32 %v570, %v571
      %v573 = vrot.slane %v572, 1
      %v574 = vadd.f32 %v572, %v573
      %s575 = vtos %v574
      %v576 = vstv %s575
      %v577 = vmul.f32 %v559, 0.00024414063
      %v578 = vmul.f32 %v576, 0.00024414063
      %v579 = vmul.f32 %v577, %v577
      %v580 = vsub.f32 %v578, %v579
      %v581 = vmax.f32 %v580, 0.0
      %v582 = vsub.f32 %v518, %v577
      %v583 = vsub.f32 %v519, %v577
      %v584 = vsub.f32 %v520, %v577
      %v585 = vsub.f32 %v521, %v577
      %586 = vset.pattern.permute.xlu0 5
      %587 = vperm.xlu0 %586, %v178
      %v588 = vpop.permute.xlu0 %587
      %590 = vset.pattern.permute.xlu0 5
      %591 = vperm.xlu0 %590, %v179
      %v592 = vpop.permute.xlu0 %591
      %594 = vset.pattern.permute.xlu0 5
      %595 = vperm.xlu0 %594, %v180
      %v596 = vpop.permute.xlu0 %595
      %598 = vset.pattern.permute.xlu0 5
      %599 = vperm.xlu0 %598, %v181
      %v600 = vpop.permute.xlu0 %599
      %v602 = vmul.f32 %v588, %v582
      %v603 = vmul.f32 %v592, %v583
      %v604 = vmul.f32 %v596, %v584
      %v605 = vmul.f32 %v600, %v585
      %v606 = vadd.f32 %v581, 1e-05
      %v607 = vrsqrt.pop %v606
      %v608 = vmul.f32 %v602, %v607
      %v609 = vmul.f32 %v603, %v607
      %v610 = vmul.f32 %v604, %v607
      %v611 = vmul.f32 %v605, %v607
      %612 = vset.pattern.permute.xlu0 6
      %613 = vperm.xlu0 %612, %v178
      %v614 = vpop.permute.xlu0 %613
      %616 = vset.pattern.permute.xlu0 6
      %617 = vperm.xlu0 %616, %v179
      %v618 = vpop.permute.xlu0 %617
      %620 = vset.pattern.permute.xlu0 6
      %621 = vperm.xlu0 %620, %v180
      %v622 = vpop.permute.xlu0 %621
      %624 = vset.pattern.permute.xlu0 6
      %625 = vperm.xlu0 %624, %v181
      %v626 = vpop.permute.xlu0 %625
      %v628 = vadd.f32 %v608, %v614
      %v629 = vadd.f32 %v609, %v618
      %v630 = vadd.f32 %v610, %v622
      %v631 = vadd.f32 %v611, %v626
      %vm632 = vcmp.ge.s32.totalorder %v423, 1
      %633 = vrot.lane.b32.xlu0 %v628, 1
      %v634 = vpop.permute.xlu0 %633
      %635 = vrot.lane.b32.xlu0 %v629, 1
      %v636 = vpop.permute.xlu0 %635
      %637 = vrot.lane.b32.xlu0 %v630, 1
      %v638 = vpop.permute.xlu0 %637
      %639 = vrot.lane.b32.xlu0 %v631, 1
      %v640 = vpop.permute.xlu0 %639
      %v641 = vsel %vm632, %v634, 0.0
      %v642 = vsel %vm632, %v636, 0.0
      %v643 = vsel %vm632, %v638, 0.0
      %v644 = vsel %vm632, %v640, 0.0
      %vm645 = vcmp.lt.s32.totalorder %v423, 127
      %646 = vrot.lane.b32.xlu0 %v628, 127
      %v647 = vpop.permute.xlu0 %646
      %648 = vrot.lane.b32.xlu0 %v629, 127
      %v649 = vpop.permute.xlu0 %648
      %650 = vrot.lane.b32.xlu0 %v630, 127
      %v651 = vpop.permute.xlu0 %650
      %652 = vrot.lane.b32.xlu0 %v631, 127
      %v653 = vpop.permute.xlu0 %652
      %v654 = vsel %vm645, %v647, 0.0
      %v655 = vsel %vm645, %v649, 0.0
      %v656 = vsel %vm645, %v651, 0.0
      %v657 = vsel %vm645, %v653, 0.0
      %658 = vset.pattern.permute.xlu0 7
      %659 = vperm.xlu0 %658, %v178
      %v660 = vpop.permute.xlu0 %659
      %662 = vset.pattern.permute.xlu0 7
      %663 = vperm.xlu0 %662, %v179
      %v664 = vpop.permute.xlu0 %663
      %666 = vset.pattern.permute.xlu0 7
      %667 = vperm.xlu0 %666, %v180
      %v668 = vpop.permute.xlu0 %667
      %670 = vset.pattern.permute.xlu0 7
      %671 = vperm.xlu0 %670, %v181
      %v672 = vpop.permute.xlu0 %671
      %v674 = vmul.f32 %v641, %v660
      %v675 = vmul.f32 %v642, %v664
      %v676 = vmul.f32 %v643, %v668
      %v677 = vmul.f32 %v644, %v672
      %678 = vset.pattern.permute.xlu0 8
      %679 = vperm.xlu0 %678, %v178
      %v680 = vpop.permute.xlu0 %679
      %682 = vset.pattern.permute.xlu0 8
      %683 = vperm.xlu0 %682, %v179
      %v684 = vpop.permute.xlu0 %683
      %686 = vset.pattern.permute.xlu0 8
      %687 = vperm.xlu0 %686, %v180
      %v688 = vpop.permute.xlu0 %687
      %690 = vset.pattern.permute.xlu0 8
      %691 = vperm.xlu0 %690, %v181
      %v692 = vpop.permute.xlu0 %691
      %v694 = vmul.f32 %v628, %v680
      %v695 = vmul.f32 %v629, %v684
      %v696 = vmul.f32 %v630, %v688
      %v697 = vmul.f32 %v631, %v692
      %v698 = vadd.f32 %v674, %v694
      %v699 = vadd.f32 %v675, %v695
      %v700 = vadd.f32 %v676, %v696
      %v701 = vadd.f32 %v677, %v697
      %702 = vset.pattern.permute.xlu0 9
      %703 = vperm.xlu0 %702, %v178
      %v704 = vpop.permute.xlu0 %703
      %706 = vset.pattern.permute.xlu0 9
      %707 = vperm.xlu0 %706, %v179
      %v708 = vpop.permute.xlu0 %707
      %710 = vset.pattern.permute.xlu0 9
      %711 = vperm.xlu0 %710, %v180
      %v712 = vpop.permute.xlu0 %711
      %714 = vset.pattern.permute.xlu0 9
      %715 = vperm.xlu0 %714, %v181
      %v716 = vpop.permute.xlu0 %715
      %v718 = vmul.f32 %v654, %v704
      %v719 = vmul.f32 %v655, %v708
      %v720 = vmul.f32 %v656, %v712
      %v721 = vmul.f32 %v657, %v716
      %v722 = vadd.f32 %v698, %v718
      %v723 = vadd.f32 %v699, %v719
      %v724 = vadd.f32 %v700, %v720
      %v725 = vadd.f32 %v701, %v721
      %726 = vset.pattern.permute.xlu0 10
      %727 = vperm.xlu0 %726, %v178
      %v728 = vpop.permute.xlu0 %727
      %730 = vset.pattern.permute.xlu0 10
      %731 = vperm.xlu0 %730, %v179
      %v732 = vpop.permute.xlu0 %731
      %734 = vset.pattern.permute.xlu0 10
      %735 = vperm.xlu0 %734, %v180
      %v736 = vpop.permute.xlu0 %735
      %738 = vset.pattern.permute.xlu0 10
      %739 = vperm.xlu0 %738, %v181
      %v740 = vpop.permute.xlu0 %739
      %v742 = vadd.f32 %v722, %v728
      %v743 = vadd.f32 %v723, %v732
      %v744 = vadd.f32 %v724, %v736
      %v745 = vadd.f32 %v725, %v740
      %vm746 = vcmp.ge.f32.partialorder %v742, 0.0
      %vm747 = vcmp.ge.f32.partialorder %v743, 0.0
      %vm748 = vcmp.ge.f32.partialorder %v744, 0.0
      %vm749 = vcmp.ge.f32.partialorder %v745, 0.0
      %v750 = vmul.f32 %v742, 0.25
      %v751 = vmul.f32 %v743, 0.25
      %v752 = vmul.f32 %v744, 0.25
      %v753 = vmul.f32 %v745, 0.25
      %v754 = vsel %vm746, %v742, %v750
      %v755 = vsel %vm747, %v743, %v751
      %v756 = vsel %vm748, %v744, %v752
      %v757 = vsel %vm749, %v745, %v753
      %v758 = vmul.f32 %v754, %v754
      %v759 = vmul.f32 %v755, %v755
      %v760 = vmul.f32 %v756, %v756
      %v761 = vmul.f32 %v757, %v757
      %762 = vadd.xlane.f32.xlu0 %v754
      %v763 = vpop.xlane.xlu0 %762
      %764 = vadd.xlane.f32.xlu0 %v755
      %v765 = vpop.xlane.xlu0 %764
      %766 = vadd.xlane.f32.xlu0 %v756
      %v767 = vpop.xlane.xlu0 %766
      %768 = vadd.xlane.f32.xlu0 %v757
      %v769 = vpop.xlane.xlu0 %768
      %770 = vadd.xlane.f32.xlu0 %v758
      %v771 = vpop.xlane.xlu0 %770
      %772 = vadd.xlane.f32.xlu0 %v759
      %v773 = vpop.xlane.xlu0 %772
      %774 = vadd.xlane.f32.xlu0 %v760
      %v775 = vpop.xlane.xlu0 %774
      %776 = vadd.xlane.f32.xlu0 %v761
      %v777 = vpop.xlane.xlu0 %776
      %v778 = vsel %vm542, %v763, 0.0
      %v779 = vsel %vm542, %v765, 0.0
      %v780 = vadd.f32 %v778, %v779
      %v781 = vsel %vm542, %v767, 0.0
      %v782 = vadd.f32 %v780, %v781
      %v783 = vsel %vm542, %v769, 0.0
      %v784 = vadd.f32 %v782, %v783
      %785 = vadd.xlane.f32.xlu0 %v784
      %v786 = vpop.xlane.xlu0 %785
      %v787 = vrot.slane %v786, 4
      %v788 = vadd.f32 %v786, %v787
      %v789 = vrot.slane %v788, 2
      %v790 = vadd.f32 %v788, %v789
      %v791 = vrot.slane %v790, 1
      %v792 = vadd.f32 %v790, %v791
      %s793 = vtos %v792
      %v794 = vstv %s793
      %v795 = vsel %vm542, %v771, 0.0
      %v796 = vsel %vm542, %v773, 0.0
      %v797 = vadd.f32 %v795, %v796
      %v798 = vsel %vm542, %v775, 0.0
      %v799 = vadd.f32 %v797, %v798
      %v800 = vsel %vm542, %v777, 0.0
      %v801 = vadd.f32 %v799, %v800
      %802 = vadd.xlane.f32.xlu0 %v801
      %v803 = vpop.xlane.xlu0 %802
      %v804 = vrot.slane %v803, 4
      %v805 = vadd.f32 %v803, %v804
      %v806 = vrot.slane %v805, 2
      %v807 = vadd.f32 %v805, %v806
      %v808 = vrot.slane %v807, 1
      %v809 = vadd.f32 %v807, %v808
      %s810 = vtos %v809
      %v811 = vstv %s810
      %v812 = vmul.f32 %v794, 0.00024414063
      %v813 = vmul.f32 %v811, 0.00024414063
      %v814 = vmul.f32 %v812, %v812
      %v815 = vsub.f32 %v813, %v814
      %v816 = vmax.f32 %v815, 0.0
      %v817 = vsub.f32 %v754, %v812
      %v818 = vsub.f32 %v755, %v812
      %v819 = vsub.f32 %v756, %v812
      %v820 = vsub.f32 %v757, %v812
      %821 = vset.pattern.permute.xlu0 11
      %822 = vperm.xlu0 %821, %v178
      %v823 = vpop.permute.xlu0 %822
      %825 = vset.pattern.permute.xlu0 11
      %826 = vperm.xlu0 %825, %v179
      %v827 = vpop.permute.xlu0 %826
      %829 = vset.pattern.permute.xlu0 11
      %830 = vperm.xlu0 %829, %v180
      %v831 = vpop.permute.xlu0 %830
      %833 = vset.pattern.permute.xlu0 11
      %834 = vperm.xlu0 %833, %v181
      %v835 = vpop.permute.xlu0 %834
      %v837 = vmul.f32 %v823, %v817
      %v838 = vmul.f32 %v827, %v818
      %v839 = vmul.f32 %v831, %v819
      %v840 = vmul.f32 %v835, %v820
      %v841 = vadd.f32 %v816, 1e-05
      %v842 = vrsqrt.pop %v841
      %v843 = vmul.f32 %v837, %v842
      %v844 = vmul.f32 %v838, %v842
      %v845 = vmul.f32 %v839, %v842
      %v846 = vmul.f32 %v840, %v842
      %847 = vset.pattern.permute.xlu0 12
      %848 = vperm.xlu0 %847, %v178
      %v849 = vpop.permute.xlu0 %848
      %851 = vset.pattern.permute.xlu0 12
      %852 = vperm.xlu0 %851, %v179
      %v853 = vpop.permute.xlu0 %852
      %855 = vset.pattern.permute.xlu0 12
      %856 = vperm.xlu0 %855, %v180
      %v857 = vpop.permute.xlu0 %856
      %859 = vset.pattern.permute.xlu0 12
      %860 = vperm.xlu0 %859, %v181
      %v861 = vpop.permute.xlu0 %860
      %v863 = vadd.f32 %v843, %v849
      %v864 = vadd.f32 %v844, %v853
      %v865 = vadd.f32 %v845, %v857
      %v866 = vadd.f32 %v846, %v861
      %v867 = vpack.c.bf16 %v864, %v863
      %v868 = vpack.c.bf16 %v866, %v865
      %v869 = vld [vmem:[%s1 + $0x60] sm:$0xf]
      %v870 = vld [vmem:[%s1 + $0x64] sm:$0xf]
      %871 = vset.pattern.permute.xlu0 14
      %872 = vperm.xlu0 %871, %v360
      %v873 = vpop.permute.xlu0 %872
      %875 = vset.pattern.permute.xlu0 14
      %876 = vperm.xlu0 %875, %v361
      %v877 = vpop.permute.xlu0 %876
      %v881 = vunpack.c.l.b16 %v869
      %v882 = vunpack.c.l.b16 %v870
      %v883 = vpack.c.b16 %v882, %v881
      %v885 = vsel %vm377, %v883, 0
      %887 = vmatprep.subr.bf16.mxu0 0
      %888 = vmatpush1.bf16.msra.mxu0 %v867
      %889 = vmatprep.subr.bf16.mxu0 0
      %890 = vmatpush1.bf16.msra.mxu0 %v868
      %891 = vmatprep.subr.bf16.mxu0 0
      %892 = vmatpush1.bf16.msra.mxu0 0
      %893 = vmatprep.subr.bf16.mxu0 0
      %894 = vmatpush1.bf16.msra.mxu0 0
      %895 = vmatprep.subr.bf16.mxu0 0
      %896 = vmatpush1.bf16.msra.mxu0 0
      %897 = vmatprep.subr.bf16.mxu0 0
      %898 = vmatpush1.bf16.msra.mxu0 0
      %899 = vmatprep.subr.bf16.mxu0 0
      %900 = vmatpush1.bf16.msra.mxu0 0
      %901 = vmatprep.subr.bf16.mxu0 0
      %902 = vmatpush1.bf16.msra.mxu0 0
      %903 = vmatprep.subr.bf16.mxu0 0
      %904 = vmatpush1.bf16.msra.mxu0 0
      %905 = vmatprep.subr.bf16.mxu0 0
      %906 = vmatpush1.bf16.msra.mxu0 0
      %907 = vmatprep.subr.bf16.mxu0 0
      %908 = vmatpush1.bf16.msra.mxu0 0
      %909 = vmatprep.subr.bf16.mxu0 0
      %910 = vmatpush1.bf16.msra.mxu0 0
      %911 = vmatprep.subr.bf16.mxu0 0
      %912 = vmatpush1.bf16.msra.mxu0 0
      %913 = vmatprep.subr.bf16.mxu0 0
      %914 = vmatpush1.bf16.msra.mxu0 0
      %915 = vmatprep.subr.bf16.mxu0 0
      %916 = vmatpush1.bf16.msra.mxu0 0
      %917 = vmatprep.subr.bf16.mxu0 0
      %918 = vmatpush1.bf16.msra.mxu0 0
      %919 = vmatprep.mubr.bf16.mxu0 0
      %920 = vmatmul.mubr.bf16.gmra.mrb[0].mxu0 %v885
      %v921 = vpop.f32.mrb[0].mxu0
      %v922 = vadd.f32 %v873, %v921
      %v923 = vpop.f32.mrb[0].mxu0
      %v924 = vpop.f32.mrb[0].mxu0
      %v925 = vadd.f32 %v877, %v924
      %v926 = vpop.f32.mrb[0].mxu0
      %927 = vdwg.mxu0
      %v928 = vld [vmem:[%s1 + $0x48] sm:$0xf]
      %v929 = vld [vmem:[%s1 + $0x4c] sm:$0xf]
      %v932 = vunpack.c.l.b16 %v928
      %v933 = vunpack.c.l.b16 %v929
      %v934 = vpack.c.b16 %v933, %v932
      %v936 = vsel %vm377, %v934, 0
      %938 = vmatprep.subr.bf16.mxu0 0
      %939 = vmatpush1.bf16.msra.mxu0 %v867
      %940 = vmatprep.subr.bf16.mxu0 0
      %941 = vmatpush1.bf16.msra.mxu0 %v868
      %942 = vmatprep.subr.bf16.mxu0 0
      %943 = vmatpush1.bf16.msra.mxu0 0
      %944 = vmatprep.subr.bf16.mxu0 0
      %945 = vmatpush1.bf16.msra.mxu0 0
      %946 = vmatprep.subr.bf16.mxu0 0
      %947 = vmatpush1.bf16.msra.mxu0 0
      %948 = vmatprep.subr.bf16.mxu0 0
      %949 = vmatpush1.bf16.msra.mxu0 0
      %950 = vmatprep.subr.bf16.mxu0 0
      %951 = vmatpush1.bf16.msra.mxu0 0
      %952 = vmatprep.subr.bf16.mxu0 0
      %953 = vmatpush1.bf16.msra.mxu0 0
      %954 = vmatprep.subr.bf16.mxu0 0
      %955 = vmatpush1.bf16.msra.mxu0 0
      %956 = vmatprep.subr.bf16.mxu0 0
      %957 = vmatpush1.bf16.msra.mxu0 0
      %958 = vmatprep.subr.bf16.mxu0 0
      %959 = vmatpush1.bf16.msra.mxu0 0
      %960 = vmatprep.subr.bf16.mxu0 0
      %961 = vmatpush1.bf16.msra.mxu0 0
      %962 = vmatprep.subr.bf16.mxu0 0
      %963 = vmatpush1.bf16.msra.mxu0 0
      %964 = vmatprep.subr.bf16.mxu0 0
      %965 = vmatpush1.bf16.msra.mxu0 0
      %966 = vmatprep.subr.bf16.mxu0 0
      %967 = vmatpush1.bf16.msra.mxu0 0
      %968 = vmatprep.subr.bf16.mxu0 0
      %969 = vmatpush1.bf16.msra.mxu0 0
      %970 = vmatprep.mubr.bf16.mxu0 0
      %971 = vmatmul.mubr.bf16.gmra.mrb[0].mxu0 %v936
      %v972 = vpop.f32.mrb[0].mxu0
      %v973 = vadd.f32 0.0, %v972
      %v974 = vpop.f32.mrb[0].mxu0
      %v975 = vpop.f32.mrb[0].mxu0
      %v976 = vadd.f32 0.0, %v975
      %v977 = vpop.f32.mrb[0].mxu0
      %978 = vdwg.mxu0
      %v979 = vadd.f32 %v416, %v973
      %v980 = vadd.f32 %v419, %v976
      %981 = vset.pattern.permute.xlu0 13
      %982 = vperm.xlu0 %981, %v360
      %v983 = vpop.permute.xlu0 %982
      %985 = vset.pattern.permute.xlu0 13
      %986 = vperm.xlu0 %985, %v361
      %v987 = vpop.permute.xlu0 %986
      %v989 = vadd.f32 %v979, %v983
      %v990 = vadd.f32 %v980, %v987
      %v991 = vld [vmem:[%s1 + $0x28] sm:$0xf]
      %v992 = vld [vmem:[%s1 + $0x2c] sm:$0xf]
      %v993 = vld [vmem:[%s1 + $0x30] sm:$0xf]
      %v994 = vld [vmem:[%s1 + $0x34] sm:$0xf]
      %v995 = vpack.c.bf16 %v990, %v989
      %996 = vset.pattern.permute.xlu0 15
      %997 = vperm.xlu0 %996, %v178
      %v998 = vpop.permute.xlu0 %997
      %1000 = vset.pattern.permute.xlu0 15
      %1001 = vperm.xlu0 %1000, %v179
      %v1002 = vpop.permute.xlu0 %1001
      %1004 = vset.pattern.permute.xlu0 15
      %1005 = vperm.xlu0 %1004, %v180
      %v1006 = vpop.permute.xlu0 %1005
      %1008 = vset.pattern.permute.xlu0 15
      %1009 = vperm.xlu0 %1008, %v181
      %v1010 = vpop.permute.xlu0 %1009
      %v1016 = vunpack.c.l.b16 %v991
      %v1017 = vunpack.c.l.b16 %v992
      %v1018 = vunpack.c.l.b16 %v993
      %v1019 = vunpack.c.l.b16 %v994
      %v1020 = vpack.c.b16 %v1017, %v1016
      %v1021 = vpack.c.b16 %v1019, %v1018
      %v1023 = vsel %vm218, %v1020, 0
      %v1026 = vsel %vm218, %v1021, 0
      %1028 = vmatprep.subr.bf16.mxu0 0
      %1029 = vmatpush1.bf16.msra.mxu0 %v995
      %1030 = vmatprep.subr.bf16.mxu0 0
      %1031 = vmatpush1.bf16.msra.mxu0 0
      %1032 = vmatprep.subr.bf16.mxu0 0
      %1033 = vmatpush1.bf16.msra.mxu0 0
      %1034 = vmatprep.subr.bf16.mxu0 0
      %1035 = vmatpush1.bf16.msra.mxu0 0
      %1036 = vmatprep.subr.bf16.mxu0 0
      %1037 = vmatpush1.bf16.msra.mxu0 0
      %1038 = vmatprep.subr.bf16.mxu0 0
      %1039 = vmatpush1.bf16.msra.mxu0 0
      %1040 = vmatprep.subr.bf16.mxu0 0
      %1041 = vmatpush1.bf16.msra.mxu0 0
      %1042 = vmatprep.subr.bf16.mxu0 0
      %1043 = vmatpush1.bf16.msra.mxu0 0
      %1044 = vmatprep.subr.bf16.mxu0 0
      %1045 = vmatpush1.bf16.msra.mxu0 0
      %1046 = vmatprep.subr.bf16.mxu0 0
      %1047 = vmatpush1.bf16.msra.mxu0 0
      %1048 = vmatprep.subr.bf16.mxu0 0
      %1049 = vmatpush1.bf16.msra.mxu0 0
      %1050 = vmatprep.subr.bf16.mxu0 0
      %1051 = vmatpush1.bf16.msra.mxu0 0
      %1052 = vmatprep.subr.bf16.mxu0 0
      %1053 = vmatpush1.bf16.msra.mxu0 0
      %1054 = vmatprep.subr.bf16.mxu0 0
      %1055 = vmatpush1.bf16.msra.mxu0 0
      %1056 = vmatprep.subr.bf16.mxu0 0
      %1057 = vmatpush1.bf16.msra.mxu0 0
      %1058 = vmatprep.subr.bf16.mxu0 0
      %1059 = vmatpush1.bf16.msra.mxu0 0
      %1060 = vmatprep.mubr.bf16.mxu0 0
      %1061 = vmatmul.mubr.bf16.gmra.mrb[0].mxu0 %v1023
      %v1062 = vpop.f32.mrb[0].mxu0
      %v1063 = vadd.f32 %v998, %v1062
      %v1064 = vpop.f32.mrb[0].mxu0
      %v1065 = vpop.f32.mrb[0].mxu0
      %v1066 = vadd.f32 %v1002, %v1065
      %v1067 = vpop.f32.mrb[0].mxu0
      %1068 = vmatprep.mubr.bf16.mxu0 0
      %1069 = vmatmul.mubr.bf16.gmra.mrb[0].mxu0 %v1026
      %v1070 = vpop.f32.mrb[0].mxu0
      %v1071 = vadd.f32 %v1006, %v1070
      %v1072 = vpop.f32.mrb[0].mxu0
      %v1073 = vpop.f32.mrb[0].mxu0
      %v1074 = vadd.f32 %v1010, %v1073
      %v1075 = vpop.f32.mrb[0].mxu0
      %1076 = vdwg.mxu0
      %vm1077 = vcmp.ge.f32.partialorder %v1063, 0.0
      %vm1078 = vcmp.ge.f32.partialorder %v1066, 0.0
      %vm1079 = vcmp.ge.f32.partialorder %v1071, 0.0
      %vm1080 = vcmp.ge.f32.partialorder %v1074, 0.0
      %v1081 = vmul.f32 %v1063, 0.25
      %v1082 = vmul.f32 %v1066, 0.25
      %v1083 = vmul.f32 %v1071, 0.25
      %v1084 = vmul.f32 %v1074, 0.25
      %v1085 = vsel %vm1077, %v1063, %v1081
      %v1086 = vsel %vm1078, %v1066, %v1082
      %v1087 = vsel %vm1079, %v1071, %v1083
      %v1088 = vsel %vm1080, %v1074, %v1084
      %v1089 = vmul.f32 %v1085, %v1085
      %v1090 = vmul.f32 %v1086, %v1086
      %v1091 = vmul.f32 %v1087, %v1087
      %v1092 = vmul.f32 %v1088, %v1088
      %1093 = vadd.xlane.f32.xlu0 %v1085
      %v1094 = vpop.xlane.xlu0 %1093
      %1095 = vadd.xlane.f32.xlu0 %v1086
      %v1096 = vpop.xlane.xlu0 %1095
      %1097 = vadd.xlane.f32.xlu0 %v1087
      %v1098 = vpop.xlane.xlu0 %1097
      %1099 = vadd.xlane.f32.xlu0 %v1088
      %v1100 = vpop.xlane.xlu0 %1099
      %1101 = vadd.xlane.f32.xlu0 %v1089
      %v1102 = vpop.xlane.xlu0 %1101
      %1103 = vadd.xlane.f32.xlu0 %v1090
      %v1104 = vpop.xlane.xlu0 %1103
      %1105 = vadd.xlane.f32.xlu0 %v1091
      %v1106 = vpop.xlane.xlu0 %1105
      %1107 = vadd.xlane.f32.xlu0 %v1092
      %v1108 = vpop.xlane.xlu0 %1107
      %v1109 = vsel %vm542, %v1094, 0.0
      %v1110 = vsel %vm542, %v1096, 0.0
      %v1111 = vadd.f32 %v1109, %v1110
      %v1112 = vsel %vm542, %v1098, 0.0
      %v1113 = vadd.f32 %v1111, %v1112
      %v1114 = vsel %vm542, %v1100, 0.0
      %v1115 = vadd.f32 %v1113, %v1114
      %1116 = vadd.xlane.f32.xlu0 %v1115
      %v1117 = vpop.xlane.xlu0 %1116
      %v1118 = vrot.slane %v1117, 4
      %v1119 = vadd.f32 %v1117, %v1118
      %v1120 = vrot.slane %v1119, 2
      %v1121 = vadd.f32 %v1119, %v1120
      %v1122 = vrot.slane %v1121, 1
      %v1123 = vadd.f32 %v1121, %v1122
      %s1124 = vtos %v1123
      %v1125 = vstv %s1124
      %v1126 = vsel %vm542, %v1102, 0.0
      %v1127 = vsel %vm542, %v1104, 0.0
      %v1128 = vadd.f32 %v1126, %v1127
      %v1129 = vsel %vm542, %v1106, 0.0
      %v1130 = vadd.f32 %v1128, %v1129
      %v1131 = vsel %vm542, %v1108, 0.0
      %v1132 = vadd.f32 %v1130, %v1131
      %1133 = vadd.xlane.f32.xlu0 %v1132
      %v1134 = vpop.xlane.xlu0 %1133
      %v1135 = vrot.slane %v1134, 4
      %v1136 = vadd.f32 %v1134, %v1135
      %v1137 = vrot.slane %v1136, 2
      %v1138 = vadd.f32 %v1136, %v1137
      %v1139 = vrot.slane %v1138, 1
      %v1140 = vadd.f32 %v1138, %v1139
      %s1141 = vtos %v1140
      %v1142 = vstv %s1141
      %v1143 = vmul.f32 %v1125, 0.00024414063
      %v1144 = vmul.f32 %v1142, 0.00024414063
      %v1145 = vmul.f32 %v1143, %v1143
      %v1146 = vsub.f32 %v1144, %v1145
      %v1147 = vmax.f32 %v1146, 0.0
      %v1148 = vsub.f32 %v1085, %v1143
      %v1149 = vsub.f32 %v1086, %v1143
      %v1150 = vsub.f32 %v1087, %v1143
      %v1151 = vsub.f32 %v1088, %v1143
      %1152 = vset.pattern.permute.xlu0 16
      %1153 = vperm.xlu0 %1152, %v178
      %v1154 = vpop.permute.xlu0 %1153
      %1156 = vset.pattern.permute.xlu0 16
      %1157 = vperm.xlu0 %1156, %v179
      %v1158 = vpop.permute.xlu0 %1157
      %1160 = vset.pattern.permute.xlu0 16
      %1161 = vperm.xlu0 %1160, %v180
      %v1162 = vpop.permute.xlu0 %1161
      %1164 = vset.pattern.permute.xlu0 16
      %1165 = vperm.xlu0 %1164, %v181
      %v1166 = vpop.permute.xlu0 %1165
      %v1168 = vmul.f32 %v1154, %v1148
      %v1169 = vmul.f32 %v1158, %v1149
      %v1170 = vmul.f32 %v1162, %v1150
      %v1171 = vmul.f32 %v1166, %v1151
      %v1172 = vadd.f32 %v1147, 1e-05
      %v1173 = vrsqrt.pop %v1172
      %v1174 = vmul.f32 %v1168, %v1173
      %v1175 = vmul.f32 %v1169, %v1173
      %v1176 = vmul.f32 %v1170, %v1173
      %v1177 = vmul.f32 %v1171, %v1173
      %1178 = vset.pattern.permute.xlu0 17
      %1179 = vperm.xlu0 %1178, %v178
      %v1180 = vpop.permute.xlu0 %1179
      %1182 = vset.pattern.permute.xlu0 17
      %1183 = vperm.xlu0 %1182, %v179
      %v1184 = vpop.permute.xlu0 %1183
      %1186 = vset.pattern.permute.xlu0 17
      %1187 = vperm.xlu0 %1186, %v180
      %v1188 = vpop.permute.xlu0 %1187
      %1190 = vset.pattern.permute.xlu0 17
      %1191 = vperm.xlu0 %1190, %v181
      %v1192 = vpop.permute.xlu0 %1191
      %v1194 = vadd.f32 %v1174, %v1180
      %v1195 = vadd.f32 %v1175, %v1184
      %v1196 = vadd.f32 %v1176, %v1188
      %v1197 = vadd.f32 %v1177, %v1192
      %vm1198 = vcmp.ge.s32.totalorder %v423, 2
      %1199 = vrot.lane.b32.xlu0 %v1194, 2
      %v1200 = vpop.permute.xlu0 %1199
      %1201 = vrot.lane.b32.xlu0 %v1195, 2
      %v1202 = vpop.permute.xlu0 %1201
      %1203 = vrot.lane.b32.xlu0 %v1196, 2
      %v1204 = vpop.permute.xlu0 %1203
      %1205 = vrot.lane.b32.xlu0 %v1197, 2
      %v1206 = vpop.permute.xlu0 %1205
      %v1207 = vsel %vm1198, %v1200, 0.0
      %v1208 = vsel %vm1198, %v1202, 0.0
      %v1209 = vsel %vm1198, %v1204, 0.0
      %v1210 = vsel %vm1198, %v1206, 0.0
      %vm1211 = vcmp.lt.s32.totalorder %v423, 126
      %1212 = vrot.lane.b32.xlu0 %v1194, 126
      %v1213 = vpop.permute.xlu0 %1212
      %1214 = vrot.lane.b32.xlu0 %v1195, 126
      %v1215 = vpop.permute.xlu0 %1214
      %1216 = vrot.lane.b32.xlu0 %v1196, 126
      %v1217 = vpop.permute.xlu0 %1216
      %1218 = vrot.lane.b32.xlu0 %v1197, 126
      %v1219 = vpop.permute.xlu0 %1218
      %v1220 = vsel %vm1211, %v1213, 0.0
      %v1221 = vsel %vm1211, %v1215, 0.0
      %v1222 = vsel %vm1211, %v1217, 0.0
      %v1223 = vsel %vm1211, %v1219, 0.0
      %1224 = vset.pattern.permute.xlu0 18
      %1225 = vperm.xlu0 %1224, %v178
      %v1226 = vpop.permute.xlu0 %1225
      %1228 = vset.pattern.permute.xlu0 18
      %1229 = vperm.xlu0 %1228, %v179
      %v1230 = vpop.permute.xlu0 %1229
      %1232 = vset.pattern.permute.xlu0 18
      %1233 = vperm.xlu0 %1232, %v180
      %v1234 = vpop.permute.xlu0 %1233
      %1236 = vset.pattern.permute.xlu0 18
      %1237 = vperm.xlu0 %1236, %v181
      %v1238 = vpop.permute.xlu0 %1237
      %v1240 = vmul.f32 %v1207, %v1226
      %v1241 = vmul.f32 %v1208, %v1230
      %v1242 = vmul.f32 %v1209, %v1234
      %v1243 = vmul.f32 %v1210, %v1238
      %1244 = vset.pattern.permute.xlu0 19
      %1245 = vperm.xlu0 %1244, %v178
      %v1246 = vpop.permute.xlu0 %1245
      %1248 = vset.pattern.permute.xlu0 19
      %1249 = vperm.xlu0 %1248, %v179
      %v1250 = vpop.permute.xlu0 %1249
      %1252 = vset.pattern.permute.xlu0 19
      %1253 = vperm.xlu0 %1252, %v180
      %v1254 = vpop.permute.xlu0 %1253
      %1256 = vset.pattern.permute.xlu0 19
      %1257 = vperm.xlu0 %1256, %v181
      %v1258 = vpop.permute.xlu0 %1257
      %v1260 = vmul.f32 %v1194, %v1246
      %v1261 = vmul.f32 %v1195, %v1250
      %v1262 = vmul.f32 %v1196, %v1254
      %v1263 = vmul.f32 %v1197, %v1258
      %v1264 = vadd.f32 %v1240, %v1260
      %v1265 = vadd.f32 %v1241, %v1261
      %v1266 = vadd.f32 %v1242, %v1262
      %v1267 = vadd.f32 %v1243, %v1263
      %1268 = vset.pattern.permute.xlu0 20
      %1269 = vperm.xlu0 %1268, %v178
      %v1270 = vpop.permute.xlu0 %1269
      %1272 = vset.pattern.permute.xlu0 20
      %1273 = vperm.xlu0 %1272, %v179
      %v1274 = vpop.permute.xlu0 %1273
      %1276 = vset.pattern.permute.xlu0 20
      %1277 = vperm.xlu0 %1276, %v180
      %v1278 = vpop.permute.xlu0 %1277
      %1280 = vset.pattern.permute.xlu0 20
      %1281 = vperm.xlu0 %1280, %v181
      %v1282 = vpop.permute.xlu0 %1281
      %v1284 = vmul.f32 %v1220, %v1270
      %v1285 = vmul.f32 %v1221, %v1274
      %v1286 = vmul.f32 %v1222, %v1278
      %v1287 = vmul.f32 %v1223, %v1282
      %v1288 = vadd.f32 %v1264, %v1284
      %v1289 = vadd.f32 %v1265, %v1285
      %v1290 = vadd.f32 %v1266, %v1286
      %v1291 = vadd.f32 %v1267, %v1287
      %1292 = vset.pattern.permute.xlu0 21
      %1293 = vperm.xlu0 %1292, %v178
      %v1294 = vpop.permute.xlu0 %1293
      %1296 = vset.pattern.permute.xlu0 21
      %1297 = vperm.xlu0 %1296, %v179
      %v1298 = vpop.permute.xlu0 %1297
      %1300 = vset.pattern.permute.xlu0 21
      %1301 = vperm.xlu0 %1300, %v180
      %v1302 = vpop.permute.xlu0 %1301
      %1304 = vset.pattern.permute.xlu0 21
      %1305 = vperm.xlu0 %1304, %v181
      %v1306 = vpop.permute.xlu0 %1305
      %v1308 = vadd.f32 %v1288, %v1294
      %v1309 = vadd.f32 %v1289, %v1298
      %v1310 = vadd.f32 %v1290, %v1302
      %v1311 = vadd.f32 %v1291, %v1306
      %vm1312 = vcmp.ge.f32.partialorder %v1308, 0.0
      %vm1313 = vcmp.ge.f32.partialorder %v1309, 0.0
      %vm1314 = vcmp.ge.f32.partialorder %v1310, 0.0
      %vm1315 = vcmp.ge.f32.partialorder %v1311, 0.0
      %v1316 = vmul.f32 %v1308, 0.25
      %v1317 = vmul.f32 %v1309, 0.25
      %v1318 = vmul.f32 %v1310, 0.25
      %v1319 = vmul.f32 %v1311, 0.25
      %v1320 = vsel %vm1312, %v1308, %v1316
      %v1321 = vsel %vm1313, %v1309, %v1317
      %v1322 = vsel %vm1314, %v1310, %v1318
      %v1323 = vsel %vm1315, %v1311, %v1319
      %v1324 = vmul.f32 %v1320, %v1320
      %v1325 = vmul.f32 %v1321, %v1321
      %v1326 = vmul.f32 %v1322, %v1322
      %v1327 = vmul.f32 %v1323, %v1323
      %1328 = vadd.xlane.f32.xlu0 %v1320
      %v1329 = vpop.xlane.xlu0 %1328
      %1330 = vadd.xlane.f32.xlu0 %v1321
      %v1331 = vpop.xlane.xlu0 %1330
      %1332 = vadd.xlane.f32.xlu0 %v1322
      %v1333 = vpop.xlane.xlu0 %1332
      %1334 = vadd.xlane.f32.xlu0 %v1323
      %v1335 = vpop.xlane.xlu0 %1334
      %1336 = vadd.xlane.f32.xlu0 %v1324
      %v1337 = vpop.xlane.xlu0 %1336
      %1338 = vadd.xlane.f32.xlu0 %v1325
      %v1339 = vpop.xlane.xlu0 %1338
      %1340 = vadd.xlane.f32.xlu0 %v1326
      %v1341 = vpop.xlane.xlu0 %1340
      %1342 = vadd.xlane.f32.xlu0 %v1327
      %v1343 = vpop.xlane.xlu0 %1342
      %v1344 = vsel %vm542, %v1329, 0.0
      %v1345 = vsel %vm542, %v1331, 0.0
      %v1346 = vadd.f32 %v1344, %v1345
      %v1347 = vsel %vm542, %v1333, 0.0
      %v1348 = vadd.f32 %v1346, %v1347
      %v1349 = vsel %vm542, %v1335, 0.0
      %v1350 = vadd.f32 %v1348, %v1349
      %1351 = vadd.xlane.f32.xlu0 %v1350
      %v1352 = vpop.xlane.xlu0 %1351
      %v1353 = vrot.slane %v1352, 4
      %v1354 = vadd.f32 %v1352, %v1353
      %v1355 = vrot.slane %v1354, 2
      %v1356 = vadd.f32 %v1354, %v1355
      %v1357 = vrot.slane %v1356, 1
      %v1358 = vadd.f32 %v1356, %v1357
      %s1359 = vtos %v1358
      %v1360 = vstv %s1359
      %v1361 = vsel %vm542, %v1337, 0.0
      %v1362 = vsel %vm542, %v1339, 0.0
      %v1363 = vadd.f32 %v1361, %v1362
      %v1364 = vsel %vm542, %v1341, 0.0
      %v1365 = vadd.f32 %v1363, %v1364
      %v1366 = vsel %vm542, %v1343, 0.0
      %v1367 = vadd.f32 %v1365, %v1366
      %1368 = vadd.xlane.f32.xlu0 %v1367
      %v1369 = vpop.xlane.xlu0 %1368
      %v1370 = vrot.slane %v1369, 4
      %v1371 = vadd.f32 %v1369, %v1370
      %v1372 = vrot.slane %v1371, 2
      %v1373 = vadd.f32 %v1371, %v1372
      %v1374 = vrot.slane %v1373, 1
      %v1375 = vadd.f32 %v1373, %v1374
      %s1376 = vtos %v1375
      %v1377 = vstv %s1376
      %v1378 = vmul.f32 %v1360, 0.00024414063
      %v1379 = vmul.f32 %v1377, 0.00024414063
      %v1380 = vmul.f32 %v1378, %v1378
      %v1381 = vsub.f32 %v1379, %v1380
      %v1382 = vmax.f32 %v1381, 0.0
      %v1383 = vsub.f32 %v1320, %v1378
      %v1384 = vsub.f32 %v1321, %v1378
      %v1385 = vsub.f32 %v1322, %v1378
      %v1386 = vsub.f32 %v1323, %v1378
      %1387 = vset.pattern.permute.xlu0 22
      %1388 = vperm.xlu0 %1387, %v178
      %v1389 = vpop.permute.xlu0 %1388
      %1391 = vset.pattern.permute.xlu0 22
      %1392 = vperm.xlu0 %1391, %v179
      %v1393 = vpop.permute.xlu0 %1392
      %1395 = vset.pattern.permute.xlu0 22
      %1396 = vperm.xlu0 %1395, %v180
      %v1397 = vpop.permute.xlu0 %1396
      %1399 = vset.pattern.permute.xlu0 22
      %1400 = vperm.xlu0 %1399, %v181
      %v1401 = vpop.permute.xlu0 %1400
      %v1403 = vmul.f32 %v1389, %v1383
      %v1404 = vmul.f32 %v1393, %v1384
      %v1405 = vmul.f32 %v1397, %v1385
      %v1406 = vmul.f32 %v1401, %v1386
      %v1407 = vadd.f32 %v1382, 1e-05
      %v1408 = vrsqrt.pop %v1407
      %v1409 = vmul.f32 %v1403, %v1408
      %v1410 = vmul.f32 %v1404, %v1408
      %v1411 = vmul.f32 %v1405, %v1408
      %v1412 = vmul.f32 %v1406, %v1408
      %1413 = vset.pattern.permute.xlu0 23
      %1414 = vperm.xlu0 %1413, %v178
      %v1415 = vpop.permute.xlu0 %1414
      %1417 = vset.pattern.permute.xlu0 23
      %1418 = vperm.xlu0 %1417, %v179
      %v1419 = vpop.permute.xlu0 %1418
      %1421 = vset.pattern.permute.xlu0 23
      %1422 = vperm.xlu0 %1421, %v180
      %v1423 = vpop.permute.xlu0 %1422
      %1425 = vset.pattern.permute.xlu0 23
      %1426 = vperm.xlu0 %1425, %v181
      %v1427 = vpop.permute.xlu0 %1426
      %v1429 = vadd.f32 %v1409, %v1415
      %v1430 = vadd.f32 %v1410, %v1419
      %v1431 = vadd.f32 %v1411, %v1423
      %v1432 = vadd.f32 %v1412, %v1427
      %v1433 = vpack.c.bf16 %v1430, %v1429
      %v1434 = vpack.c.bf16 %v1432, %v1431
      %v1435 = vld [vmem:[%s1 + $0x68] sm:$0xf]
      %v1436 = vld [vmem:[%s1 + $0x6c] sm:$0xf]
      %v1439 = vunpack.c.l.b16 %v1435
      %v1440 = vunpack.c.l.b16 %v1436
      %v1441 = vpack.c.b16 %v1440, %v1439
      %v1443 = vsel %vm377, %v1441, 0
      %1445 = vmatprep.subr.bf16.mxu0 0
      %1446 = vmatpush1.bf16.msra.mxu0 %v1433
      %1447 = vmatprep.subr.bf16.mxu0 0
      %1448 = vmatpush1.bf16.msra.mxu0 %v1434
      %1449 = vmatprep.subr.bf16.mxu0 0
      %1450 = vmatpush1.bf16.msra.mxu0 0
      %1451 = vmatprep.subr.bf16.mxu0 0
      %1452 = vmatpush1.bf16.msra.mxu0 0
      %1453 = vmatprep.subr.bf16.mxu0 0
      %1454 = vmatpush1.bf16.msra.mxu0 0
      %1455 = vmatprep.subr.bf16.mxu0 0
      %1456 = vmatpush1.bf16.msra.mxu0 0
      %1457 = vmatprep.subr.bf16.mxu0 0
      %1458 = vmatpush1.bf16.msra.mxu0 0
      %1459 = vmatprep.subr.bf16.mxu0 0
      %1460 = vmatpush1.bf16.msra.mxu0 0
      %1461 = vmatprep.subr.bf16.mxu0 0
      %1462 = vmatpush1.bf16.msra.mxu0 0
      %1463 = vmatprep.subr.bf16.mxu0 0
      %1464 = vmatpush1.bf16.msra.mxu0 0
      %1465 = vmatprep.subr.bf16.mxu0 0
      %1466 = vmatpush1.bf16.msra.mxu0 0
      %1467 = vmatprep.subr.bf16.mxu0 0
      %1468 = vmatpush1.bf16.msra.mxu0 0
      %1469 = vmatprep.subr.bf16.mxu0 0
      %1470 = vmatpush1.bf16.msra.mxu0 0
      %1471 = vmatprep.subr.bf16.mxu0 0
      %1472 = vmatpush1.bf16.msra.mxu0 0
      %1473 = vmatprep.subr.bf16.mxu0 0
      %1474 = vmatpush1.bf16.msra.mxu0 0
      %1475 = vmatprep.subr.bf16.mxu0 0
      %1476 = vmatpush1.bf16.msra.mxu0 0
      %1477 = vmatprep.mubr.bf16.mxu0 0
      %1478 = vmatmul.mubr.bf16.gmra.mrb[0].mxu0 %v1443
      %v1479 = vpop.f32.mrb[0].mxu0
      %v1480 = vadd.f32 0.0, %v1479
      %v1481 = vpop.f32.mrb[0].mxu0
      %v1482 = vpop.f32.mrb[0].mxu0
      %v1483 = vadd.f32 0.0, %v1482
      %v1484 = vpop.f32.mrb[0].mxu0
      %1485 = vdwg.mxu0
      %v1486 = vadd.f32 %v922, %v1480
      %v1487 = vadd.f32 %v925, %v1483
      %1488 = vset.pattern.permute.xlu0 25
      %1489 = vperm.xlu0 %1488, %v360
      %v1490 = vpop.permute.xlu0 %1489
      %1492 = vset.pattern.permute.xlu0 25
      %1493 = vperm.xlu0 %1492, %v361
      %v1494 = vpop.permute.xlu0 %1493
      %v1496 = vadd.f32 %v1486, %v1490
      %v1497 = vadd.f32 %v1487, %v1494
      %v1498 = vld [vmem:[%s1 + $0x50] sm:$0xf]
      %v1499 = vld [vmem:[%s1 + $0x54] sm:$0xf]
      %v1502 = vunpack.c.l.b16 %v1498
      %v1503 = vunpack.c.l.b16 %v1499
      %v1504 = vpack.c.b16 %v1503, %v1502
      %v1506 = vsel %vm377, %v1504, 0
      %1508 = vmatprep.subr.bf16.mxu0 0
      %1509 = vmatpush1.bf16.msra.mxu0 %v1433
      %1510 = vmatprep.subr.bf16.mxu0 0
      %1511 = vmatpush1.bf16.msra.mxu0 %v1434
      %1512 = vmatprep.subr.bf16.mxu0 0
      %1513 = vmatpush1.bf16.msra.mxu0 0
      %1514 = vmatprep.subr.bf16.mxu0 0
      %1515 = vmatpush1.bf16.msra.mxu0 0
      %1516 = vmatprep.subr.bf16.mxu0 0
      %1517 = vmatpush1.bf16.msra.mxu0 0
      %1518 = vmatprep.subr.bf16.mxu0 0
      %1519 = vmatpush1.bf16.msra.mxu0 0
      %1520 = vmatprep.subr.bf16.mxu0 0
      %1521 = vmatpush1.bf16.msra.mxu0 0
      %1522 = vmatprep.subr.bf16.mxu0 0
      %1523 = vmatpush1.bf16.msra.mxu0 0
      %1524 = vmatprep.subr.bf16.mxu0 0
      %1525 = vmatpush1.bf16.msra.mxu0 0
      %1526 = vmatprep.subr.bf16.mxu0 0
      %1527 = vmatpush1.bf16.msra.mxu0 0
      %1528 = vmatprep.subr.bf16.mxu0 0
      %1529 = vmatpush1.bf16.msra.mxu0 0
      %1530 = vmatprep.subr.bf16.mxu0 0
      %1531 = vmatpush1.bf16.msra.mxu0 0
      %1532 = vmatprep.subr.bf16.mxu0 0
      %1533 = vmatpush1.bf16.msra.mxu0 0
      %1534 = vmatprep.subr.bf16.mxu0 0
      %1535 = vmatpush1.bf16.msra.mxu0 0
      %1536 = vmatprep.subr.bf16.mxu0 0
      %1537 = vmatpush1.bf16.msra.mxu0 0
      %1538 = vmatprep.subr.bf16.mxu0 0
      %1539 = vmatpush1.bf16.msra.mxu0 0
      %1540 = vmatprep.mubr.bf16.mxu0 0
      %1541 = vmatmul.mubr.bf16.gmra.mrb[0].mxu0 %v1506
      %v1542 = vpop.f32.mrb[0].mxu0
      %v1543 = vadd.f32 0.0, %v1542
      %v1544 = vpop.f32.mrb[0].mxu0
      %v1545 = vpop.f32.mrb[0].mxu0
      %v1546 = vadd.f32 0.0, %v1545
      %v1547 = vpop.f32.mrb[0].mxu0
      %1548 = vdwg.mxu0
      %v1549 = vadd.f32 %v989, %v1543
      %v1550 = vadd.f32 %v990, %v1546
      %1551 = vset.pattern.permute.xlu0 24
      %1552 = vperm.xlu0 %1551, %v360
      %v1553 = vpop.permute.xlu0 %1552
      %1555 = vset.pattern.permute.xlu0 24
      %1556 = vperm.xlu0 %1555, %v361
      %v1557 = vpop.permute.xlu0 %1556
      %v1559 = vadd.f32 %v1549, %v1553
      %v1560 = vadd.f32 %v1550, %v1557
      %v1561 = vld [vmem:[%s1 + $0x38] sm:$0xf]
      %v1562 = vld [vmem:[%s1 + $0x3c] sm:$0xf]
      %v1563 = vld [vmem:[%s1 + $0x40] sm:$0xf]
      %v1564 = vld [vmem:[%s1 + $0x44] sm:$0xf]
      %v1565 = vpack.c.bf16 %v1560, %v1559
      %1566 = vset.pattern.permute.xlu0 26
      %1567 = vperm.xlu0 %1566, %v178
      %v1568 = vpop.permute.xlu0 %1567
      %1570 = vset.pattern.permute.xlu0 26
      %1571 = vperm.xlu0 %1570, %v179
      %v1572 = vpop.permute.xlu0 %1571
      %1574 = vset.pattern.permute.xlu0 26
      %1575 = vperm.xlu0 %1574, %v180
      %v1576 = vpop.permute.xlu0 %1575
      %1578 = vset.pattern.permute.xlu0 26
      %1579 = vperm.xlu0 %1578, %v181
      %v1580 = vpop.permute.xlu0 %1579
      %v1586 = vunpack.c.l.b16 %v1561
      %v1587 = vunpack.c.l.b16 %v1562
      %v1588 = vunpack.c.l.b16 %v1563
      %v1589 = vunpack.c.l.b16 %v1564
      %v1590 = vpack.c.b16 %v1587, %v1586
      %v1591 = vpack.c.b16 %v1589, %v1588
      %v1593 = vsel %vm218, %v1590, 0
      %v1596 = vsel %vm218, %v1591, 0
      %1598 = vmatprep.subr.bf16.mxu0 0
      %1599 = vmatpush1.bf16.msra.mxu0 %v1565
      %1600 = vmatprep.subr.bf16.mxu0 0
      %1601 = vmatpush1.bf16.msra.mxu0 0
      %1602 = vmatprep.subr.bf16.mxu0 0
      %1603 = vmatpush1.bf16.msra.mxu0 0
      %1604 = vmatprep.subr.bf16.mxu0 0
      %1605 = vmatpush1.bf16.msra.mxu0 0
      %1606 = vmatprep.subr.bf16.mxu0 0
      %1607 = vmatpush1.bf16.msra.mxu0 0
      %1608 = vmatprep.subr.bf16.mxu0 0
      %1609 = vmatpush1.bf16.msra.mxu0 0
      %1610 = vmatprep.subr.bf16.mxu0 0
      %1611 = vmatpush1.bf16.msra.mxu0 0
      %1612 = vmatprep.subr.bf16.mxu0 0
      %1613 = vmatpush1.bf16.msra.mxu0 0
      %1614 = vmatprep.subr.bf16.mxu0 0
      %1615 = vmatpush1.bf16.msra.mxu0 0
      %1616 = vmatprep.subr.bf16.mxu0 0
      %1617 = vmatpush1.bf16.msra.mxu0 0
      %1618 = vmatprep.subr.bf16.mxu0 0
      %1619 = vmatpush1.bf16.msra.mxu0 0
      %1620 = vmatprep.subr.bf16.mxu0 0
      %1621 = vmatpush1.bf16.msra.mxu0 0
      %1622 = vmatprep.subr.bf16.mxu0 0
      %1623 = vmatpush1.bf16.msra.mxu0 0
      %1624 = vmatprep.subr.bf16.mxu0 0
      %1625 = vmatpush1.bf16.msra.mxu0 0
      %1626 = vmatprep.subr.bf16.mxu0 0
      %1627 = vmatpush1.bf16.msra.mxu0 0
      %1628 = vmatprep.subr.bf16.mxu0 0
      %1629 = vmatpush1.bf16.msra.mxu0 0
      %1630 = vmatprep.mubr.bf16.mxu0 0
      %1631 = vmatmul.mubr.bf16.gmra.mrb[0].mxu0 %v1593
      %v1632 = vpop.f32.mrb[0].mxu0
      %v1633 = vadd.f32 %v1568, %v1632
      %v1634 = vpop.f32.mrb[0].mxu0
      %v1635 = vpop.f32.mrb[0].mxu0
      %v1636 = vadd.f32 %v1572, %v1635
      %v1637 = vpop.f32.mrb[0].mxu0
      %1638 = vmatprep.mubr.bf16.mxu0 0
      %1639 = vmatmul.mubr.bf16.gmra.mrb[0].mxu0 %v1596
      %v1640 = vpop.f32.mrb[0].mxu0
      %v1641 = vadd.f32 %v1576, %v1640
      %v1642 = vpop.f32.mrb[0].mxu0
      %v1643 = vpop.f32.mrb[0].mxu0
      %v1644 = vadd.f32 %v1580, %v1643
      %v1645 = vpop.f32.mrb[0].mxu0
      %1646 = vdwg.mxu0
      %vm1647 = vcmp.ge.f32.partialorder %v1633, 0.0
      %vm1648 = vcmp.ge.f32.partialorder %v1636, 0.0
      %vm1649 = vcmp.ge.f32.partialorder %v1641, 0.0
      %vm1650 = vcmp.ge.f32.partialorder %v1644, 0.0
      %v1651 = vmul.f32 %v1633, 0.25
      %v1652 = vmul.f32 %v1636, 0.25
      %v1653 = vmul.f32 %v1641, 0.25
      %v1654 = vmul.f32 %v1644, 0.25
      %v1655 = vsel %vm1647, %v1633, %v1651
      %v1656 = vsel %vm1648, %v1636, %v1652
      %v1657 = vsel %vm1649, %v1641, %v1653
      %v1658 = vsel %vm1650, %v1644, %v1654
      %v1659 = vmul.f32 %v1655, %v1655
      %v1660 = vmul.f32 %v1656, %v1656
      %v1661 = vmul.f32 %v1657, %v1657
      %v1662 = vmul.f32 %v1658, %v1658
      %1663 = vadd.xlane.f32.xlu0 %v1655
      %v1664 = vpop.xlane.xlu0 %1663
      %1665 = vadd.xlane.f32.xlu0 %v1656
      %v1666 = vpop.xlane.xlu0 %1665
      %1667 = vadd.xlane.f32.xlu0 %v1657
      %v1668 = vpop.xlane.xlu0 %1667
      %1669 = vadd.xlane.f32.xlu0 %v1658
      %v1670 = vpop.xlane.xlu0 %1669
      %1671 = vadd.xlane.f32.xlu0 %v1659
      %v1672 = vpop.xlane.xlu0 %1671
      %1673 = vadd.xlane.f32.xlu0 %v1660
      %v1674 = vpop.xlane.xlu0 %1673
      %1675 = vadd.xlane.f32.xlu0 %v1661
      %v1676 = vpop.xlane.xlu0 %1675
      %1677 = vadd.xlane.f32.xlu0 %v1662
      %v1678 = vpop.xlane.xlu0 %1677
      %v1679 = vsel %vm542, %v1664, 0.0
      %v1680 = vsel %vm542, %v1666, 0.0
      %v1681 = vadd.f32 %v1679, %v1680
      %v1682 = vsel %vm542, %v1668, 0.0
      %v1683 = vadd.f32 %v1681, %v1682
      %v1684 = vsel %vm542, %v1670, 0.0
      %v1685 = vadd.f32 %v1683, %v1684
      %1686 = vadd.xlane.f32.xlu0 %v1685
      %v1687 = vpop.xlane.xlu0 %1686
      %v1688 = vrot.slane %v1687, 4
      %v1689 = vadd.f32 %v1687, %v1688
      %v1690 = vrot.slane %v1689, 2
      %v1691 = vadd.f32 %v1689, %v1690
      %v1692 = vrot.slane %v1691, 1
      %v1693 = vadd.f32 %v1691, %v1692
      %s1694 = vtos %v1693
      %v1695 = vstv %s1694
      %v1696 = vsel %vm542, %v1672, 0.0
      %v1697 = vsel %vm542, %v1674, 0.0
      %v1698 = vadd.f32 %v1696, %v1697
      %v1699 = vsel %vm542, %v1676, 0.0
      %v1700 = vadd.f32 %v1698, %v1699
      %v1701 = vsel %vm542, %v1678, 0.0
      %v1702 = vadd.f32 %v1700, %v1701
      %1703 = vadd.xlane.f32.xlu0 %v1702
      %v1704 = vpop.xlane.xlu0 %1703
      %v1705 = vrot.slane %v1704, 4
      %v1706 = vadd.f32 %v1704, %v1705
      %v1707 = vrot.slane %v1706, 2
      %v1708 = vadd.f32 %v1706, %v1707
      %v1709 = vrot.slane %v1708, 1
      %v1710 = vadd.f32 %v1708, %v1709
      %s1711 = vtos %v1710
      %v1712 = vstv %s1711
      %v1713 = vmul.f32 %v1695, 0.00024414063
      %v1714 = vmul.f32 %v1712, 0.00024414063
      %v1715 = vmul.f32 %v1713, %v1713
      %v1716 = vsub.f32 %v1714, %v1715
      %v1717 = vmax.f32 %v1716, 0.0
      %v1718 = vsub.f32 %v1655, %v1713
      %v1719 = vsub.f32 %v1656, %v1713
      %v1720 = vsub.f32 %v1657, %v1713
      %v1721 = vsub.f32 %v1658, %v1713
      %1722 = vset.pattern.permute.xlu0 27
      %1723 = vperm.xlu0 %1722, %v178
      %v1724 = vpop.permute.xlu0 %1723
      %1726 = vset.pattern.permute.xlu0 27
      %1727 = vperm.xlu0 %1726, %v179
      %v1728 = vpop.permute.xlu0 %1727
      %1730 = vset.pattern.permute.xlu0 27
      %1731 = vperm.xlu0 %1730, %v180
      %v1732 = vpop.permute.xlu0 %1731
      %1734 = vset.pattern.permute.xlu0 27
      %1735 = vperm.xlu0 %1734, %v181
      %v1736 = vpop.permute.xlu0 %1735
      %v1738 = vmul.f32 %v1724, %v1718
      %v1739 = vmul.f32 %v1728, %v1719
      %v1740 = vmul.f32 %v1732, %v1720
      %v1741 = vmul.f32 %v1736, %v1721
      %v1742 = vadd.f32 %v1717, 1e-05
      %v1743 = vrsqrt.pop %v1742
      %v1744 = vmul.f32 %v1738, %v1743
      %v1745 = vmul.f32 %v1739, %v1743
      %v1746 = vmul.f32 %v1740, %v1743
      %v1747 = vmul.f32 %v1741, %v1743
      %1748 = vset.pattern.permute.xlu0 28
      %1749 = vperm.xlu0 %1748, %v178
      %v1750 = vpop.permute.xlu0 %1749
      %1752 = vset.pattern.permute.xlu0 28
      %1753 = vperm.xlu0 %1752, %v179
      %v1754 = vpop.permute.xlu0 %1753
      %1756 = vset.pattern.permute.xlu0 28
      %1757 = vperm.xlu0 %1756, %v180
      %v1758 = vpop.permute.xlu0 %1757
      %1760 = vset.pattern.permute.xlu0 28
      %1761 = vperm.xlu0 %1760, %v181
      %v1762 = vpop.permute.xlu0 %1761
      %v1764 = vadd.f32 %v1744, %v1750
      %v1765 = vadd.f32 %v1745, %v1754
      %v1766 = vadd.f32 %v1746, %v1758
      %v1767 = vadd.f32 %v1747, %v1762
      %vm1768 = vcmp.ge.s32.totalorder %v423, 4
      %1769 = vrot.lane.b32.xlu0 %v1764, 4
      %v1770 = vpop.permute.xlu0 %1769
      %1771 = vrot.lane.b32.xlu0 %v1765, 4
      %v1772 = vpop.permute.xlu0 %1771
      %1773 = vrot.lane.b32.xlu0 %v1766, 4
      %v1774 = vpop.permute.xlu0 %1773
      %1775 = vrot.lane.b32.xlu0 %v1767, 4
      %v1776 = vpop.permute.xlu0 %1775
      %v1777 = vsel %vm1768, %v1770, 0.0
      %v1778 = vsel %vm1768, %v1772, 0.0
      %v1779 = vsel %vm1768, %v1774, 0.0
      %v1780 = vsel %vm1768, %v1776, 0.0
      %vm1781 = vcmp.lt.s32.totalorder %v423, 124
      %1782 = vrot.lane.b32.xlu0 %v1764, 124
      %v1783 = vpop.permute.xlu0 %1782
      %1784 = vrot.lane.b32.xlu0 %v1765, 124
      %v1785 = vpop.permute.xlu0 %1784
      %1786 = vrot.lane.b32.xlu0 %v1766, 124
      %v1787 = vpop.permute.xlu0 %1786
      %1788 = vrot.lane.b32.xlu0 %v1767, 124
      %v1789 = vpop.permute.xlu0 %1788
      %v1790 = vsel %vm1781, %v1783, 0.0
      %v1791 = vsel %vm1781, %v1785, 0.0
      %v1792 = vsel %vm1781, %v1787, 0.0
      %v1793 = vsel %vm1781, %v1789, 0.0
      %1794 = vset.pattern.permute.xlu0 29
      %1795 = vperm.xlu0 %1794, %v178
      %v1796 = vpop.permute.xlu0 %1795
      %1798 = vset.pattern.permute.xlu0 29
      %1799 = vperm.xlu0 %1798, %v179
      %v1800 = vpop.permute.xlu0 %1799
      %1802 = vset.pattern.permute.xlu0 29
      %1803 = vperm.xlu0 %1802, %v180
      %v1804 = vpop.permute.xlu0 %1803
      %1806 = vset.pattern.permute.xlu0 29
      %1807 = vperm.xlu0 %1806, %v181
      %v1808 = vpop.permute.xlu0 %1807
      %v1810 = vmul.f32 %v1777, %v1796
      %v1811 = vmul.f32 %v1778, %v1800
      %v1812 = vmul.f32 %v1779, %v1804
      %v1813 = vmul.f32 %v1780, %v1808
      %1814 = vset.pattern.permute.xlu0 30
      %1815 = vperm.xlu0 %1814, %v178
      %v1816 = vpop.permute.xlu0 %1815
      %1818 = vset.pattern.permute.xlu0 30
      %1819 = vperm.xlu0 %1818, %v179
      %v1820 = vpop.permute.xlu0 %1819
      %1822 = vset.pattern.permute.xlu0 30
      %1823 = vperm.xlu0 %1822, %v180
      %v1824 = vpop.permute.xlu0 %1823
      %1826 = vset.pattern.permute.xlu0 30
      %1827 = vperm.xlu0 %1826, %v181
      %v1828 = vpop.permute.xlu0 %1827
      %v1830 = vmul.f32 %v1764, %v1816
      %v1831 = vmul.f32 %v1765, %v1820
      %v1832 = vmul.f32 %v1766, %v1824
      %v1833 = vmul.f32 %v1767, %v1828
      %v1834 = vadd.f32 %v1810, %v1830
      %v1835 = vadd.f32 %v1811, %v1831
      %v1836 = vadd.f32 %v1812, %v1832
      %v1837 = vadd.f32 %v1813, %v1833
      %1838 = vset.pattern.permute.xlu0 31
      %1839 = vperm.xlu0 %1838, %v178
      %v1840 = vpop.permute.xlu0 %1839
      %1842 = vset.pattern.permute.xlu0 31
      %1843 = vperm.xlu0 %1842, %v179
      %v1844 = vpop.permute.xlu0 %1843
      %1846 = vset.pattern.permute.xlu0 31
      %1847 = vperm.xlu0 %1846, %v180
      %v1848 = vpop.permute.xlu0 %1847
      %1850 = vset.pattern.permute.xlu0 31
      %1851 = vperm.xlu0 %1850, %v181
      %v1852 = vpop.permute.xlu0 %1851
      %v1854 = vmul.f32 %v1790, %v1840
      %v1855 = vmul.f32 %v1791, %v1844
      %v1856 = vmul.f32 %v1792, %v1848
      %v1857 = vmul.f32 %v1793, %v1852
      %v1858 = vadd.f32 %v1834, %v1854
      %v1859 = vadd.f32 %v1835, %v1855
      %v1860 = vadd.f32 %v1836, %v1856
      %v1861 = vadd.f32 %v1837, %v1857
      %1862 = vset.pattern.permute.xlu0 32
      %1863 = vperm.xlu0 %1862, %v178
      %v1864 = vpop.permute.xlu0 %1863
      %1866 = vset.pattern.permute.xlu0 32
      %1867 = vperm.xlu0 %1866, %v179
      %v1868 = vpop.permute.xlu0 %1867
      %1870 = vset.pattern.permute.xlu0 32
      %1871 = vperm.xlu0 %1870, %v180
      %v1872 = vpop.permute.xlu0 %1871
      %1874 = vset.pattern.permute.xlu0 32
      %1875 = vperm.xlu0 %1874, %v181
      %v1876 = vpop.permute.xlu0 %1875
      %v1878 = vadd.f32 %v1858, %v1864
      %v1879 = vadd.f32 %v1859, %v1868
      %v1880 = vadd.f32 %v1860, %v1872
      %v1881 = vadd.f32 %v1861, %v1876
      %vm1882 = vcmp.ge.f32.partialorder %v1878, 0.0
      %vm1883 = vcmp.ge.f32.partialorder %v1879, 0.0
      %vm1884 = vcmp.ge.f32.partialorder %v1880, 0.0
      %vm1885 = vcmp.ge.f32.partialorder %v1881, 0.0
      %v1886 = vmul.f32 %v1878, 0.25
      %v1887 = vmul.f32 %v1879, 0.25
      %v1888 = vmul.f32 %v1880, 0.25
      %v1889 = vmul.f32 %v1881, 0.25
      %v1890 = vsel %vm1882, %v1878, %v1886
      %v1891 = vsel %vm1883, %v1879, %v1887
      %v1892 = vsel %vm1884, %v1880, %v1888
      %v1893 = vsel %vm1885, %v1881, %v1889
      %v1894 = vmul.f32 %v1890, %v1890
      %v1895 = vmul.f32 %v1891, %v1891
      %v1896 = vmul.f32 %v1892, %v1892
      %v1897 = vmul.f32 %v1893, %v1893
      %1898 = vadd.xlane.f32.xlu0 %v1890
      %v1899 = vpop.xlane.xlu0 %1898
      %1900 = vadd.xlane.f32.xlu0 %v1891
      %v1901 = vpop.xlane.xlu0 %1900
      %1902 = vadd.xlane.f32.xlu0 %v1892
      %v1903 = vpop.xlane.xlu0 %1902
      %1904 = vadd.xlane.f32.xlu0 %v1893
      %v1905 = vpop.xlane.xlu0 %1904
      %1906 = vadd.xlane.f32.xlu0 %v1894
      %v1907 = vpop.xlane.xlu0 %1906
      %1908 = vadd.xlane.f32.xlu0 %v1895
      %v1909 = vpop.xlane.xlu0 %1908
      %1910 = vadd.xlane.f32.xlu0 %v1896
      %v1911 = vpop.xlane.xlu0 %1910
      %1912 = vadd.xlane.f32.xlu0 %v1897
      %v1913 = vpop.xlane.xlu0 %1912
      %v1914 = vsel %vm542, %v1899, 0.0
      %v1915 = vsel %vm542, %v1901, 0.0
      %v1916 = vadd.f32 %v1914, %v1915
      %v1917 = vsel %vm542, %v1903, 0.0
      %v1918 = vadd.f32 %v1916, %v1917
      %v1919 = vsel %vm542, %v1905, 0.0
      %v1920 = vadd.f32 %v1918, %v1919
      %1921 = vadd.xlane.f32.xlu0 %v1920
      %v1922 = vpop.xlane.xlu0 %1921
      %v1923 = vrot.slane %v1922, 4
      %v1924 = vadd.f32 %v1922, %v1923
      %v1925 = vrot.slane %v1924, 2
      %v1926 = vadd.f32 %v1924, %v1925
      %v1927 = vrot.slane %v1926, 1
      %v1928 = vadd.f32 %v1926, %v1927
      %s1929 = vtos %v1928
      %v1930 = vstv %s1929
      %v1931 = vsel %vm542, %v1907, 0.0
      %v1932 = vsel %vm542, %v1909, 0.0
      %v1933 = vadd.f32 %v1931, %v1932
      %v1934 = vsel %vm542, %v1911, 0.0
      %v1935 = vadd.f32 %v1933, %v1934
      %v1936 = vsel %vm542, %v1913, 0.0
      %v1937 = vadd.f32 %v1935, %v1936
      %1938 = vadd.xlane.f32.xlu0 %v1937
      %v1939 = vpop.xlane.xlu0 %1938
      %v1940 = vrot.slane %v1939, 4
      %v1941 = vadd.f32 %v1939, %v1940
      %v1942 = vrot.slane %v1941, 2
      %v1943 = vadd.f32 %v1941, %v1942
      %v1944 = vrot.slane %v1943, 1
      %v1945 = vadd.f32 %v1943, %v1944
      %s1946 = vtos %v1945
      %v1947 = vstv %s1946
      %v1948 = vmul.f32 %v1930, 0.00024414063
      %v1949 = vmul.f32 %v1947, 0.00024414063
      %v1950 = vmul.f32 %v1948, %v1948
      %v1951 = vsub.f32 %v1949, %v1950
      %v1952 = vmax.f32 %v1951, 0.0
      %v1953 = vsub.f32 %v1890, %v1948
      %v1954 = vsub.f32 %v1891, %v1948
      %v1955 = vsub.f32 %v1892, %v1948
      %v1956 = vsub.f32 %v1893, %v1948
      %1957 = vset.pattern.permute.xlu0 33
      %1958 = vperm.xlu0 %1957, %v178
      %v1959 = vpop.permute.xlu0 %1958
      %1961 = vset.pattern.permute.xlu0 33
      %1962 = vperm.xlu0 %1961, %v179
      %v1963 = vpop.permute.xlu0 %1962
      %1965 = vset.pattern.permute.xlu0 33
      %1966 = vperm.xlu0 %1965, %v180
      %v1967 = vpop.permute.xlu0 %1966
      %1969 = vset.pattern.permute.xlu0 33
      %1970 = vperm.xlu0 %1969, %v181
      %v1971 = vpop.permute.xlu0 %1970
      %v1973 = vmul.f32 %v1959, %v1953
      %v1974 = vmul.f32 %v1963, %v1954
      %v1975 = vmul.f32 %v1967, %v1955
      %v1976 = vmul.f32 %v1971, %v1956
      %v1977 = vadd.f32 %v1952, 1e-05
      %v1978 = vrsqrt.pop %v1977
      %v1979 = vmul.f32 %v1973, %v1978
      %v1980 = vmul.f32 %v1974, %v1978
      %v1981 = vmul.f32 %v1975, %v1978
      %v1982 = vmul.f32 %v1976, %v1978
      %1983 = vset.pattern.permute.xlu0 34
      %1984 = vperm.xlu0 %1983, %v178
      %v1985 = vpop.permute.xlu0 %1984
      %1987 = vset.pattern.permute.xlu0 34
      %1988 = vperm.xlu0 %1987, %v179
      %v1989 = vpop.permute.xlu0 %1988
      %1991 = vset.pattern.permute.xlu0 34
      %1992 = vperm.xlu0 %1991, %v180
      %v1993 = vpop.permute.xlu0 %1992
      %1995 = vset.pattern.permute.xlu0 34
      %1996 = vperm.xlu0 %1995, %v181
      %v1997 = vpop.permute.xlu0 %1996
      %v1999 = vadd.f32 %v1979, %v1985
      %v2000 = vadd.f32 %v1980, %v1989
      %v2001 = vadd.f32 %v1981, %v1993
      %v2002 = vadd.f32 %v1982, %v1997
      %v2003 = vpack.c.bf16 %v2000, %v1999
      %v2004 = vpack.c.bf16 %v2002, %v2001
      %v2005 = vld [vmem:[%s1 + $0x70] sm:$0xf]
      %v2006 = vld [vmem:[%s1 + $0x74] sm:$0xf]
      %v2009 = vunpack.c.l.b16 %v2005
      %v2010 = vunpack.c.l.b16 %v2006
      %v2011 = vpack.c.b16 %v2010, %v2009
      %v2013 = vsel %vm377, %v2011, 0
      %2015 = vmatprep.subr.bf16.mxu0 0
      %2016 = vmatpush1.bf16.msra.mxu0 %v2003
      %2017 = vmatprep.subr.bf16.mxu0 0
      %2018 = vmatpush1.bf16.msra.mxu0 %v2004
      %2019 = vmatprep.subr.bf16.mxu0 0
      %2020 = vmatpush1.bf16.msra.mxu0 0
      %2021 = vmatprep.subr.bf16.mxu0 0
      %2022 = vmatpush1.bf16.msra.mxu0 0
      %2023 = vmatprep.subr.bf16.mxu0 0
      %2024 = vmatpush1.bf16.msra.mxu0 0
      %2025 = vmatprep.subr.bf16.mxu0 0
      %2026 = vmatpush1.bf16.msra.mxu0 0
      %2027 = vmatprep.subr.bf16.mxu0 0
      %2028 = vmatpush1.bf16.msra.mxu0 0
      %2029 = vmatprep.subr.bf16.mxu0 0
      %2030 = vmatpush1.bf16.msra.mxu0 0
      %2031 = vmatprep.subr.bf16.mxu0 0
      %2032 = vmatpush1.bf16.msra.mxu0 0
      %2033 = vmatprep.subr.bf16.mxu0 0
      %2034 = vmatpush1.bf16.msra.mxu0 0
      %2035 = vmatprep.subr.bf16.mxu0 0
      %2036 = vmatpush1.bf16.msra.mxu0 0
      %2037 = vmatprep.subr.bf16.mxu0 0
      %2038 = vmatpush1.bf16.msra.mxu0 0
      %2039 = vmatprep.subr.bf16.mxu0 0
      %2040 = vmatpush1.bf16.msra.mxu0 0
      %2041 = vmatprep.subr.bf16.mxu0 0
      %2042 = vmatpush1.bf16.msra.mxu0 0
      %2043 = vmatprep.subr.bf16.mxu0 0
      %2044 = vmatpush1.bf16.msra.mxu0 0
      %2045 = vmatprep.subr.bf16.mxu0 0
      %2046 = vmatpush1.bf16.msra.mxu0 0
      %2047 = vmatprep.mubr.bf16.mxu0 0
      %2048 = vmatmul.mubr.bf16.gmra.mrb[0].mxu0 %v2013
      %v2049 = vpop.f32.mrb[0].mxu0
      %v2050 = vadd.f32 0.0, %v2049
      %v2051 = vpop.f32.mrb[0].mxu0
      %v2052 = vpop.f32.mrb[0].mxu0
      %v2053 = vadd.f32 0.0, %v2052
      %v2054 = vpop.f32.mrb[0].mxu0
      %2055 = vdwg.mxu0
      %v2056 = vadd.f32 %v1496, %v2050
      %v2057 = vadd.f32 %v1497, %v2053
      %2058 = vset.pattern.permute.xlu0 36
      %2059 = vperm.xlu0 %2058, %v360
      %v2060 = vpop.permute.xlu0 %2059
      %2062 = vset.pattern.permute.xlu0 36
      %2063 = vperm.xlu0 %2062, %v361
      %v2064 = vpop.permute.xlu0 %2063
      %v2066 = vadd.f32 %v2056, %v2060
      %v2067 = vadd.f32 %v2057, %v2064
      %vm2068 = vcmp.ge.f32.partialorder %v2066, 0.0
      %vm2069 = vcmp.ge.f32.partialorder %v2067, 0.0
      %v2070 = vmul.f32 %v2066, 0.25
      %v2071 = vmul.f32 %v2067, 0.25
      %v2072 = vsel %vm2068, %v2066, %v2070
      %v2073 = vsel %vm2069, %v2067, %v2071
      %v2074 = vld [vmem:[%s1 + $0x78] sm:$0xf]
      %v2075 = vld [vmem:[%s1 + $0x7c] sm:$0xf]
      %v2076 = vld [vmem:[%s1 + $0x80] sm:$0xf]
      %v2077 = vld [vmem:[%s1 + $0x84] sm:$0xf]
      %v2078 = vld [vmem:[%s1 + $0x88] sm:$0xf]
      %v2079 = vld [vmem:[%s1 + $0x8c] sm:$0xf]
      %v2080 = vld [vmem:[%s1 + $0x90] sm:$0xf]
      %v2081 = vld [vmem:[%s1 + $0x94] sm:$0xf]
      %v2082 = vpack.c.bf16 %v2073, %v2072
      %v2083 = vld [vmem:[%s2] sm:$0xff]
      %v2084 = vld [vmem:[%s2 + $0x8] sm:$0xff]
      %v2085 = vld [vmem:[%s2 + $0x10] sm:$0xff]
      %v2086 = vld [vmem:[%s2 + $0x18] sm:$0xff]
      %v2087 = vld [vmem:[%s2 + $0x20] sm:$0xff]
      %v2088 = vld [vmem:[%s2 + $0x28] sm:$0xff]
      %v2089 = vld [vmem:[%s2 + $0x30] sm:$0xff]
      %v2090 = vld [vmem:[%s2 + $0x38] sm:$0xff]
      %2092 = vset.pattern.permute.xlu0 37
      %2093 = vperm.xlu0 %2092, %v2083
      %v2094 = vpop.permute.xlu0 %2093
      %2097 = vset.pattern.permute.xlu0 37
      %2098 = vperm.xlu0 %2097, %v2084
      %v2099 = vpop.permute.xlu0 %2098
      %2102 = vset.pattern.permute.xlu0 37
      %2103 = vperm.xlu0 %2102, %v2085
      %v2104 = vpop.permute.xlu0 %2103
      %2107 = vset.pattern.permute.xlu0 37
      %2108 = vperm.xlu0 %2107, %v2086
      %v2109 = vpop.permute.xlu0 %2108
      %2112 = vset.pattern.permute.xlu0 37
      %2113 = vperm.xlu0 %2112, %v2087
      %v2114 = vpop.permute.xlu0 %2113
      %2117 = vset.pattern.permute.xlu0 37
      %2118 = vperm.xlu0 %2117, %v2088
      %v2119 = vpop.permute.xlu0 %2118
      %2122 = vset.pattern.permute.xlu0 37
      %2123 = vperm.xlu0 %2122, %v2089
      %v2124 = vpop.permute.xlu0 %2123
      %2127 = vset.pattern.permute.xlu0 37
      %2128 = vperm.xlu0 %2127, %v2090
      %v2129 = vpop.permute.xlu0 %2128
      %v2139 = vunpack.c.l.b16 %v2074
      %v2140 = vunpack.c.l.b16 %v2075
      %v2141 = vunpack.c.l.b16 %v2076
      %v2142 = vunpack.c.l.b16 %v2077
      %v2143 = vunpack.c.l.b16 %v2078
      %v2144 = vunpack.c.l.b16 %v2079
      %v2145 = vunpack.c.l.b16 %v2080
      %v2146 = vunpack.c.l.b16 %v2081
      %v2147 = vpack.c.b16 %v2140, %v2139
      %v2148 = vpack.c.b16 %v2142, %v2141
      %v2149 = vpack.c.b16 %v2144, %v2143
      %v2150 = vpack.c.b16 %v2146, %v2145
      %v2152 = vsel %vm218, %v2147, 0
      %v2155 = vsel %vm218, %v2148, 0
      %v2158 = vsel %vm218, %v2149, 0
      %v2161 = vsel %vm218, %v2150, 0
      %2163 = vmatprep.subr.bf16.mxu0 0
      %2164 = vmatpush1.bf16.msra.mxu0 %v2082
      %2165 = vmatprep.subr.bf16.mxu0 0
      %2166 = vmatpush1.bf16.msra.mxu0 0
      %2167 = vmatprep.subr.bf16.mxu0 0
      %2168 = vmatpush1.bf16.msra.mxu0 0
      %2169 = vmatprep.subr.bf16.mxu0 0
      %2170 = vmatpush1.bf16.msra.mxu0 0
      %2171 = vmatprep.subr.bf16.mxu0 0
      %2172 = vmatpush1.bf16.msra.mxu0 0
      %2173 = vmatprep.subr.bf16.mxu0 0
      %2174 = vmatpush1.bf16.msra.mxu0 0
      %2175 = vmatprep.subr.bf16.mxu0 0
      %2176 = vmatpush1.bf16.msra.mxu0 0
      %2177 = vmatprep.subr.bf16.mxu0 0
      %2178 = vmatpush1.bf16.msra.mxu0 0
      %2179 = vmatprep.subr.bf16.mxu0 0
      %2180 = vmatpush1.bf16.msra.mxu0 0
      %2181 = vmatprep.subr.bf16.mxu0 0
      %2182 = vmatpush1.bf16.msra.mxu0 0
      %2183 = vmatprep.subr.bf16.mxu0 0
      %2184 = vmatpush1.bf16.msra.mxu0 0
      %2185 = vmatprep.subr.bf16.mxu0 0
      %2186 = vmatpush1.bf16.msra.mxu0 0
      %2187 = vmatprep.subr.bf16.mxu0 0
      %2188 = vmatpush1.bf16.msra.mxu0 0
      %2189 = vmatprep.subr.bf16.mxu0 0
      %2190 = vmatpush1.bf16.msra.mxu0 0
      %2191 = vmatprep.subr.bf16.mxu0 0
      %2192 = vmatpush1.bf16.msra.mxu0 0
      %2193 = vmatprep.subr.bf16.mxu0 0
      %2194 = vmatpush1.bf16.msra.mxu0 0
      %2195 = vmatprep.mubr.bf16.mxu0 0
      %2196 = vmatmul.mubr.bf16.gmra.mrb[0].mxu0 %v2152
      %v2197 = vpop.f32.mrb[0].mxu0
      %v2198 = vadd.f32 %v2094, %v2197
      %v2199 = vpop.f32.mrb[0].mxu0
      %v2200 = vpop.f32.mrb[0].mxu0
      %v2201 = vadd.f32 %v2099, %v2200
      %v2202 = vpop.f32.mrb[0].mxu0
      %2203 = vmatprep.mubr.bf16.mxu0 0
      %2204 = vmatmul.mubr.bf16.gmra.mrb[0].mxu0 %v2155
      %v2205 = vpop.f32.mrb[0].mxu0
      %v2206 = vadd.f32 %v2104, %v2205
      %v2207 = vpop.f32.mrb[0].mxu0
      %v2208 = vpop.f32.mrb[0].mxu0
      %v2209 = vadd.f32 %v2109, %v2208
      %v2210 = vpop.f32.mrb[0].mxu0
      %2211 = vmatprep.mubr.bf16.mxu0 0
      %2212 = vmatmul.mubr.bf16.gmra.mrb[0].mxu0 %v2158
      %v2213 = vpop.f32.mrb[0].mxu0
      %v2214 = vadd.f32 %v2114, %v2213
      %v2215 = vpop.f32.mrb[0].mxu0
      %v2216 = vpop.f32.mrb[0].mxu0
      %v2217 = vadd.f32 %v2119, %v2216
      %v2218 = vpop.f32.mrb[0].mxu0
      %2219 = vmatprep.mubr.bf16.mxu0 0
      %2220 = vmatmul.mubr.bf16.gmra.mrb[0].mxu0 %v2161
      %v2221 = vpop.f32.mrb[0].mxu0
      %v2222 = vadd.f32 %v2124, %v2221
      %v2223 = vpop.f32.mrb[0].mxu0
      %v2224 = vpop.f32.mrb[0].mxu0
      %v2225 = vadd.f32 %v2129, %v2224
      %v2226 = vpop.f32.mrb[0].mxu0
      %2227 = vdwg.mxu0
      %v2228 = vxor.u32 %v2198, 2147483648
      %v2229 = vxor.u32 %v2201, 2147483648
      %v2230 = vxor.u32 %v2206, 2147483648
      %v2231 = vxor.u32 %v2209, 2147483648
      %v2232 = vxor.u32 %v2214, 2147483648
      %v2233 = vxor.u32 %v2217, 2147483648
      %v2234 = vxor.u32 %v2222, 2147483648
      %v2235 = vxor.u32 %v2225, 2147483648
      %v2236 = vmul.f32 %v2228, 1.442695
      %v2237 = vpow.pop %v2236
      %v2238 = vmul.f32 %v2229, 1.442695
      %v2239 = vpow.pop %v2238
      %v2240 = vmul.f32 %v2230, 1.442695
      %v2241 = vpow.pop %v2240
      %v2242 = vmul.f32 %v2231, 1.442695
      %v2243 = vpow.pop %v2242
      %v2244 = vmul.f32 %v2232, 1.442695
      %v2245 = vpow.pop %v2244
      %v2246 = vmul.f32 %v2233, 1.442695
      %v2247 = vpow.pop %v2246
      %v2248 = vmul.f32 %v2234, 1.442695
      %v2249 = vpow.pop %v2248
      %v2250 = vmul.f32 %v2235, 1.442695
      %v2251 = vpow.pop %v2250
      %v2252 = vadd.f32 %v2237, 1.0
      %v2253 = vadd.f32 %v2239, 1.0
      %v2254 = vadd.f32 %v2241, 1.0
      %v2255 = vadd.f32 %v2243, 1.0
      %v2256 = vadd.f32 %v2245, 1.0
      %v2257 = vadd.f32 %v2247, 1.0
      %v2258 = vadd.f32 %v2249, 1.0
      %v2259 = vadd.f32 %v2251, 1.0
      %v2260 = vrcp.pop %v2252
      %v2261 = vmul.f32 1.0, %v2260
      %v2262 = vrcp.pop %v2253
      %v2263 = vmul.f32 1.0, %v2262
      %v2264 = vrcp.pop %v2254
      %v2265 = vmul.f32 1.0, %v2264
      %v2266 = vrcp.pop %v2255
      %v2267 = vmul.f32 1.0, %v2266
      %v2268 = vrcp.pop %v2256
      %v2269 = vmul.f32 1.0, %v2268
      %v2270 = vrcp.pop %v2257
      %v2271 = vmul.f32 1.0, %v2270
      %v2272 = vrcp.pop %v2258
      %v2273 = vmul.f32 1.0, %v2272
      %v2274 = vrcp.pop %v2259
      %v2275 = vmul.f32 1.0, %v2274
      %v2276 = vmul.f32 %v274, %v2261
      %v2277 = vmul.f32 %v275, %v2263
      %v2278 = vmul.f32 %v276, %v2265
      %v2279 = vmul.f32 %v277, %v2267
      %v2280 = vmul.f32 %v274, %v2269
      %v2281 = vmul.f32 %v275, %v2271
      %v2282 = vmul.f32 %v276, %v2273
      %v2283 = vmul.f32 %v277, %v2275
      %v2284 = vpack.c.bf16 %v2277, %v2276
      %v2285 = vpack.c.bf16 %v2279, %v2278
      %v2286 = vpack.c.bf16 %v2281, %v2280
      %v2287 = vpack.c.bf16 %v2283, %v2282
      %v2288 = vld [vmem:[%s1 + $0x98] sm:$0xf]
      %v2289 = vld [vmem:[%s1 + $0x9c] sm:$0xf]
      %v2290 = vld [vmem:[%s1 + $0xa0] sm:$0xf]
      %v2291 = vld [vmem:[%s1 + $0xa4] sm:$0xf]
      %v2296 = vunpack.c.l.b16 %v2288
      %v2297 = vunpack.c.l.b16 %v2289
      %v2298 = vunpack.c.l.b16 %v2290
      %v2299 = vunpack.c.l.b16 %v2291
      %v2300 = vpack.c.b16 %v2297, %v2296
      %v2301 = vpack.c.b16 %v2299, %v2298
      %vm2302 = vcmask 523264
      %v2304 = vsel %vm2302, %v2300, 0
      %v2307 = vsel %vm2302, %v2301, 0
      %2309 = vmatprep.subr.bf16.mxu0 0
      %2310 = vmatpush1.bf16.msra.mxu0 %v2284
      %2311 = vmatprep.subr.bf16.mxu0 0
      %2312 = vmatpush1.bf16.msra.mxu0 %v2285
      %2313 = vmatprep.subr.bf16.mxu0 0
      %2314 = vmatpush1.bf16.msra.mxu0 %v2286
      %2315 = vmatprep.subr.bf16.mxu0 0
      %2316 = vmatpush1.bf16.msra.mxu0 %v2287
      %2317 = vmatprep.subr.bf16.mxu0 0
      %2318 = vmatpush1.bf16.msra.mxu0 0
      %2319 = vmatprep.subr.bf16.mxu0 0
      %2320 = vmatpush1.bf16.msra.mxu0 0
      %2321 = vmatprep.subr.bf16.mxu0 0
      %2322 = vmatpush1.bf16.msra.mxu0 0
      %2323 = vmatprep.subr.bf16.mxu0 0
      %2324 = vmatpush1.bf16.msra.mxu0 0
      %2325 = vmatprep.subr.bf16.mxu0 0
      %2326 = vmatpush1.bf16.msra.mxu0 0
      %2327 = vmatprep.subr.bf16.mxu0 0
      %2328 = vmatpush1.bf16.msra.mxu0 0
      %2329 = vmatprep.subr.bf16.mxu0 0
      %2330 = vmatpush1.bf16.msra.mxu0 0
      %2331 = vmatprep.subr.bf16.mxu0 0
      %2332 = vmatpush1.bf16.msra.mxu0 0
      %2333 = vmatprep.subr.bf16.mxu0 0
      %2334 = vmatpush1.bf16.msra.mxu0 0
      %2335 = vmatprep.subr.bf16.mxu0 0
      %2336 = vmatpush1.bf16.msra.mxu0 0
      %2337 = vmatprep.subr.bf16.mxu0 0
      %2338 = vmatpush1.bf16.msra.mxu0 0
      %2339 = vmatprep.subr.bf16.mxu0 0
      %2340 = vmatpush1.bf16.msra.mxu0 0
      %2341 = vmatprep.mubr.bf16.mxu0 0
      %2342 = vmatmul.mubr.bf16.gmra.mrb[0].mxu0 %v2304
      %v2343 = vpop.f32.mrb[0].mxu0
      %v2344 = vadd.f32 0.0, %v2343
      %v2345 = vpop.f32.mrb[0].mxu0
      %v2346 = vpop.f32.mrb[0].mxu0
      %v2347 = vadd.f32 0.0, %v2346
      %v2348 = vpop.f32.mrb[0].mxu0
      %2349 = vmatprep.mubr.bf16.mxu0 0
      %2350 = vmatmul.mubr.bf16.gmra.mrb[0].mxu0 %v2307
      %v2351 = vpop.f32.mrb[0].mxu0
      %v2352 = vadd.f32 0.0, %v2351
      %v2353 = vpop.f32.mrb[0].mxu0
      %v2354 = vpop.f32.mrb[0].mxu0
      %v2355 = vadd.f32 0.0, %v2354
      %v2356 = vpop.f32.mrb[0].mxu0
      %2357 = vdwg.mxu0
      %2358 = vst [vmem:[%s170] sm:$0xff] %v2344
      %2359 = vst [vmem:[%s170 + $0x8] sm:$0xff] %v2347
      %2360 = vst [vmem:[%s170 + $0x10] sm:$0xff] %v2352
      %2361 = vst [vmem:[%s170 + $0x18] sm:$0xff] %v2355
      %p2362 = scmp.lt.s32.totalorder %s14, 1
      %s2363 = scalar_select %p2362, %s14, 1
      %s2364 = smul.addr %s2363, 4
      %s2365 = smul.addr %s2364, 8
      %s2366 = scalar_lea.vmem %s3, %s2365
      // Predicated region
      $region33: #{pallas_forward.1} parent=31 // pred_check
        %p2367 = pneg %p100
      $region34: #{pallas_forward.1} parent=31 // pred_check_branch
        %2369 = sbr.rel (%p2367) target = $region36
      $region35: #{pallas_forward.1} parent=31 // pred_region
        _
      $region36: #{pallas_forward.1} parent=31 // pred_fallthru
        _
    $region32: #{pallas_forward.1} parent=5 // pred_fallthru
      _
    %p2370 = scmp.le.s32.totalorder 2, %s9
    // Predicated region
    $region37: #{pallas_forward.1} parent=5 // pred_check
      %p2371 = pneg %p2370
    $region38: #{pallas_forward.1} parent=5 // pred_check_branch
      %2373 = sbr.rel (%p2371) target = $region40
    $region39: #{pallas_forward.1} parent=5 // pred_region
      %s2374 = ssub.s32 %s9, 2
      // Predicated region
      $region41: #{pallas_forward.1} parent=39 // pred_check
        %p2375 = pneg %p106
      $region42: #{pallas_forward.1} parent=39 // pred_check_branch
        %2377 = sbr.rel (%p2375) target = $region44
      $region43: #{pallas_forward.1} parent=39 // pred_region
        %p2378 = scmp.lt.s32.totalorder %s15, 1
        %s2379 = scalar_select %p2378, %s15, 1
        %s2380 = smul.addr %s2379, 4
        %s2381 = smul.addr %s2380, 8
        %s2382 = scalar_lea.vmem %s3, %s2381
      $region44: #{pallas_forward.1} parent=39 // pred_fallthru
        _
    $region40: #{pallas_forward.1} parent=5 // pred_fallthru
      _
  $region6: #{pallas_forward.1} parent=0 // loop_footer
    %s13 = sadd.s32 1, %s9
  $region7: #{pallas_forward.1} parent=0 // loop_footer_branch
    %8 = sbr.rel target = $region3
  $region8: #{pallas_forward.1} parent=0 // loop_exit
    _

</llo_original>
